<compile_context>
chip_gen: v7x
topology: tpu7x:2x2x1
jax: 0.10.0
libtpu: 0.0.40
codegen_flags: <defaults>
</compile_context>

<pallas_src>
import math

import jax
import jax.numpy as jnp
from jax import lax
from jax.experimental import pallas as pl
from jax.experimental.pallas import tpu as pltpu

# ----------------------------- configuration (small test sizes) --------------
IMG = 16          # img_size (cubic volume)
PATCH = 8         # patch_size == stride
CHANNELS = 2      # in channels
EMBED = 32        # embed_dim (d_model)
DEPTH = 2         # number of Mamba blocks
NUM_CLASSES = 2

# Mamba mixer hyper-params (mamba_ssm defaults)
D_STATE = 16
D_CONV = 4
EXPAND = 2
D_INNER = EXPAND * EMBED
DT_RANK = math.ceil(EMBED / 16)
LN_EPS = 1e-5

GRID = IMG // PATCH
NUM_TOKENS = GRID ** 3               # L = 8
PATCH_K = CHANNELS * PATCH ** 3      # K = 1024


# ----------------------------- kernel helpers ---------------------------------
def _layernorm(x, w, b):
    mu = jnp.mean(x, axis=-1, keepdims=True)
    xc = x - mu
    var = jnp.mean(xc * xc, axis=-1, keepdims=True)
    return xc * lax.rsqrt(var + LN_EPS) * w + b


# ----------------------------- fused network kernel ---------------------------
def _vision_mamba_kernel(
    patches_ref,                       # (1, L, K)      one batch element
    pw_ref, pb_ref,                    # (K, E), (1, E)
    ln_w_ref, ln_b_ref,                # (DEPTH, 1, E) each
    in_wx_ref, in_wz_ref,              # (DEPTH, E, DI) each
    conv_w_ref, conv_b_ref,            # (DEPTH, D_CONV, DI), (DEPTH, 1, DI)
    xproj_B_ref, xproj_C_ref,          # (DEPTH, DI, N) each
    dt_fw_ref, dt_b_ref,               # (DEPTH, DI, DI), (DEPTH, 1, DI)
    A_logT_ref, D_ref,                 # (DEPTH, N, DI), (DEPTH, 1, DI)
    out_w_ref,                         # (DEPTH, DI, E)
    lnf_w_ref, lnf_b_ref,              # (1, E) each
    head_w_ref, head_b_ref,            # (E, NUM_CLASSES), (1, NUM_CLASSES)
    o_ref,                             # (1, 1, NUM_CLASSES)
    dA_ref, dBu_ref, h_ref,            # VMEM scratch (L, N, DI) each
):
    L = patches_ref.shape[1]
    n_layers = ln_w_ref.shape[0]
    n_conv = conv_w_ref.shape[1]
    d_state = A_logT_ref.shape[1]
    d_inner = A_logT_ref.shape[2]

    # ----- PatchEmbed3D: Conv3d(kernel==stride) == one matmul per batch element
    hidden = (jnp.dot(patches_ref[0], pw_ref[...],
                      preferred_element_type=jnp.float32) + pb_ref[...])     # (L, E)
    residual = jnp.zeros_like(hidden)

    row = lax.broadcasted_iota(jnp.int32, (L, 1), 0)   # hoisted; reused by the conv

    # DEPTH is small: static unroll keeps all weight indexing static.
    for l in range(n_layers):
        # ----- Block: residual add (DropPath == identity) + LayerNorm
        res_new = residual + hidden
        hn = _layernorm(res_new, ln_w_ref[l], ln_b_ref[l])

        # ----- in_proj, split into lane-dense x / z halves (two dots, no slicing)
        x_in = jnp.dot(hn, in_wx_ref[l], preferred_element_type=jnp.float32)  # (L, DI)
        z = jnp.dot(hn, in_wz_ref[l], preferred_element_type=jnp.float32)     # (L, DI)

        # ----- causal depthwise conv1d (left pad) + SiLU, via sublane roll + mask
        conv_w = conv_w_ref[l]                                                # (Kc, DI)
        acc = x_in * conv_w[n_conv - 1:n_conv, :]
        for k in range(n_conv - 1):
            shift = n_conv - 1 - k
            rolled = pltpu.roll(x_in, shift, axis=0)
            shifted = jnp.where(row >= shift, rolled, 0.0)
            acc = acc + shifted * conv_w[k:k + 1, :]
        x_conv = acc + conv_b_ref[l]
        x_conv = x_conv * jax.nn.sigmoid(x_conv)                              # SiLU

        # ----- x_proj (B, C column groups) and dt_proj folded into one matmul
        Bmat = jnp.dot(x_conv, xproj_B_ref[l], preferred_element_type=jnp.float32)
        Cmat = jnp.dot(x_conv, xproj_C_ref[l], preferred_element_type=jnp.float32)
        dt = (jnp.dot(x_conv, dt_fw_ref[l], preferred_element_type=jnp.float32)
              + dt_b_ref[l])
        dt = jnp.maximum(dt, 0.0) + jnp.log1p(jnp.exp(-jnp.abs(dt)))          # softplus

        AT = -jnp.exp(A_logT_ref[l])                                          # (N, DI)

        # ----- selective scan: precompute dA / dB*u once (batched), park in VMEM
        dA_ref[...] = jnp.exp(dt[:, None, :] * AT[None, :, :])                # (L,N,DI)
        dBu_ref[...] = Bmat[:, :, None] * (dt * x_conv)[:, None, :]           # (L,N,DI)

        def scan_body(t, h):
            h_new = dA_ref[t] * h + dBu_ref[t]
            h_ref[t] = h_new
            return h_new

        lax.fori_loop(0, L, scan_body,
                      jnp.zeros((d_state, d_inner), jnp.float32), unroll=True)

        # y_t = C_t . h_t, done as one batched sublane reduce after the scan
        y = jnp.sum(Cmat[:, :, None] * h_ref[...], axis=1)                    # (L, DI)
        y = y + x_conv * D_ref[l]                                             # + D * u
        y = y * (z * jax.nn.sigmoid(z))                                       # * SiLU(z)
        hidden = jnp.dot(y, out_w_ref[l], preferred_element_type=jnp.float32) # (L, E)
        residual = res_new

    # ----- final residual add + LayerNorm (last token only) + Linear head
    res_final = residual + hidden
    last = res_final[L - 1:L, :]                     # final_pool_type == 'none'
    hn_last = _layernorm(last, lnf_w_ref[...], lnf_b_ref[...])
    o_ref[0] = (jnp.dot(hn_last, head_w_ref[...], preferred_element_type=jnp.float32)
                + head_b_ref[...])


# ----------------------------- wrapper -----------------------------------------
def _full_spec(arr):
    zeros = (0,) * arr.ndim
    return pl.BlockSpec(arr.shape, lambda b, _z=zeros: _z)


def vision_mamba3d_forward(x, params):
    x = x.astype(jnp.float32)
    B, C, D, H, W = x.shape
    p = PATCH
    Gd, Gh, Gw = D // p, H // p, W // p
    L = Gd * Gh * Gw
    K = C * p * p * p

    # exact non-overlapping patch extraction matching Conv3d weight layout
    xp = x.reshape(B, C, Gd, p, Gh, p, Gw, p)
    xp = xp.transpose(0, 2, 4, 6, 1, 3, 5, 7)          # (B, Gd, Gh, Gw, C, p, p, p)
    patches = xp.reshape(B, L, K)

    pw = params["patch_w"].reshape(EMBED, K).T          # (K, E)
    pb = params["patch_b"].reshape(1, EMBED)

    layers = params["layers"]
    stack = lambda name: jnp.stack([lp[name] for lp in layers], axis=0)
    ln_w, ln_b = stack("ln_w"), stack("ln_b")
    in_w = stack("in_w")                                # (DEPTH, E, 2*DI)
    in_wx = in_w[:, :, :D_INNER]
    in_wz = in_w[:, :, D_INNER:]
    conv_w, conv_b = stack("conv_w"), stack("conv_b")
    xproj = stack("xproj_w")                            # (DEPTH, DI, R+2N)
    xproj_dt = xproj[:, :, :DT_RANK]
    xproj_B = xproj[:, :, DT_RANK:DT_RANK + D_STATE]
    xproj_C = xproj[:, :, DT_RANK + D_STATE:]
    dt_w = stack("dt_w")                                # (DEPTH, R, DI)
    # fold dt_proj into the dt columns of x_proj -> one lane-dense (DI, DI) matmul
    dt_fw = jnp.einsum("lkr,lrd->lkd", xproj_dt, dt_w)  # (DEPTH, DI, DI)
    dt_b = stack("dt_b")
    A_logT, Dp = stack("A_logT"), stack("D")
    out_w = stack("out_w")

    args = (patches, pw, pb, ln_w, ln_b, in_wx, in_wz, conv_w, conv_b,
            xproj_B, xproj_C, dt_fw, dt_b, A_logT, Dp, out_w,
            params["lnf_w"], params["lnf_b"], params["head_w"], params["head_b"])

    # advisory cost estimate (totals over the whole call)
    flops = (2 * B * L * K * EMBED
             + B * DEPTH * (2 * L * EMBED * 2 * D_INNER
                            + 4 * L * D_INNER * D_STATE
                            + 2 * L * D_INNER * D_INNER
                            + 2 * L * D_INNER * EMBED
                            + 8 * L * D_STATE * D_INNER))
    transcendentals = B * DEPTH * (L * D_STATE * D_INNER + 5 * L * D_INNER)
    bytes_accessed = sum(int(a.size) * 4 for a in args) + B * NUM_CLASSES * 4

    tok_spec = pl.BlockSpec((1, L, K), lambda b: (b, 0, 0))
    in_specs = [tok_spec] + [_full_spec(a) for a in args[1:]]

    out = pl.pallas_call(
        _vision_mamba_kernel,
        grid_spec=pltpu.PrefetchScalarGridSpec(
            num_scalar_prefetch=0,
            grid=(B,),
            in_specs=in_specs,
            out_specs=pl.BlockSpec((1, 1, NUM_CLASSES), lambda b: (b, 0, 0)),
            scratch_shapes=[
                pltpu.VMEM((L, D_STATE, D_INNER), jnp.float32),   # dA
                pltpu.VMEM((L, D_STATE, D_INNER), jnp.float32),   # dB*u
                pltpu.VMEM((L, D_STATE, D_INNER), jnp.float32),   # states h_t
            ],
        ),
        out_shape=jax.ShapeDtypeStruct((B, 1, NUM_CLASSES), jnp.float32),
        compiler_params=pltpu.CompilerParams(dimension_semantics=("parallel",)),
        cost_estimate=pl.CostEstimate(flops=flops, transcendentals=transcendentals,
                                      bytes_accessed=bytes_accessed),
    )(*args)
    return out[:, 0, :]                                  # (B, NUM_CLASSES)


# ----------------------------- deterministic parameter init -------------------
def init_params(key):
    keys = jax.random.split(key, 4 + DEPTH)
    params = {
        "patch_w": 0.02 * jax.random.normal(
            keys[0], (EMBED, CHANNELS, PATCH, PATCH, PATCH), jnp.float32),
        "patch_b": 0.02 * jax.random.normal(keys[1], (EMBED,), jnp.float32),
        "lnf_w": jnp.ones((1, EMBED), jnp.float32),
        "lnf_b": jnp.zeros((1, EMBED), jnp.float32),
        # head weight stored pre-transposed: (E, NUM_CLASSES)
        "head_w": 0.02 * jax.random.normal(keys[2], (EMBED, NUM_CLASSES), jnp.float32),
        "head_b": jnp.zeros((1, NUM_CLASSES), jnp.float32),
    }
    A_log = jnp.tile(
        jnp.log(jnp.arange(1, D_STATE + 1, dtype=jnp.float32))[None, :], (D_INNER, 1)
    )  # (DI, N) — Mamba S4D-real init
    layers = []
    for i in range(DEPTH):
        k = jax.random.split(keys[4 + i], 6)
        layers.append(dict(
            ln_w=jnp.ones((1, EMBED), jnp.float32),
            ln_b=jnp.zeros((1, EMBED), jnp.float32),
            # all projection weights stored pre-transposed for x @ W
            in_w=0.02 * jax.random.normal(k[0], (EMBED, 2 * D_INNER), jnp.float32),
            conv_w=0.02 * jax.random.normal(k[1], (D_CONV, D_INNER), jnp.float32),
            conv_b=0.02 * jax.random.normal(k[2], (1, D_INNER), jnp.float32),
            xproj_w=0.02 * jax.random.normal(
                k[3], (D_INNER, DT_RANK + 2 * D_STATE), jnp.float32),
            dt_w=0.5 * jax.random.normal(k[4], (DT_RANK, D_INNER), jnp.float32),
            dt_b=jnp.full((1, D_INNER), math.log(math.expm1(0.05)), jnp.float32),
            A_logT=A_log.T,                                   # (N, DI)
            D=jnp.ones((1, D_INNER), jnp.float32),
            out_w=0.02 * jax.random.normal(k[5], (D_INNER, EMBED), jnp.float32),
        ))
    params["layers"] = layers
    return params


# ----------------------------- main --------------------------------------------
if __name__ == "__main__":
    key = jax.random.PRNGKey(0)
    k_x, k_p = jax.random.split(key)
    # B=2, C=2, D=H=W=16  (NCDHW, like the PyTorch module)
    x = jax.random.normal(k_x, (2, CHANNELS, IMG, IMG, IMG), jnp.float32)
    params = init_params(k_p)

    fwd = jax.jit(vision_mamba3d_forward)
    out = fwd(x, params)
    out = jax.block_until_ready(out)

    assert out.shape == (2, NUM_CLASSES), out.shape
    assert bool(jnp.all(jnp.isfinite(out)))
    print("KERNEL_OK")
</pallas_src>

<mosaic_0001>
module attributes {stable_mosaic.version = 11 : i64} {
  func.func @_vision_mamba_kernel(%arg0: i32, %arg1: memref<1x8x1024xf32, #tpu.memory_space<vmem>>, %arg2: memref<1024x32xf32, #tpu.memory_space<vmem>>, %arg3: memref<1x32xf32, #tpu.memory_space<vmem>>, %arg4: memref<2x1x32xf32, #tpu.memory_space<vmem>>, %arg5: memref<2x1x32xf32, #tpu.memory_space<vmem>>, %arg6: memref<2x32x64xf32, #tpu.memory_space<vmem>>, %arg7: memref<2x32x64xf32, #tpu.memory_space<vmem>>, %arg8: memref<2x4x64xf32, #tpu.memory_space<vmem>>, %arg9: memref<2x1x64xf32, #tpu.memory_space<vmem>>, %arg10: memref<2x64x16xf32, #tpu.memory_space<vmem>>, %arg11: memref<2x64x16xf32, #tpu.memory_space<vmem>>, %arg12: memref<2x64x64xf32, #tpu.memory_space<vmem>>, %arg13: memref<2x1x64xf32, #tpu.memory_space<vmem>>, %arg14: memref<2x16x64xf32, #tpu.memory_space<vmem>>, %arg15: memref<2x1x64xf32, #tpu.memory_space<vmem>>, %arg16: memref<2x64x32xf32, #tpu.memory_space<vmem>>, %arg17: memref<1x32xf32, #tpu.memory_space<vmem>>, %arg18: memref<1x32xf32, #tpu.memory_space<vmem>>, %arg19: memref<32x2xf32, #tpu.memory_space<vmem>>, %arg20: memref<1x2xf32, #tpu.memory_space<vmem>>, %arg21: memref<1x1x2xf32, #tpu.memory_space<vmem>>, %arg22: memref<8x16x64xf32, #tpu.memory_space<vmem>>, %arg23: memref<8x16x64xf32, #tpu.memory_space<vmem>>, %arg24: memref<8x16x64xf32, #tpu.memory_space<vmem>>) attributes {dimension_semantics = [#tpu.dimension_semantics<parallel>], iteration_bounds = array<i64: 2>, scalar_prefetch = 0 : i64, scratch_operands = 3 : i64, tpu.core_type = #tpu.core_type<tc>, window_params = [{transform_indices = @transform_0, window_bounds = array<i64: 1, 8, 1024>}, {pipeline_mode = #tpu.pipeline_mode<synchronous>, transform_indices = @transform_1, window_bounds = array<i64: 1024, 32>}, {pipeline_mode = #tpu.pipeline_mode<synchronous>, transform_indices = @transform_2, window_bounds = array<i64: 1, 32>}, {pipeline_mode = #tpu.pipeline_mode<synchronous>, transform_indices = @transform_3, window_bounds = array<i64: 2, 1, 32>}, {pipeline_mode = #tpu.pipeline_mode<synchronous>, transform_indices = @transform_4, window_bounds = array<i64: 2, 1, 32>}, {pipeline_mode = #tpu.pipeline_mode<synchronous>, transform_indices = @transform_5, window_bounds = array<i64: 2, 32, 64>}, {pipeline_mode = #tpu.pipeline_mode<synchronous>, transform_indices = @transform_6, window_bounds = array<i64: 2, 32, 64>}, {pipeline_mode = #tpu.pipeline_mode<synchronous>, transform_indices = @transform_7, window_bounds = array<i64: 2, 4, 64>}, {pipeline_mode = #tpu.pipeline_mode<synchronous>, transform_indices = @transform_8, window_bounds = array<i64: 2, 1, 64>}, {pipeline_mode = #tpu.pipeline_mode<synchronous>, transform_indices = @transform_9, window_bounds = array<i64: 2, 64, 16>}, {pipeline_mode = #tpu.pipeline_mode<synchronous>, transform_indices = @transform_10, window_bounds = array<i64: 2, 64, 16>}, {pipeline_mode = #tpu.pipeline_mode<synchronous>, transform_indices = @transform_11, window_bounds = array<i64: 2, 64, 64>}, {pipeline_mode = #tpu.pipeline_mode<synchronous>, transform_indices = @transform_12, window_bounds = array<i64: 2, 1, 64>}, {pipeline_mode = #tpu.pipeline_mode<synchronous>, transform_indices = @transform_13, window_bounds = array<i64: 2, 16, 64>}, {pipeline_mode = #tpu.pipeline_mode<synchronous>, transform_indices = @transform_14, window_bounds = array<i64: 2, 1, 64>}, {pipeline_mode = #tpu.pipeline_mode<synchronous>, transform_indices = @transform_15, window_bounds = array<i64: 2, 64, 32>}, {pipeline_mode = #tpu.pipeline_mode<synchronous>, transform_indices = @transform_16, window_bounds = array<i64: 1, 32>}, {pipeline_mode = #tpu.pipeline_mode<synchronous>, transform_indices = @transform_17, window_bounds = array<i64: 1, 32>}, {pipeline_mode = #tpu.pipeline_mode<synchronous>, transform_indices = @transform_18, window_bounds = array<i64: 32, 2>}, {pipeline_mode = #tpu.pipeline_mode<synchronous>, transform_indices = @transform_19, window_bounds = array<i64: 1, 2>}, {transform_indices = @transform_20, window_bounds = array<i64: 1, 1, 2>}]} {
    %c0 = arith.constant 0 : index
    %c0_0 = arith.constant 0 : index
    %c0_1 = arith.constant 0 : index
    %0 = vector.load %arg1[%c0, %c0_0, %c0_1] : memref<1x8x1024xf32, #tpu.memory_space<vmem>>, vector<1x8x1024xf32>
    %1 = vector.shape_cast %0 : vector<1x8x1024xf32> to vector<8x1024xf32>
    %c0_2 = arith.constant 0 : index
    %c0_3 = arith.constant 0 : index
    %2 = vector.load %arg2[%c0_2, %c0_3] : memref<1024x32xf32, #tpu.memory_space<vmem>>, vector<1024x32xf32>
    %cst = arith.constant dense<0.000000e+00> : vector<8x32xf32>
    %3 = tpu.matmul %1, %2, %cst {dimension_numbers = #tpu.dot_dimension_numbers<[1], [0], [0], [1], [0, 0, 1, 1], [], []>} : vector<8x1024xf32>, vector<1024x32xf32>, vector<8x32xf32> -> vector<8x32xf32>
    %c0_4 = arith.constant 0 : index
    %c0_5 = arith.constant 0 : index
    %4 = vector.load %arg3[%c0_4, %c0_5] : memref<1x32xf32, #tpu.memory_space<vmem>>, vector<1x32xf32>
    %5 = vector.broadcast %4 : vector<1x32xf32> to vector<8x32xf32>
    %6 = arith.addf %3, %5 : vector<8x32xf32>
    %cst_6 = arith.constant 0.000000e+00 : f32
    %7 = vector.broadcast %cst_6 : f32 to vector<8x32xf32>
    %8 = tpu.iota {dimensions = array<i32: 0>} : vector<8x1xi32>
    %9 = arith.addf %7, %6 : vector<8x32xf32>
    %c0_7 = arith.constant 0 : index
    %c0_8 = arith.constant 0 : index
    %c0_9 = arith.constant 0 : index
    %10 = vector.load %arg4[%c0_7, %c0_8, %c0_9] : memref<2x1x32xf32, #tpu.memory_space<vmem>>, vector<1x1x32xf32>
    %11 = vector.shape_cast %10 : vector<1x1x32xf32> to vector<1x32xf32>
    %c0_10 = arith.constant 0 : index
    %c0_11 = arith.constant 0 : index
    %c0_12 = arith.constant 0 : index
    %12 = vector.load %arg5[%c0_10, %c0_11, %c0_12] : memref<2x1x32xf32, #tpu.memory_space<vmem>>, vector<1x1x32xf32>
    %13 = vector.shape_cast %12 : vector<1x1x32xf32> to vector<1x32xf32>
    %cst_13 = arith.constant dense<0.000000e+00> : vector<8xf32>
    %14 = vector.multi_reduction <add>, %9, %cst_13 [1] : vector<8x32xf32> to vector<8xf32>
    %15 = vector.shape_cast %14 : vector<8xf32> to vector<8x1xf32>
    %cst_14 = arith.constant 3.200000e+01 : f32
    %16 = vector.broadcast %cst_14 : f32 to vector<8x1xf32>
    %17 = arith.divf %15, %16 : vector<8x1xf32>
    %18 = vector.broadcast %17 : vector<8x1xf32> to vector<8x32xf32>
    %19 = arith.subf %9, %18 : vector<8x32xf32>
    %20 = arith.mulf %19, %19 : vector<8x32xf32>
    %cst_15 = arith.constant dense<0.000000e+00> : vector<8xf32>
    %21 = vector.multi_reduction <add>, %20, %cst_15 [1] : vector<8x32xf32> to vector<8xf32>
    %22 = vector.shape_cast %21 : vector<8xf32> to vector<8x1xf32>
    %cst_16 = arith.constant 3.200000e+01 : f32
    %23 = vector.broadcast %cst_16 : f32 to vector<8x1xf32>
    %24 = arith.divf %22, %23 : vector<8x1xf32>
    %cst_17 = arith.constant 9.99999974E-6 : f32
    %25 = vector.broadcast %cst_17 : f32 to vector<8x1xf32>
    %26 = arith.addf %24, %25 : vector<8x1xf32>
    %27 = math.rsqrt %26 : vector<8x1xf32>
    %28 = vector.broadcast %27 : vector<8x1xf32> to vector<8x32xf32>
    %29 = arith.mulf %19, %28 : vector<8x32xf32>
    %30 = vector.broadcast %11 : vector<1x32xf32> to vector<8x32xf32>
    %31 = arith.mulf %29, %30 : vector<8x32xf32>
    %32 = vector.broadcast %13 : vector<1x32xf32> to vector<8x32xf32>
    %33 = arith.addf %31, %32 : vector<8x32xf32>
    %c0_18 = arith.constant 0 : index
    %c0_19 = arith.constant 0 : index
    %c0_20 = arith.constant 0 : index
    %34 = vector.load %arg6[%c0_18, %c0_19, %c0_20] : memref<2x32x64xf32, #tpu.memory_space<vmem>>, vector<1x32x64xf32>
    %35 = vector.shape_cast %34 : vector<1x32x64xf32> to vector<32x64xf32>
    %cst_21 = arith.constant dense<0.000000e+00> : vector<8x64xf32>
    %36 = tpu.matmul %33, %35, %cst_21 {dimension_numbers = #tpu.dot_dimension_numbers<[1], [0], [0], [1], [0, 0, 1, 1], [], []>} : vector<8x32xf32>, vector<32x64xf32>, vector<8x64xf32> -> vector<8x64xf32>
    %c0_22 = arith.constant 0 : index
    %c0_23 = arith.constant 0 : index
    %c0_24 = arith.constant 0 : index
    %37 = vector.load %arg7[%c0_22, %c0_23, %c0_24] : memref<2x32x64xf32, #tpu.memory_space<vmem>>, vector<1x32x64xf32>
    %38 = vector.shape_cast %37 : vector<1x32x64xf32> to vector<32x64xf32>
    %cst_25 = arith.constant dense<0.000000e+00> : vector<8x64xf32>
    %39 = tpu.matmul %33, %38, %cst_25 {dimension_numbers = #tpu.dot_dimension_numbers<[1], [0], [0], [1], [0, 0, 1, 1], [], []>} : vector<8x32xf32>, vector<32x64xf32>, vector<8x64xf32> -> vector<8x64xf32>
    %c0_26 = arith.constant 0 : index
    %c0_27 = arith.constant 0 : index
    %c0_28 = arith.constant 0 : index
    %40 = vector.load %arg8[%c0_26, %c0_27, %c0_28] : memref<2x4x64xf32, #tpu.memory_space<vmem>>, vector<1x4x64xf32>
    %41 = vector.shape_cast %40 : vector<1x4x64xf32> to vector<4x64xf32>
    %42 = vector.extract_strided_slice %41 {offsets = [3, 0], sizes = [1, 64], strides = [1, 1]} : vector<4x64xf32> to vector<1x64xf32>
    %43 = vector.broadcast %42 : vector<1x64xf32> to vector<8x64xf32>
    %44 = arith.mulf %36, %43 : vector<8x64xf32>
    %c3_i32 = arith.constant 3 : i32
    %45 = tpu.dynamic_rotate %36 by %c3_i32 dim 0 : vector<8x64xf32>, i32 -> vector<8x64xf32>
    %c3_i32_29 = arith.constant 3 : i32
    %46 = vector.broadcast %c3_i32_29 : i32 to vector<8x1xi32>
    %47 = arith.cmpi sge, %8, %46 : vector<8x1xi32>
    %cst_30 = arith.constant 0.000000e+00 : f32
    %48 = vector.shape_cast %47 : vector<8x1xi1> to vector<8x1xi1>
    %49 = vector.broadcast %48 : vector<8x1xi1> to vector<8x64xi1>
    %50 = vector.broadcast %cst_30 : f32 to vector<8x64xf32>
    %51 = arith.select %49, %45, %50 : vector<8x64xi1>, vector<8x64xf32>
    %52 = vector.extract_strided_slice %41 {offsets = [0, 0], sizes = [1, 64], strides = [1, 1]} : vector<4x64xf32> to vector<1x64xf32>
    %53 = vector.broadcast %52 : vector<1x64xf32> to vector<8x64xf32>
    %54 = arith.mulf %51, %53 : vector<8x64xf32>
    %55 = arith.addf %44, %54 : vector<8x64xf32>
    %c2_i32 = arith.constant 2 : i32
    %56 = tpu.dynamic_rotate %36 by %c2_i32 dim 0 : vector<8x64xf32>, i32 -> vector<8x64xf32>
    %c2_i32_31 = arith.constant 2 : i32
    %57 = vector.broadcast %c2_i32_31 : i32 to vector<8x1xi32>
    %58 = arith.cmpi sge, %8, %57 : vector<8x1xi32>
    %cst_32 = arith.constant 0.000000e+00 : f32
    %59 = vector.shape_cast %58 : vector<8x1xi1> to vector<8x1xi1>
    %60 = vector.broadcast %59 : vector<8x1xi1> to vector<8x64xi1>
    %61 = vector.broadcast %cst_32 : f32 to vector<8x64xf32>
    %62 = arith.select %60, %56, %61 : vector<8x64xi1>, vector<8x64xf32>
    %63 = vector.extract_strided_slice %41 {offsets = [1, 0], sizes = [1, 64], strides = [1, 1]} : vector<4x64xf32> to vector<1x64xf32>
    %64 = vector.broadcast %63 : vector<1x64xf32> to vector<8x64xf32>
    %65 = arith.mulf %62, %64 : vector<8x64xf32>
    %66 = arith.addf %55, %65 : vector<8x64xf32>
    %c1_i32 = arith.constant 1 : i32
    %67 = tpu.dynamic_rotate %36 by %c1_i32 dim 0 : vector<8x64xf32>, i32 -> vector<8x64xf32>
    %c1_i32_33 = arith.constant 1 : i32
    %68 = vector.broadcast %c1_i32_33 : i32 to vector<8x1xi32>
    %69 = arith.cmpi sge, %8, %68 : vector<8x1xi32>
    %cst_34 = arith.constant 0.000000e+00 : f32
    %70 = vector.shape_cast %69 : vector<8x1xi1> to vector<8x1xi1>
    %71 = vector.broadcast %70 : vector<8x1xi1> to vector<8x64xi1>
    %72 = vector.broadcast %cst_34 : f32 to vector<8x64xf32>
    %73 = arith.select %71, %67, %72 : vector<8x64xi1>, vector<8x64xf32>
    %74 = vector.extract_strided_slice %41 {offsets = [2, 0], sizes = [1, 64], strides = [1, 1]} : vector<4x64xf32> to vector<1x64xf32>
    %75 = vector.broadcast %74 : vector<1x64xf32> to vector<8x64xf32>
    %76 = arith.mulf %73, %75 : vector<8x64xf32>
    %77 = arith.addf %66, %76 : vector<8x64xf32>
    %c0_35 = arith.constant 0 : index
    %c0_36 = arith.constant 0 : index
    %c0_37 = arith.constant 0 : index
    %78 = vector.load %arg9[%c0_35, %c0_36, %c0_37] : memref<2x1x64xf32, #tpu.memory_space<vmem>>, vector<1x1x64xf32>
    %79 = vector.shape_cast %78 : vector<1x1x64xf32> to vector<1x64xf32>
    %80 = vector.broadcast %79 : vector<1x64xf32> to vector<8x64xf32>
    %81 = arith.addf %77, %80 : vector<8x64xf32>
    %82 = arith.negf %81 : vector<8x64xf32>
    %83 = math.exp %82 : vector<8x64xf32>
    %cst_38 = arith.constant 1.000000e+00 : f32
    %84 = vector.broadcast %cst_38 : f32 to vector<8x64xf32>
    %85 = arith.addf %84, %83 : vector<8x64xf32>
    %86 = arith.divf %84, %85 : vector<8x64xf32>
    %87 = arith.mulf %81, %86 : vector<8x64xf32>
    %c0_39 = arith.constant 0 : index
    %c0_40 = arith.constant 0 : index
    %c0_41 = arith.constant 0 : index
    %88 = vector.load %arg10[%c0_39, %c0_40, %c0_41] : memref<2x64x16xf32, #tpu.memory_space<vmem>>, vector<1x64x16xf32>
    %89 = vector.shape_cast %88 : vector<1x64x16xf32> to vector<64x16xf32>
    %cst_42 = arith.constant dense<0.000000e+00> : vector<8x16xf32>
    %90 = tpu.matmul %87, %89, %cst_42 {dimension_numbers = #tpu.dot_dimension_numbers<[1], [0], [0], [1], [0, 0, 1, 1], [], []>} : vector<8x64xf32>, vector<64x16xf32>, vector<8x16xf32> -> vector<8x16xf32>
    %c0_43 = arith.constant 0 : index
    %c0_44 = arith.constant 0 : index
    %c0_45 = arith.constant 0 : index
    %91 = vector.load %arg11[%c0_43, %c0_44, %c0_45] : memref<2x64x16xf32, #tpu.memory_space<vmem>>, vector<1x64x16xf32>
    %92 = vector.shape_cast %91 : vector<1x64x16xf32> to vector<64x16xf32>
    %cst_46 = arith.constant dense<0.000000e+00> : vector<8x16xf32>
    %93 = tpu.matmul %87, %92, %cst_46 {dimension_numbers = #tpu.dot_dimension_numbers<[1], [0], [0], [1], [0, 0, 1, 1], [], []>} : vector<8x64xf32>, vector<64x16xf32>, vector<8x16xf32> -> vector<8x16xf32>
    %c0_47 = arith.constant 0 : index
    %c0_48 = arith.constant 0 : index
    %c0_49 = arith.constant 0 : index
    %94 = vector.load %arg12[%c0_47, %c0_48, %c0_49] : memref<2x64x64xf32, #tpu.memory_space<vmem>>, vector<1x64x64xf32>
    %95 = vector.shape_cast %94 : vector<1x64x64xf32> to vector<64x64xf32>
    %cst_50 = arith.constant dense<0.000000e+00> : vector<8x64xf32>
    %96 = tpu.matmul %87, %95, %cst_50 {dimension_numbers = #tpu.dot_dimension_numbers<[1], [0], [0], [1], [0, 0, 1, 1], [], []>} : vector<8x64xf32>, vector<64x64xf32>, vector<8x64xf32> -> vector<8x64xf32>
    %c0_51 = arith.constant 0 : index
    %c0_52 = arith.constant 0 : index
    %c0_53 = arith.constant 0 : index
    %97 = vector.load %arg13[%c0_51, %c0_52, %c0_53] : memref<2x1x64xf32, #tpu.memory_space<vmem>>, vector<1x1x64xf32>
    %98 = vector.shape_cast %97 : vector<1x1x64xf32> to vector<1x64xf32>
    %99 = vector.broadcast %98 : vector<1x64xf32> to vector<8x64xf32>
    %100 = arith.addf %96, %99 : vector<8x64xf32>
    %cst_54 = arith.constant 0.000000e+00 : f32
    %101 = vector.broadcast %cst_54 : f32 to vector<8x64xf32>
    %102 = arith.maximumf %100, %101 : vector<8x64xf32>
    %103 = math.absf %100 : vector<8x64xf32>
    %cst_55 = arith.constant 0.000000e+00 : f32
    %104 = vector.broadcast %cst_55 : f32 to vector<8x64xf32>
    %105 = arith.subf %104, %103 : vector<8x64xf32>
    %106 = math.exp %105 : vector<8x64xf32>
    %107 = math.log1p %106 : vector<8x64xf32>
    %108 = arith.addf %102, %107 : vector<8x64xf32>
    %c0_56 = arith.constant 0 : index
    %c0_57 = arith.constant 0 : index
    %c0_58 = arith.constant 0 : index
    %109 = vector.load %arg14[%c0_56, %c0_57, %c0_58] : memref<2x16x64xf32, #tpu.memory_space<vmem>>, vector<1x16x64xf32>
    %110 = vector.shape_cast %109 : vector<1x16x64xf32> to vector<16x64xf32>
    %111 = math.exp %110 : vector<16x64xf32>
    %cst_59 = arith.constant 0.000000e+00 : f32
    %112 = vector.broadcast %cst_59 : f32 to vector<16x64xf32>
    %113 = arith.subf %112, %111 : vector<16x64xf32>
    %114 = vector.shape_cast %108 : vector<8x64xf32> to vector<8x1x64xf32>
    %115 = vector.shape_cast %113 : vector<16x64xf32> to vector<1x16x64xf32>
    %116 = vector.broadcast %114 : vector<8x1x64xf32> to vector<8x16x64xf32>
    %117 = vector.broadcast %115 : vector<1x16x64xf32> to vector<8x16x64xf32>
    %118 = arith.mulf %116, %117 : vector<8x16x64xf32>
    %119 = math.exp %118 : vector<8x16x64xf32>
    %c0_60 = arith.constant 0 : index
    %c0_61 = arith.constant 0 : index
    %c0_62 = arith.constant 0 : index
    %120 = vector.load %arg22[%c0_60, %c0_61, %c0_62] : memref<8x16x64xf32, #tpu.memory_space<vmem>>, vector<8x16x64xf32>
    tpu.vector_store %arg22[%c0_60, %c0_61, %c0_62], %119 {strides = array<i32>} : memref<8x16x64xf32, #tpu.memory_space<vmem>>, vector<8x16x64xf32>,
    %121 = vector.shape_cast %90 : vector<8x16xf32> to vector<8x16x1xf32>
    %122 = arith.mulf %108, %87 : vector<8x64xf32>
    %123 = vector.shape_cast %122 : vector<8x64xf32> to vector<8x1x64xf32>
    %124 = vector.broadcast %121 : vector<8x16x1xf32> to vector<8x16x64xf32>
    %125 = vector.broadcast %123 : vector<8x1x64xf32> to vector<8x16x64xf32>
    %126 = arith.mulf %124, %125 : vector<8x16x64xf32>
    %c0_63 = arith.constant 0 : index
    %c0_64 = arith.constant 0 : index
    %c0_65 = arith.constant 0 : index
    %127 = vector.load %arg23[%c0_63, %c0_64, %c0_65] : memref<8x16x64xf32, #tpu.memory_space<vmem>>, vector<8x16x64xf32>
    tpu.vector_store %arg23[%c0_63, %c0_64, %c0_65], %126 {strides = array<i32>} : memref<8x16x64xf32, #tpu.memory_space<vmem>>, vector<8x16x64xf32>,
    %cst_66 = arith.constant 0.000000e+00 : f32
    %128 = vector.broadcast %cst_66 : f32 to vector<16x64xf32>
    %c0_i32 = arith.constant 0 : i32
    %129 = arith.index_cast %c0_i32 : i32 to index
    %c0_67 = arith.constant 0 : index
    %c0_68 = arith.constant 0 : index
    %130 = vector.load %arg22[%129, %c0_67, %c0_68] : memref<8x16x64xf32, #tpu.memory_space<vmem>>, vector<1x16x64xf32>
    %131 = vector.shape_cast %130 : vector<1x16x64xf32> to vector<16x64xf32>
    %132 = arith.mulf %131, %128 : vector<16x64xf32>
    %133 = arith.index_cast %c0_i32 : i32 to index
    %c0_69 = arith.constant 0 : index
    %c0_70 = arith.constant 0 : index
    %134 = vector.load %arg23[%133, %c0_69, %c0_70] : memref<8x16x64xf32, #tpu.memory_space<vmem>>, vector<1x16x64xf32>
    %135 = vector.shape_cast %134 : vector<1x16x64xf32> to vector<16x64xf32>
    %136 = arith.addf %132, %135 : vector<16x64xf32>
    %137 = arith.index_cast %c0_i32 : i32 to index
    %c0_71 = arith.constant 0 : index
    %c0_72 = arith.constant 0 : index
    %138 = vector.load %arg24[%137, %c0_71, %c0_72] : memref<8x16x64xf32, #tpu.memory_space<vmem>>, vector<1x16x64xf32>
    %139 = vector.shape_cast %138 : vector<1x16x64xf32> to vector<16x64xf32>
    %140 = vector.shape_cast %136 : vector<16x64xf32> to vector<1x16x64xf32>
    tpu.vector_store %arg24[%137, %c0_71, %c0_72], %140 {strides = array<i32>} : memref<8x16x64xf32, #tpu.memory_space<vmem>>, vector<1x16x64xf32>,
    %c1_i32_73 = arith.constant 1 : i32
    %141 = arith.index_cast %c1_i32_73 : i32 to index
    %c0_74 = arith.constant 0 : index
    %c0_75 = arith.constant 0 : index
    %142 = vector.load %arg22[%141, %c0_74, %c0_75] : memref<8x16x64xf32, #tpu.memory_space<vmem>>, vector<1x16x64xf32>
    %143 = vector.shape_cast %142 : vector<1x16x64xf32> to vector<16x64xf32>
    %144 = arith.mulf %143, %136 : vector<16x64xf32>
    %145 = arith.index_cast %c1_i32_73 : i32 to index
    %c0_76 = arith.constant 0 : index
    %c0_77 = arith.constant 0 : index
    %146 = vector.load %arg23[%145, %c0_76, %c0_77] : memref<8x16x64xf32, #tpu.memory_space<vmem>>, vector<1x16x64xf32>
    %147 = vector.shape_cast %146 : vector<1x16x64xf32> to vector<16x64xf32>
    %148 = arith.addf %144, %147 : vector<16x64xf32>
    %149 = arith.index_cast %c1_i32_73 : i32 to index
    %c0_78 = arith.constant 0 : index
    %c0_79 = arith.constant 0 : index
    %150 = vector.load %arg24[%149, %c0_78, %c0_79] : memref<8x16x64xf32, #tpu.memory_space<vmem>>, vector<1x16x64xf32>
    %151 = vector.shape_cast %150 : vector<1x16x64xf32> to vector<16x64xf32>
    %152 = vector.shape_cast %148 : vector<16x64xf32> to vector<1x16x64xf32>
    tpu.vector_store %arg24[%149, %c0_78, %c0_79], %152 {strides = array<i32>} : memref<8x16x64xf32, #tpu.memory_space<vmem>>, vector<1x16x64xf32>,
    %c2_i32_80 = arith.constant 2 : i32
    %153 = arith.index_cast %c2_i32_80 : i32 to index
    %c0_81 = arith.constant 0 : index
    %c0_82 = arith.constant 0 : index
    %154 = vector.load %arg22[%153, %c0_81, %c0_82] : memref<8x16x64xf32, #tpu.memory_space<vmem>>, vector<1x16x64xf32>
    %155 = vector.shape_cast %154 : vector<1x16x64xf32> to vector<16x64xf32>
    %156 = arith.mulf %155, %148 : vector<16x64xf32>
    %157 = arith.index_cast %c2_i32_80 : i32 to index
    %c0_83 = arith.constant 0 : index
    %c0_84 = arith.constant 0 : index
    %158 = vector.load %arg23[%157, %c0_83, %c0_84] : memref<8x16x64xf32, #tpu.memory_space<vmem>>, vector<1x16x64xf32>
    %159 = vector.shape_cast %158 : vector<1x16x64xf32> to vector<16x64xf32>
    %160 = arith.addf %156, %159 : vector<16x64xf32>
    %161 = arith.index_cast %c2_i32_80 : i32 to index
    %c0_85 = arith.constant 0 : index
    %c0_86 = arith.constant 0 : index
    %162 = vector.load %arg24[%161, %c0_85, %c0_86] : memref<8x16x64xf32, #tpu.memory_space<vmem>>, vector<1x16x64xf32>
    %163 = vector.shape_cast %162 : vector<1x16x64xf32> to vector<16x64xf32>
    %164 = vector.shape_cast %160 : vector<16x64xf32> to vector<1x16x64xf32>
    tpu.vector_store %arg24[%161, %c0_85, %c0_86], %164 {strides = array<i32>} : memref<8x16x64xf32, #tpu.memory_space<vmem>>, vector<1x16x64xf32>,
    %c3_i32_87 = arith.constant 3 : i32
    %165 = arith.index_cast %c3_i32_87 : i32 to index
    %c0_88 = arith.constant 0 : index
    %c0_89 = arith.constant 0 : index
    %166 = vector.load %arg22[%165, %c0_88, %c0_89] : memref<8x16x64xf32, #tpu.memory_space<vmem>>, vector<1x16x64xf32>
    %167 = vector.shape_cast %166 : vector<1x16x64xf32> to vector<16x64xf32>
    %168 = arith.mulf %167, %160 : vector<16x64xf32>
    %169 = arith.index_cast %c3_i32_87 : i32 to index
    %c0_90 = arith.constant 0 : index
    %c0_91 = arith.constant 0 : index
    %170 = vector.load %arg23[%169, %c0_90, %c0_91] : memref<8x16x64xf32, #tpu.memory_space<vmem>>, vector<1x16x64xf32>
    %171 = vector.shape_cast %170 : vector<1x16x64xf32> to vector<16x64xf32>
    %172 = arith.addf %168, %171 : vector<16x64xf32>
    %173 = arith.index_cast %c3_i32_87 : i32 to index
    %c0_92 = arith.constant 0 : index
    %c0_93 = arith.constant 0 : index
    %174 = vector.load %arg24[%173, %c0_92, %c0_93] : memref<8x16x64xf32, #tpu.memory_space<vmem>>, vector<1x16x64xf32>
    %175 = vector.shape_cast %174 : vector<1x16x64xf32> to vector<16x64xf32>
    %176 = vector.shape_cast %172 : vector<16x64xf32> to vector<1x16x64xf32>
    tpu.vector_store %arg24[%173, %c0_92, %c0_93], %176 {strides = array<i32>} : memref<8x16x64xf32, #tpu.memory_space<vmem>>, vector<1x16x64xf32>,
    %c4_i32 = arith.constant 4 : i32
    %177 = arith.index_cast %c4_i32 : i32 to index
    %c0_94 = arith.constant 0 : index
    %c0_95 = arith.constant 0 : index
    %178 = vector.load %arg22[%177, %c0_94, %c0_95] : memref<8x16x64xf32, #tpu.memory_space<vmem>>, vector<1x16x64xf32>
    %179 = vector.shape_cast %178 : vector<1x16x64xf32> to vector<16x64xf32>
    %180 = arith.mulf %179, %172 : vector<16x64xf32>
    %181 = arith.index_cast %c4_i32 : i32 to index
    %c0_96 = arith.constant 0 : index
    %c0_97 = arith.constant 0 : index
    %182 = vector.load %arg23[%181, %c0_96, %c0_97] : memref<8x16x64xf32, #tpu.memory_space<vmem>>, vector<1x16x64xf32>
    %183 = vector.shape_cast %182 : vector<1x16x64xf32> to vector<16x64xf32>
    %184 = arith.addf %180, %183 : vector<16x64xf32>
    %185 = arith.index_cast %c4_i32 : i32 to index
    %c0_98 = arith.constant 0 : index
    %c0_99 = arith.constant 0 : index
    %186 = vector.load %arg24[%185, %c0_98, %c0_99] : memref<8x16x64xf32, #tpu.memory_space<vmem>>, vector<1x16x64xf32>
    %187 = vector.shape_cast %186 : vector<1x16x64xf32> to vector<16x64xf32>
    %188 = vector.shape_cast %184 : vector<16x64xf32> to vector<1x16x64xf32>
    tpu.vector_store %arg24[%185, %c0_98, %c0_99], %188 {strides = array<i32>} : memref<8x16x64xf32, #tpu.memory_space<vmem>>, vector<1x16x64xf32>,
    %c5_i32 = arith.constant 5 : i32
    %189 = arith.index_cast %c5_i32 : i32 to index
    %c0_100 = arith.constant 0 : index
    %c0_101 = arith.constant 0 : index
    %190 = vector.load %arg22[%189, %c0_100, %c0_101] : memref<8x16x64xf32, #tpu.memory_space<vmem>>, vector<1x16x64xf32>
    %191 = vector.shape_cast %190 : vector<1x16x64xf32> to vector<16x64xf32>
    %192 = arith.mulf %191, %184 : vector<16x64xf32>
    %193 = arith.index_cast %c5_i32 : i32 to index
    %c0_102 = arith.constant 0 : index
    %c0_103 = arith.constant 0 : index
    %194 = vector.load %arg23[%193, %c0_102, %c0_103] : memref<8x16x64xf32, #tpu.memory_space<vmem>>, vector<1x16x64xf32>
    %195 = vector.shape_cast %194 : vector<1x16x64xf32> to vector<16x64xf32>
    %196 = arith.addf %192, %195 : vector<16x64xf32>
    %197 = arith.index_cast %c5_i32 : i32 to index
    %c0_104 = arith.constant 0 : index
    %c0_105 = arith.constant 0 : index
    %198 = vector.load %arg24[%197, %c0_104, %c0_105] : memref<8x16x64xf32, #tpu.memory_space<vmem>>, vector<1x16x64xf32>
    %199 = vector.shape_cast %198 : vector<1x16x64xf32> to vector<16x64xf32>
    %200 = vector.shape_cast %196 : vector<16x64xf32> to vector<1x16x64xf32>
    tpu.vector_store %arg24[%197, %c0_104, %c0_105], %200 {strides = array<i32>} : memref<8x16x64xf32, #tpu.memory_space<vmem>>, vector<1x16x64xf32>,
    %c6_i32 = arith.constant 6 : i32
    %201 = arith.index_cast %c6_i32 : i32 to index
    %c0_106 = arith.constant 0 : index
    %c0_107 = arith.constant 0 : index
    %202 = vector.load %arg22[%201, %c0_106, %c0_107] : memref<8x16x64xf32, #tpu.memory_space<vmem>>, vector<1x16x64xf32>
    %203 = vector.shape_cast %202 : vector<1x16x64xf32> to vector<16x64xf32>
    %204 = arith.mulf %203, %196 : vector<16x64xf32>
    %205 = arith.index_cast %c6_i32 : i32 to index
    %c0_108 = arith.constant 0 : index
    %c0_109 = arith.constant 0 : index
    %206 = vector.load %arg23[%205, %c0_108, %c0_109] : memref<8x16x64xf32, #tpu.memory_space<vmem>>, vector<1x16x64xf32>
    %207 = vector.shape_cast %206 : vector<1x16x64xf32> to vector<16x64xf32>
    %208 = arith.addf %204, %207 : vector<16x64xf32>
    %209 = arith.index_cast %c6_i32 : i32 to index
    %c0_110 = arith.constant 0 : index
    %c0_111 = arith.constant 0 : index
    %210 = vector.load %arg24[%209, %c0_110, %c0_111] : memref<8x16x64xf32, #tpu.memory_space<vmem>>, vector<1x16x64xf32>
    %211 = vector.shape_cast %210 : vector<1x16x64xf32> to vector<16x64xf32>
    %212 = vector.shape_cast %208 : vector<16x64xf32> to vector<1x16x64xf32>
    tpu.vector_store %arg24[%209, %c0_110, %c0_111], %212 {strides = array<i32>} : memref<8x16x64xf32, #tpu.memory_space<vmem>>, vector<1x16x64xf32>,
    %c7_i32 = arith.constant 7 : i32
    %213 = arith.index_cast %c7_i32 : i32 to index
    %c0_112 = arith.constant 0 : index
    %c0_113 = arith.constant 0 : index
    %214 = vector.load %arg22[%213, %c0_112, %c0_113] : memref<8x16x64xf32, #tpu.memory_space<vmem>>, vector<1x16x64xf32>
    %215 = vector.shape_cast %214 : vector<1x16x64xf32> to vector<16x64xf32>
    %216 = arith.mulf %215, %208 : vector<16x64xf32>
    %217 = arith.index_cast %c7_i32 : i32 to index
    %c0_114 = arith.constant 0 : index
    %c0_115 = arith.constant 0 : index
    %218 = vector.load %arg23[%217, %c0_114, %c0_115] : memref<8x16x64xf32, #tpu.memory_space<vmem>>, vector<1x16x64xf32>
    %219 = vector.shape_cast %218 : vector<1x16x64xf32> to vector<16x64xf32>
    %220 = arith.addf %216, %219 : vector<16x64xf32>
    %221 = arith.index_cast %c7_i32 : i32 to index
    %c0_116 = arith.constant 0 : index
    %c0_117 = arith.constant 0 : index
    %222 = vector.load %arg24[%221, %c0_116, %c0_117] : memref<8x16x64xf32, #tpu.memory_space<vmem>>, vector<1x16x64xf32>
    %223 = vector.shape_cast %222 : vector<1x16x64xf32> to vector<16x64xf32>
    %224 = vector.shape_cast %220 : vector<16x64xf32> to vector<1x16x64xf32>
    tpu.vector_store %arg24[%221, %c0_116, %c0_117], %224 {strides = array<i32>} : memref<8x16x64xf32, #tpu.memory_space<vmem>>, vector<1x16x64xf32>,
    %c8_i32 = arith.constant 8 : i32
    %225 = vector.shape_cast %93 : vector<8x16xf32> to vector<8x16x1xf32>
    %c0_118 = arith.constant 0 : index
    %c0_119 = arith.constant 0 : index
    %c0_120 = arith.constant 0 : index
    %226 = vector.load %arg24[%c0_118, %c0_119, %c0_120] : memref<8x16x64xf32, #tpu.memory_space<vmem>>, vector<8x16x64xf32>
    %227 = vector.broadcast %225 : vector<8x16x1xf32> to vector<8x16x64xf32>
    %228 = arith.mulf %227, %226 : vector<8x16x64xf32>
    %cst_121 = arith.constant dense<0.000000e+00> : vector<8x64xf32>
    %229 = vector.multi_reduction <add>, %228, %cst_121 [1] : vector<8x16x64xf32> to vector<8x64xf32>
    %c0_122 = arith.constant 0 : index
    %c0_123 = arith.constant 0 : index
    %c0_124 = arith.constant 0 : index
    %230 = vector.load %arg15[%c0_122, %c0_123, %c0_124] : memref<2x1x64xf32, #tpu.memory_space<vmem>>, vector<1x1x64xf32>
    %231 = vector.shape_cast %230 : vector<1x1x64xf32> to vector<1x64xf32>
    %232 = vector.broadcast %231 : vector<1x64xf32> to vector<8x64xf32>
    %233 = arith.mulf %87, %232 : vector<8x64xf32>
    %234 = arith.addf %229, %233 : vector<8x64xf32>
    %235 = arith.negf %39 : vector<8x64xf32>
    %236 = math.exp %235 : vector<8x64xf32>
    %cst_125 = arith.constant 1.000000e+00 : f32
    %237 = vector.broadcast %cst_125 : f32 to vector<8x64xf32>
    %238 = arith.addf %237, %236 : vector<8x64xf32>
    %239 = arith.divf %237, %238 : vector<8x64xf32>
    %240 = arith.mulf %39, %239 : vector<8x64xf32>
    %241 = arith.mulf %234, %240 : vector<8x64xf32>
    %c0_126 = arith.constant 0 : index
    %c0_127 = arith.constant 0 : index
    %c0_128 = arith.constant 0 : index
    %242 = vector.load %arg16[%c0_126, %c0_127, %c0_128] : memref<2x64x32xf32, #tpu.memory_space<vmem>>, vector<1x64x32xf32>
    %243 = vector.shape_cast %242 : vector<1x64x32xf32> to vector<64x32xf32>
    %cst_129 = arith.constant dense<0.000000e+00> : vector<8x32xf32>
    %244 = tpu.matmul %241, %243, %cst_129 {dimension_numbers = #tpu.dot_dimension_numbers<[1], [0], [0], [1], [0, 0, 1, 1], [], []>} : vector<8x64xf32>, vector<64x32xf32>, vector<8x32xf32> -> vector<8x32xf32>
    %245 = arith.addf %9, %244 : vector<8x32xf32>
    %c1 = arith.constant 1 : index
    %c0_130 = arith.constant 0 : index
    %c0_131 = arith.constant 0 : index
    %246 = vector.load %arg4[%c1, %c0_130, %c0_131] : memref<2x1x32xf32, #tpu.memory_space<vmem>>, vector<1x1x32xf32>
    %247 = vector.shape_cast %246 : vector<1x1x32xf32> to vector<1x32xf32>
    %c1_132 = arith.constant 1 : index
    %c0_133 = arith.constant 0 : index
    %c0_134 = arith.constant 0 : index
    %248 = vector.load %arg5[%c1_132, %c0_133, %c0_134] : memref<2x1x32xf32, #tpu.memory_space<vmem>>, vector<1x1x32xf32>
    %249 = vector.shape_cast %248 : vector<1x1x32xf32> to vector<1x32xf32>
    %cst_135 = arith.constant dense<0.000000e+00> : vector<8xf32>
    %250 = vector.multi_reduction <add>, %245, %cst_135 [1] : vector<8x32xf32> to vector<8xf32>
    %251 = vector.shape_cast %250 : vector<8xf32> to vector<8x1xf32>
    %cst_136 = arith.constant 3.200000e+01 : f32
    %252 = vector.broadcast %cst_136 : f32 to vector<8x1xf32>
    %253 = arith.divf %251, %252 : vector<8x1xf32>
    %254 = vector.broadcast %253 : vector<8x1xf32> to vector<8x32xf32>
    %255 = arith.subf %245, %254 : vector<8x32xf32>
    %256 = arith.mulf %255, %255 : vector<8x32xf32>
    %cst_137 = arith.constant dense<0.000000e+00> : vector<8xf32>
    %257 = vector.multi_reduction <add>, %256, %cst_137 [1] : vector<8x32xf32> to vector<8xf32>
    %258 = vector.shape_cast %257 : vector<8xf32> to vector<8x1xf32>
    %cst_138 = arith.constant 3.200000e+01 : f32
    %259 = vector.broadcast %cst_138 : f32 to vector<8x1xf32>
    %260 = arith.divf %258, %259 : vector<8x1xf32>
    %cst_139 = arith.constant 9.99999974E-6 : f32
    %261 = vector.broadcast %cst_139 : f32 to vector<8x1xf32>
    %262 = arith.addf %260, %261 : vector<8x1xf32>
    %263 = math.rsqrt %262 : vector<8x1xf32>
    %264 = vector.broadcast %263 : vector<8x1xf32> to vector<8x32xf32>
    %265 = arith.mulf %255, %264 : vector<8x32xf32>
    %266 = vector.broadcast %247 : vector<1x32xf32> to vector<8x32xf32>
    %267 = arith.mulf %265, %266 : vector<8x32xf32>
    %268 = vector.broadcast %249 : vector<1x32xf32> to vector<8x32xf32>
    %269 = arith.addf %267, %268 : vector<8x32xf32>
    %c1_140 = arith.constant 1 : index
    %c0_141 = arith.constant 0 : index
    %c0_142 = arith.constant 0 : index
    %270 = vector.load %arg6[%c1_140, %c0_141, %c0_142] : memref<2x32x64xf32, #tpu.memory_space<vmem>>, vector<1x32x64xf32>
    %271 = vector.shape_cast %270 : vector<1x32x64xf32> to vector<32x64xf32>
    %cst_143 = arith.constant dense<0.000000e+00> : vector<8x64xf32>
    %272 = tpu.matmul %269, %271, %cst_143 {dimension_numbers = #tpu.dot_dimension_numbers<[1], [0], [0], [1], [0, 0, 1, 1], [], []>} : vector<8x32xf32>, vector<32x64xf32>, vector<8x64xf32> -> vector<8x64xf32>
    %c1_144 = arith.constant 1 : index
    %c0_145 = arith.constant 0 : index
    %c0_146 = arith.constant 0 : index
    %273 = vector.load %arg7[%c1_144, %c0_145, %c0_146] : memref<2x32x64xf32, #tpu.memory_space<vmem>>, vector<1x32x64xf32>
    %274 = vector.shape_cast %273 : vector<1x32x64xf32> to vector<32x64xf32>
    %cst_147 = arith.constant dense<0.000000e+00> : vector<8x64xf32>
    %275 = tpu.matmul %269, %274, %cst_147 {dimension_numbers = #tpu.dot_dimension_numbers<[1], [0], [0], [1], [0, 0, 1, 1], [], []>} : vector<8x32xf32>, vector<32x64xf32>, vector<8x64xf32> -> vector<8x64xf32>
    %c1_148 = arith.constant 1 : index
    %c0_149 = arith.constant 0 : index
    %c0_150 = arith.constant 0 : index
    %276 = vector.load %arg8[%c1_148, %c0_149, %c0_150] : memref<2x4x64xf32, #tpu.memory_space<vmem>>, vector<1x4x64xf32>
    %277 = vector.shape_cast %276 : vector<1x4x64xf32> to vector<4x64xf32>
    %278 = vector.extract_strided_slice %277 {offsets = [3, 0], sizes = [1, 64], strides = [1, 1]} : vector<4x64xf32> to vector<1x64xf32>
    %279 = vector.broadcast %278 : vector<1x64xf32> to vector<8x64xf32>
    %280 = arith.mulf %272, %279 : vector<8x64xf32>
    %c3_i32_151 = arith.constant 3 : i32
    %281 = tpu.dynamic_rotate %272 by %c3_i32_151 dim 0 : vector<8x64xf32>, i32 -> vector<8x64xf32>
    %c3_i32_152 = arith.constant 3 : i32
    %282 = vector.broadcast %c3_i32_152 : i32 to vector<8x1xi32>
    %283 = arith.cmpi sge, %8, %282 : vector<8x1xi32>
    %cst_153 = arith.constant 0.000000e+00 : f32
    %284 = vector.shape_cast %283 : vector<8x1xi1> to vector<8x1xi1>
    %285 = vector.broadcast %284 : vector<8x1xi1> to vector<8x64xi1>
    %286 = vector.broadcast %cst_153 : f32 to vector<8x64xf32>
    %287 = arith.select %285, %281, %286 : vector<8x64xi1>, vector<8x64xf32>
    %288 = vector.extract_strided_slice %277 {offsets = [0, 0], sizes = [1, 64], strides = [1, 1]} : vector<4x64xf32> to vector<1x64xf32>
    %289 = vector.broadcast %288 : vector<1x64xf32> to vector<8x64xf32>
    %290 = arith.mulf %287, %289 : vector<8x64xf32>
    %291 = arith.addf %280, %290 : vector<8x64xf32>
    %c2_i32_154 = arith.constant 2 : i32
    %292 = tpu.dynamic_rotate %272 by %c2_i32_154 dim 0 : vector<8x64xf32>, i32 -> vector<8x64xf32>
    %c2_i32_155 = arith.constant 2 : i32
    %293 = vector.broadcast %c2_i32_155 : i32 to vector<8x1xi32>
    %294 = arith.cmpi sge, %8, %293 : vector<8x1xi32>
    %cst_156 = arith.constant 0.000000e+00 : f32
    %295 = vector.shape_cast %294 : vector<8x1xi1> to vector<8x1xi1>
    %296 = vector.broadcast %295 : vector<8x1xi1> to vector<8x64xi1>
    %297 = vector.broadcast %cst_156 : f32 to vector<8x64xf32>
    %298 = arith.select %296, %292, %297 : vector<8x64xi1>, vector<8x64xf32>
    %299 = vector.extract_strided_slice %277 {offsets = [1, 0], sizes = [1, 64], strides = [1, 1]} : vector<4x64xf32> to vector<1x64xf32>
    %300 = vector.broadcast %299 : vector<1x64xf32> to vector<8x64xf32>
    %301 = arith.mulf %298, %300 : vector<8x64xf32>
    %302 = arith.addf %291, %301 : vector<8x64xf32>
    %c1_i32_157 = arith.constant 1 : i32
    %303 = tpu.dynamic_rotate %272 by %c1_i32_157 dim 0 : vector<8x64xf32>, i32 -> vector<8x64xf32>
    %c1_i32_158 = arith.constant 1 : i32
    %304 = vector.broadcast %c1_i32_158 : i32 to vector<8x1xi32>
    %305 = arith.cmpi sge, %8, %304 : vector<8x1xi32>
    %cst_159 = arith.constant 0.000000e+00 : f32
    %306 = vector.shape_cast %305 : vector<8x1xi1> to vector<8x1xi1>
    %307 = vector.broadcast %306 : vector<8x1xi1> to vector<8x64xi1>
    %308 = vector.broadcast %cst_159 : f32 to vector<8x64xf32>
    %309 = arith.select %307, %303, %308 : vector<8x64xi1>, vector<8x64xf32>
    %310 = vector.extract_strided_slice %277 {offsets = [2, 0], sizes = [1, 64], strides = [1, 1]} : vector<4x64xf32> to vector<1x64xf32>
    %311 = vector.broadcast %310 : vector<1x64xf32> to vector<8x64xf32>
    %312 = arith.mulf %309, %311 : vector<8x64xf32>
    %313 = arith.addf %302, %312 : vector<8x64xf32>
    %c1_160 = arith.constant 1 : index
    %c0_161 = arith.constant 0 : index
    %c0_162 = arith.constant 0 : index
    %314 = vector.load %arg9[%c1_160, %c0_161, %c0_162] : memref<2x1x64xf32, #tpu.memory_space<vmem>>, vector<1x1x64xf32>
    %315 = vector.shape_cast %314 : vector<1x1x64xf32> to vector<1x64xf32>
    %316 = vector.broadcast %315 : vector<1x64xf32> to vector<8x64xf32>
    %317 = arith.addf %313, %316 : vector<8x64xf32>
    %318 = arith.negf %317 : vector<8x64xf32>
    %319 = math.exp %318 : vector<8x64xf32>
    %cst_163 = arith.constant 1.000000e+00 : f32
    %320 = vector.broadcast %cst_163 : f32 to vector<8x64xf32>
    %321 = arith.addf %320, %319 : vector<8x64xf32>
    %322 = arith.divf %320, %321 : vector<8x64xf32>
    %323 = arith.mulf %317, %322 : vector<8x64xf32>
    %c1_164 = arith.constant 1 : index
    %c0_165 = arith.constant 0 : index
    %c0_166 = arith.constant 0 : index
    %324 = vector.load %arg10[%c1_164, %c0_165, %c0_166] : memref<2x64x16xf32, #tpu.memory_space<vmem>>, vector<1x64x16xf32>
    %325 = vector.shape_cast %324 : vector<1x64x16xf32> to vector<64x16xf32>
    %cst_167 = arith.constant dense<0.000000e+00> : vector<8x16xf32>
    %326 = tpu.matmul %323, %325, %cst_167 {dimension_numbers = #tpu.dot_dimension_numbers<[1], [0], [0], [1], [0, 0, 1, 1], [], []>} : vector<8x64xf32>, vector<64x16xf32>, vector<8x16xf32> -> vector<8x16xf32>
    %c1_168 = arith.constant 1 : index
    %c0_169 = arith.constant 0 : index
    %c0_170 = arith.constant 0 : index
    %327 = vector.load %arg11[%c1_168, %c0_169, %c0_170] : memref<2x64x16xf32, #tpu.memory_space<vmem>>, vector<1x64x16xf32>
    %328 = vector.shape_cast %327 : vector<1x64x16xf32> to vector<64x16xf32>
    %cst_171 = arith.constant dense<0.000000e+00> : vector<8x16xf32>
    %329 = tpu.matmul %323, %328, %cst_171 {dimension_numbers = #tpu.dot_dimension_numbers<[1], [0], [0], [1], [0, 0, 1, 1], [], []>} : vector<8x64xf32>, vector<64x16xf32>, vector<8x16xf32> -> vector<8x16xf32>
    %c1_172 = arith.constant 1 : index
    %c0_173 = arith.constant 0 : index
    %c0_174 = arith.constant 0 : index
    %330 = vector.load %arg12[%c1_172, %c0_173, %c0_174] : memref<2x64x64xf32, #tpu.memory_space<vmem>>, vector<1x64x64xf32>
    %331 = vector.shape_cast %330 : vector<1x64x64xf32> to vector<64x64xf32>
    %cst_175 = arith.constant dense<0.000000e+00> : vector<8x64xf32>
    %332 = tpu.matmul %323, %331, %cst_175 {dimension_numbers = #tpu.dot_dimension_numbers<[1], [0], [0], [1], [0, 0, 1, 1], [], []>} : vector<8x64xf32>, vector<64x64xf32>, vector<8x64xf32> -> vector<8x64xf32>
    %c1_176 = arith.constant 1 : index
    %c0_177 = arith.constant 0 : index
    %c0_178 = arith.constant 0 : index
    %333 = vector.load %arg13[%c1_176, %c0_177, %c0_178] : memref<2x1x64xf32, #tpu.memory_space<vmem>>, vector<1x1x64xf32>
    %334 = vector.shape_cast %333 : vector<1x1x64xf32> to vector<1x64xf32>
    %335 = vector.broadcast %334 : vector<1x64xf32> to vector<8x64xf32>
    %336 = arith.addf %332, %335 : vector<8x64xf32>
    %cst_179 = arith.constant 0.000000e+00 : f32
    %337 = vector.broadcast %cst_179 : f32 to vector<8x64xf32>
    %338 = arith.maximumf %336, %337 : vector<8x64xf32>
    %339 = math.absf %336 : vector<8x64xf32>
    %cst_180 = arith.constant 0.000000e+00 : f32
    %340 = vector.broadcast %cst_180 : f32 to vector<8x64xf32>
    %341 = arith.subf %340, %339 : vector<8x64xf32>
    %342 = math.exp %341 : vector<8x64xf32>
    %343 = math.log1p %342 : vector<8x64xf32>
    %344 = arith.addf %338, %343 : vector<8x64xf32>
    %c1_181 = arith.constant 1 : index
    %c0_182 = arith.constant 0 : index
    %c0_183 = arith.constant 0 : index
    %345 = vector.load %arg14[%c1_181, %c0_182, %c0_183] : memref<2x16x64xf32, #tpu.memory_space<vmem>>, vector<1x16x64xf32>
    %346 = vector.shape_cast %345 : vector<1x16x64xf32> to vector<16x64xf32>
    %347 = math.exp %346 : vector<16x64xf32>
    %cst_184 = arith.constant 0.000000e+00 : f32
    %348 = vector.broadcast %cst_184 : f32 to vector<16x64xf32>
    %349 = arith.subf %348, %347 : vector<16x64xf32>
    %350 = vector.shape_cast %344 : vector<8x64xf32> to vector<8x1x64xf32>
    %351 = vector.shape_cast %349 : vector<16x64xf32> to vector<1x16x64xf32>
    %352 = vector.broadcast %350 : vector<8x1x64xf32> to vector<8x16x64xf32>
    %353 = vector.broadcast %351 : vector<1x16x64xf32> to vector<8x16x64xf32>
    %354 = arith.mulf %352, %353 : vector<8x16x64xf32>
    %355 = math.exp %354 : vector<8x16x64xf32>
    %c0_185 = arith.constant 0 : index
    %c0_186 = arith.constant 0 : index
    %c0_187 = arith.constant 0 : index
    %356 = vector.load %arg22[%c0_185, %c0_186, %c0_187] : memref<8x16x64xf32, #tpu.memory_space<vmem>>, vector<8x16x64xf32>
    tpu.vector_store %arg22[%c0_185, %c0_186, %c0_187], %355 {strides = array<i32>} : memref<8x16x64xf32, #tpu.memory_space<vmem>>, vector<8x16x64xf32>,
    %357 = vector.shape_cast %326 : vector<8x16xf32> to vector<8x16x1xf32>
    %358 = arith.mulf %344, %323 : vector<8x64xf32>
    %359 = vector.shape_cast %358 : vector<8x64xf32> to vector<8x1x64xf32>
    %360 = vector.broadcast %357 : vector<8x16x1xf32> to vector<8x16x64xf32>
    %361 = vector.broadcast %359 : vector<8x1x64xf32> to vector<8x16x64xf32>
    %362 = arith.mulf %360, %361 : vector<8x16x64xf32>
    %c0_188 = arith.constant 0 : index
    %c0_189 = arith.constant 0 : index
    %c0_190 = arith.constant 0 : index
    %363 = vector.load %arg23[%c0_188, %c0_189, %c0_190] : memref<8x16x64xf32, #tpu.memory_space<vmem>>, vector<8x16x64xf32>
    tpu.vector_store %arg23[%c0_188, %c0_189, %c0_190], %362 {strides = array<i32>} : memref<8x16x64xf32, #tpu.memory_space<vmem>>, vector<8x16x64xf32>,
    %cst_191 = arith.constant 0.000000e+00 : f32
    %364 = vector.broadcast %cst_191 : f32 to vector<16x64xf32>
    %c0_i32_192 = arith.constant 0 : i32
    %365 = arith.index_cast %c0_i32_192 : i32 to index
    %c0_193 = arith.constant 0 : index
    %c0_194 = arith.constant 0 : index
    %366 = vector.load %arg22[%365, %c0_193, %c0_194] : memref<8x16x64xf32, #tpu.memory_space<vmem>>, vector<1x16x64xf32>
    %367 = vector.shape_cast %366 : vector<1x16x64xf32> to vector<16x64xf32>
    %368 = arith.mulf %367, %364 : vector<16x64xf32>
    %369 = arith.index_cast %c0_i32_192 : i32 to index
    %c0_195 = arith.constant 0 : index
    %c0_196 = arith.constant 0 : index
    %370 = vector.load %arg23[%369, %c0_195, %c0_196] : memref<8x16x64xf32, #tpu.memory_space<vmem>>, vector<1x16x64xf32>
    %371 = vector.shape_cast %370 : vector<1x16x64xf32> to vector<16x64xf32>
    %372 = arith.addf %368, %371 : vector<16x64xf32>
    %373 = arith.index_cast %c0_i32_192 : i32 to index
    %c0_197 = arith.constant 0 : index
    %c0_198 = arith.constant 0 : index
    %374 = vector.load %arg24[%373, %c0_197, %c0_198] : memref<8x16x64xf32, #tpu.memory_space<vmem>>, vector<1x16x64xf32>
    %375 = vector.shape_cast %374 : vector<1x16x64xf32> to vector<16x64xf32>
    %376 = vector.shape_cast %372 : vector<16x64xf32> to vector<1x16x64xf32>
    tpu.vector_store %arg24[%373, %c0_197, %c0_198], %376 {strides = array<i32>} : memref<8x16x64xf32, #tpu.memory_space<vmem>>, vector<1x16x64xf32>,
    %c1_i32_199 = arith.constant 1 : i32
    %377 = arith.index_cast %c1_i32_199 : i32 to index
    %c0_200 = arith.constant 0 : index
    %c0_201 = arith.constant 0 : index
    %378 = vector.load %arg22[%377, %c0_200, %c0_201] : memref<8x16x64xf32, #tpu.memory_space<vmem>>, vector<1x16x64xf32>
    %379 = vector.shape_cast %378 : vector<1x16x64xf32> to vector<16x64xf32>
    %380 = arith.mulf %379, %372 : vector<16x64xf32>
    %381 = arith.index_cast %c1_i32_199 : i32 to index
    %c0_202 = arith.constant 0 : index
    %c0_203 = arith.constant 0 : index
    %382 = vector.load %arg23[%381, %c0_202, %c0_203] : memref<8x16x64xf32, #tpu.memory_space<vmem>>, vector<1x16x64xf32>
    %383 = vector.shape_cast %382 : vector<1x16x64xf32> to vector<16x64xf32>
    %384 = arith.addf %380, %383 : vector<16x64xf32>
    %385 = arith.index_cast %c1_i32_199 : i32 to index
    %c0_204 = arith.constant 0 : index
    %c0_205 = arith.constant 0 : index
    %386 = vector.load %arg24[%385, %c0_204, %c0_205] : memref<8x16x64xf32, #tpu.memory_space<vmem>>, vector<1x16x64xf32>
    %387 = vector.shape_cast %386 : vector<1x16x64xf32> to vector<16x64xf32>
    %388 = vector.shape_cast %384 : vector<16x64xf32> to vector<1x16x64xf32>
    tpu.vector_store %arg24[%385, %c0_204, %c0_205], %388 {strides = array<i32>} : memref<8x16x64xf32, #tpu.memory_space<vmem>>, vector<1x16x64xf32>,
    %c2_i32_206 = arith.constant 2 : i32
    %389 = arith.index_cast %c2_i32_206 : i32 to index
    %c0_207 = arith.constant 0 : index
    %c0_208 = arith.constant 0 : index
    %390 = vector.load %arg22[%389, %c0_207, %c0_208] : memref<8x16x64xf32, #tpu.memory_space<vmem>>, vector<1x16x64xf32>
    %391 = vector.shape_cast %390 : vector<1x16x64xf32> to vector<16x64xf32>
    %392 = arith.mulf %391, %384 : vector<16x64xf32>
    %393 = arith.index_cast %c2_i32_206 : i32 to index
    %c0_209 = arith.constant 0 : index
    %c0_210 = arith.constant 0 : index
    %394 = vector.load %arg23[%393, %c0_209, %c0_210] : memref<8x16x64xf32, #tpu.memory_space<vmem>>, vector<1x16x64xf32>
    %395 = vector.shape_cast %394 : vector<1x16x64xf32> to vector<16x64xf32>
    %396 = arith.addf %392, %395 : vector<16x64xf32>
    %397 = arith.index_cast %c2_i32_206 : i32 to index
    %c0_211 = arith.constant 0 : index
    %c0_212 = arith.constant 0 : index
    %398 = vector.load %arg24[%397, %c0_211, %c0_212] : memref<8x16x64xf32, #tpu.memory_space<vmem>>, vector<1x16x64xf32>
    %399 = vector.shape_cast %398 : vector<1x16x64xf32> to vector<16x64xf32>
    %400 = vector.shape_cast %396 : vector<16x64xf32> to vector<1x16x64xf32>
    tpu.vector_store %arg24[%397, %c0_211, %c0_212], %400 {strides = array<i32>} : memref<8x16x64xf32, #tpu.memory_space<vmem>>, vector<1x16x64xf32>,
    %c3_i32_213 = arith.constant 3 : i32
    %401 = arith.index_cast %c3_i32_213 : i32 to index
    %c0_214 = arith.constant 0 : index
    %c0_215 = arith.constant 0 : index
    %402 = vector.load %arg22[%401, %c0_214, %c0_215] : memref<8x16x64xf32, #tpu.memory_space<vmem>>, vector<1x16x64xf32>
    %403 = vector.shape_cast %402 : vector<1x16x64xf32> to vector<16x64xf32>
    %404 = arith.mulf %403, %396 : vector<16x64xf32>
    %405 = arith.index_cast %c3_i32_213 : i32 to index
    %c0_216 = arith.constant 0 : index
    %c0_217 = arith.constant 0 : index
    %406 = vector.load %arg23[%405, %c0_216, %c0_217] : memref<8x16x64xf32, #tpu.memory_space<vmem>>, vector<1x16x64xf32>
    %407 = vector.shape_cast %406 : vector<1x16x64xf32> to vector<16x64xf32>
    %408 = arith.addf %404, %407 : vector<16x64xf32>
    %409 = arith.index_cast %c3_i32_213 : i32 to index
    %c0_218 = arith.constant 0 : index
    %c0_219 = arith.constant 0 : index
    %410 = vector.load %arg24[%409, %c0_218, %c0_219] : memref<8x16x64xf32, #tpu.memory_space<vmem>>, vector<1x16x64xf32>
    %411 = vector.shape_cast %410 : vector<1x16x64xf32> to vector<16x64xf32>
    %412 = vector.shape_cast %408 : vector<16x64xf32> to vector<1x16x64xf32>
    tpu.vector_store %arg24[%409, %c0_218, %c0_219], %412 {strides = array<i32>} : memref<8x16x64xf32, #tpu.memory_space<vmem>>, vector<1x16x64xf32>,
    %c4_i32_220 = arith.constant 4 : i32
    %413 = arith.index_cast %c4_i32_220 : i32 to index
    %c0_221 = arith.constant 0 : index
    %c0_222 = arith.constant 0 : index
    %414 = vector.load %arg22[%413, %c0_221, %c0_222] : memref<8x16x64xf32, #tpu.memory_space<vmem>>, vector<1x16x64xf32>
    %415 = vector.shape_cast %414 : vector<1x16x64xf32> to vector<16x64xf32>
    %416 = arith.mulf %415, %408 : vector<16x64xf32>
    %417 = arith.index_cast %c4_i32_220 : i32 to index
    %c0_223 = arith.constant 0 : index
    %c0_224 = arith.constant 0 : index
    %418 = vector.load %arg23[%417, %c0_223, %c0_224] : memref<8x16x64xf32, #tpu.memory_space<vmem>>, vector<1x16x64xf32>
    %419 = vector.shape_cast %418 : vector<1x16x64xf32> to vector<16x64xf32>
    %420 = arith.addf %416, %419 : vector<16x64xf32>
    %421 = arith.index_cast %c4_i32_220 : i32 to index
    %c0_225 = arith.constant 0 : index
    %c0_226 = arith.constant 0 : index
    %422 = vector.load %arg24[%421, %c0_225, %c0_226] : memref<8x16x64xf32, #tpu.memory_space<vmem>>, vector<1x16x64xf32>
    %423 = vector.shape_cast %422 : vector<1x16x64xf32> to vector<16x64xf32>
    %424 = vector.shape_cast %420 : vector<16x64xf32> to vector<1x16x64xf32>
    tpu.vector_store %arg24[%421, %c0_225, %c0_226], %424 {strides = array<i32>} : memref<8x16x64xf32, #tpu.memory_space<vmem>>, vector<1x16x64xf32>,
    %c5_i32_227 = arith.constant 5 : i32
    %425 = arith.index_cast %c5_i32_227 : i32 to index
    %c0_228 = arith.constant 0 : index
    %c0_229 = arith.constant 0 : index
    %426 = vector.load %arg22[%425, %c0_228, %c0_229] : memref<8x16x64xf32, #tpu.memory_space<vmem>>, vector<1x16x64xf32>
    %427 = vector.shape_cast %426 : vector<1x16x64xf32> to vector<16x64xf32>
    %428 = arith.mulf %427, %420 : vector<16x64xf32>
    %429 = arith.index_cast %c5_i32_227 : i32 to index
    %c0_230 = arith.constant 0 : index
    %c0_231 = arith.constant 0 : index
    %430 = vector.load %arg23[%429, %c0_230, %c0_231] : memref<8x16x64xf32, #tpu.memory_space<vmem>>, vector<1x16x64xf32>
    %431 = vector.shape_cast %430 : vector<1x16x64xf32> to vector<16x64xf32>
    %432 = arith.addf %428, %431 : vector<16x64xf32>
    %433 = arith.index_cast %c5_i32_227 : i32 to index
    %c0_232 = arith.constant 0 : index
    %c0_233 = arith.constant 0 : index
    %434 = vector.load %arg24[%433, %c0_232, %c0_233] : memref<8x16x64xf32, #tpu.memory_space<vmem>>, vector<1x16x64xf32>
    %435 = vector.shape_cast %434 : vector<1x16x64xf32> to vector<16x64xf32>
    %436 = vector.shape_cast %432 : vector<16x64xf32> to vector<1x16x64xf32>
    tpu.vector_store %arg24[%433, %c0_232, %c0_233], %436 {strides = array<i32>} : memref<8x16x64xf32, #tpu.memory_space<vmem>>, vector<1x16x64xf32>,
    %c6_i32_234 = arith.constant 6 : i32
    %437 = arith.index_cast %c6_i32_234 : i32 to index
    %c0_235 = arith.constant 0 : index
    %c0_236 = arith.constant 0 : index
    %438 = vector.load %arg22[%437, %c0_235, %c0_236] : memref<8x16x64xf32, #tpu.memory_space<vmem>>, vector<1x16x64xf32>
    %439 = vector.shape_cast %438 : vector<1x16x64xf32> to vector<16x64xf32>
    %440 = arith.mulf %439, %432 : vector<16x64xf32>
    %441 = arith.index_cast %c6_i32_234 : i32 to index
    %c0_237 = arith.constant 0 : index
    %c0_238 = arith.constant 0 : index
    %442 = vector.load %arg23[%441, %c0_237, %c0_238] : memref<8x16x64xf32, #tpu.memory_space<vmem>>, vector<1x16x64xf32>
    %443 = vector.shape_cast %442 : vector<1x16x64xf32> to vector<16x64xf32>
    %444 = arith.addf %440, %443 : vector<16x64xf32>
    %445 = arith.index_cast %c6_i32_234 : i32 to index
    %c0_239 = arith.constant 0 : index
    %c0_240 = arith.constant 0 : index
    %446 = vector.load %arg24[%445, %c0_239, %c0_240] : memref<8x16x64xf32, #tpu.memory_space<vmem>>, vector<1x16x64xf32>
    %447 = vector.shape_cast %446 : vector<1x16x64xf32> to vector<16x64xf32>
    %448 = vector.shape_cast %444 : vector<16x64xf32> to vector<1x16x64xf32>
    tpu.vector_store %arg24[%445, %c0_239, %c0_240], %448 {strides = array<i32>} : memref<8x16x64xf32, #tpu.memory_space<vmem>>, vector<1x16x64xf32>,
    %c7_i32_241 = arith.constant 7 : i32
    %449 = arith.index_cast %c7_i32_241 : i32 to index
    %c0_242 = arith.constant 0 : index
    %c0_243 = arith.constant 0 : index
    %450 = vector.load %arg22[%449, %c0_242, %c0_243] : memref<8x16x64xf32, #tpu.memory_space<vmem>>, vector<1x16x64xf32>
    %451 = vector.shape_cast %450 : vector<1x16x64xf32> to vector<16x64xf32>
    %452 = arith.mulf %451, %444 : vector<16x64xf32>
    %453 = arith.index_cast %c7_i32_241 : i32 to index
    %c0_244 = arith.constant 0 : index
    %c0_245 = arith.constant 0 : index
    %454 = vector.load %arg23[%453, %c0_244, %c0_245] : memref<8x16x64xf32, #tpu.memory_space<vmem>>, vector<1x16x64xf32>
    %455 = vector.shape_cast %454 : vector<1x16x64xf32> to vector<16x64xf32>
    %456 = arith.addf %452, %455 : vector<16x64xf32>
    %457 = arith.index_cast %c7_i32_241 : i32 to index
    %c0_246 = arith.constant 0 : index
    %c0_247 = arith.constant 0 : index
    %458 = vector.load %arg24[%457, %c0_246, %c0_247] : memref<8x16x64xf32, #tpu.memory_space<vmem>>, vector<1x16x64xf32>
    %459 = vector.shape_cast %458 : vector<1x16x64xf32> to vector<16x64xf32>
    %460 = vector.shape_cast %456 : vector<16x64xf32> to vector<1x16x64xf32>
    tpu.vector_store %arg24[%457, %c0_246, %c0_247], %460 {strides = array<i32>} : memref<8x16x64xf32, #tpu.memory_space<vmem>>, vector<1x16x64xf32>,
    %c8_i32_248 = arith.constant 8 : i32
    %461 = vector.shape_cast %329 : vector<8x16xf32> to vector<8x16x1xf32>
    %c0_249 = arith.constant 0 : index
    %c0_250 = arith.constant 0 : index
    %c0_251 = arith.constant 0 : index
    %462 = vector.load %arg24[%c0_249, %c0_250, %c0_251] : memref<8x16x64xf32, #tpu.memory_space<vmem>>, vector<8x16x64xf32>
    %463 = vector.broadcast %461 : vector<8x16x1xf32> to vector<8x16x64xf32>
    %464 = arith.mulf %463, %462 : vector<8x16x64xf32>
    %cst_252 = arith.constant dense<0.000000e+00> : vector<8x64xf32>
    %465 = vector.multi_reduction <add>, %464, %cst_252 [1] : vector<8x16x64xf32> to vector<8x64xf32>
    %c1_253 = arith.constant 1 : index
    %c0_254 = arith.constant 0 : index
    %c0_255 = arith.constant 0 : index
    %466 = vector.load %arg15[%c1_253, %c0_254, %c0_255] : memref<2x1x64xf32, #tpu.memory_space<vmem>>, vector<1x1x64xf32>
    %467 = vector.shape_cast %466 : vector<1x1x64xf32> to vector<1x64xf32>
    %468 = vector.broadcast %467 : vector<1x64xf32> to vector<8x64xf32>
    %469 = arith.mulf %323, %468 : vector<8x64xf32>
    %470 = arith.addf %465, %469 : vector<8x64xf32>
    %471 = arith.negf %275 : vector<8x64xf32>
    %472 = math.exp %471 : vector<8x64xf32>
    %cst_256 = arith.constant 1.000000e+00 : f32
    %473 = vector.broadcast %cst_256 : f32 to vector<8x64xf32>
    %474 = arith.addf %473, %472 : vector<8x64xf32>
    %475 = arith.divf %473, %474 : vector<8x64xf32>
    %476 = arith.mulf %275, %475 : vector<8x64xf32>
    %477 = arith.mulf %470, %476 : vector<8x64xf32>
    %c1_257 = arith.constant 1 : index
    %c0_258 = arith.constant 0 : index
    %c0_259 = arith.constant 0 : index
    %478 = vector.load %arg16[%c1_257, %c0_258, %c0_259] : memref<2x64x32xf32, #tpu.memory_space<vmem>>, vector<1x64x32xf32>
    %479 = vector.shape_cast %478 : vector<1x64x32xf32> to vector<64x32xf32>
    %cst_260 = arith.constant dense<0.000000e+00> : vector<8x32xf32>
    %480 = tpu.matmul %477, %479, %cst_260 {dimension_numbers = #tpu.dot_dimension_numbers<[1], [0], [0], [1], [0, 0, 1, 1], [], []>} : vector<8x64xf32>, vector<64x32xf32>, vector<8x32xf32> -> vector<8x32xf32>
    %481 = arith.addf %245, %480 : vector<8x32xf32>
    %482 = vector.extract_strided_slice %481 {offsets = [7, 0], sizes = [1, 32], strides = [1, 1]} : vector<8x32xf32> to vector<1x32xf32>
    %c0_261 = arith.constant 0 : index
    %c0_262 = arith.constant 0 : index
    %483 = vector.load %arg17[%c0_261, %c0_262] : memref<1x32xf32, #tpu.memory_space<vmem>>, vector<1x32xf32>
    %c0_263 = arith.constant 0 : index
    %c0_264 = arith.constant 0 : index
    %484 = vector.load %arg18[%c0_263, %c0_264] : memref<1x32xf32, #tpu.memory_space<vmem>>, vector<1x32xf32>
    %cst_265 = arith.constant dense<0.000000e+00> : vector<1xf32>
    %485 = vector.multi_reduction <add>, %482, %cst_265 [1] : vector<1x32xf32> to vector<1xf32>
    %486 = vector.shape_cast %485 : vector<1xf32> to vector<1x1xf32>
    %cst_266 = arith.constant 3.200000e+01 : f32
    %487 = vector.broadcast %cst_266 : f32 to vector<1x1xf32>
    %488 = arith.divf %486, %487 : vector<1x1xf32>
    %489 = vector.broadcast %488 : vector<1x1xf32> to vector<1x32xf32>
    %490 = arith.subf %482, %489 : vector<1x32xf32>
    %491 = arith.mulf %490, %490 : vector<1x32xf32>
    %cst_267 = arith.constant dense<0.000000e+00> : vector<1xf32>
    %492 = vector.multi_reduction <add>, %491, %cst_267 [1] : vector<1x32xf32> to vector<1xf32>
    %493 = vector.shape_cast %492 : vector<1xf32> to vector<1x1xf32>
    %cst_268 = arith.constant 3.200000e+01 : f32
    %494 = vector.broadcast %cst_268 : f32 to vector<1x1xf32>
    %495 = arith.divf %493, %494 : vector<1x1xf32>
    %cst_269 = arith.constant 9.99999974E-6 : f32
    %496 = vector.broadcast %cst_269 : f32 to vector<1x1xf32>
    %497 = arith.addf %495, %496 : vector<1x1xf32>
    %498 = math.rsqrt %497 : vector<1x1xf32>
    %499 = vector.broadcast %498 : vector<1x1xf32> to vector<1x32xf32>
    %500 = arith.mulf %490, %499 : vector<1x32xf32>
    %501 = arith.mulf %500, %483 : vector<1x32xf32>
    %502 = arith.addf %501, %484 : vector<1x32xf32>
    %c0_270 = arith.constant 0 : index
    %c0_271 = arith.constant 0 : index
    %503 = vector.load %arg19[%c0_270, %c0_271] : memref<32x2xf32, #tpu.memory_space<vmem>>, vector<32x2xf32>
    %cst_272 = arith.constant dense<0.000000e+00> : vector<1x2xf32>
    %504 = tpu.matmul %502, %503, %cst_272 {dimension_numbers = #tpu.dot_dimension_numbers<[1], [0], [0], [1], [0, 0, 1, 1], [], []>} : vector<1x32xf32>, vector<32x2xf32>, vector<1x2xf32> -> vector<1x2xf32>
    %c0_273 = arith.constant 0 : index
    %c0_274 = arith.constant 0 : index
    %505 = vector.load %arg20[%c0_273, %c0_274] : memref<1x2xf32, #tpu.memory_space<vmem>>, vector<1x2xf32>
    %506 = arith.addf %504, %505 : vector<1x2xf32>
    %c0_275 = arith.constant 0 : index
    %c0_276 = arith.constant 0 : index
    %c0_277 = arith.constant 0 : index
    %507 = vector.load %arg21[%c0_275, %c0_276, %c0_277] : memref<1x1x2xf32, #tpu.memory_space<vmem>>, vector<1x1x2xf32>
    %508 = vector.shape_cast %507 : vector<1x1x2xf32> to vector<1x2xf32>
    %509 = vector.shape_cast %506 : vector<1x2xf32> to vector<1x1x2xf32>
    tpu.vector_store %arg21[%c0_275, %c0_276, %c0_277], %509 {strides = array<i32>} : memref<1x1x2xf32, #tpu.memory_space<vmem>>, vector<1x1x2xf32>,
    return
  }
  func.func @transform_0(%arg0: i32) -> (i32, i32, i32) {
    %c0_i32 = arith.constant 0 : i32
    %c0_i32_0 = arith.constant 0 : i32
    %c0_i32_1 = arith.constant 0 : i32
    return %arg0, %c0_i32, %c0_i32_0 : i32, i32, i32
  }
  func.func @transform_1(%arg0: i32) -> (i32, i32) {
    %c0_i32 = arith.constant 0 : i32
    %c0_i32_0 = arith.constant 0 : i32
    %c0_i32_1 = arith.constant 0 : i32
    return %c0_i32, %c0_i32_0 : i32, i32
  }
  func.func @transform_2(%arg0: i32) -> (i32, i32) {
    %c0_i32 = arith.constant 0 : i32
    %c0_i32_0 = arith.constant 0 : i32
    %c0_i32_1 = arith.constant 0 : i32
    return %c0_i32, %c0_i32_0 : i32, i32
  }
  func.func @transform_3(%arg0: i32) -> (i32, i32, i32) {
    %c0_i32 = arith.constant 0 : i32
    %c0_i32_0 = arith.constant 0 : i32
    %c0_i32_1 = arith.constant 0 : i32
    %c0_i32_2 = arith.constant 0 : i32
    return %c0_i32, %c0_i32_0, %c0_i32_1 : i32, i32, i32
  }
  func.func @transform_4(%arg0: i32) -> (i32, i32, i32) {
    %c0_i32 = arith.constant 0 : i32
    %c0_i32_0 = arith.constant 0 : i32
    %c0_i32_1 = arith.constant 0 : i32
    %c0_i32_2 = arith.constant 0 : i32
    return %c0_i32, %c0_i32_0, %c0_i32_1 : i32, i32, i32
  }
  func.func @transform_5(%arg0: i32) -> (i32, i32, i32) {
    %c0_i32 = arith.constant 0 : i32
    %c0_i32_0 = arith.constant 0 : i32
    %c0_i32_1 = arith.constant 0 : i32
    %c0_i32_2 = arith.constant 0 : i32
    return %c0_i32, %c0_i32_0, %c0_i32_1 : i32, i32, i32
  }
  func.func @transform_6(%arg0: i32) -> (i32, i32, i32) {
    %c0_i32 = arith.constant 0 : i32
    %c0_i32_0 = arith.constant 0 : i32
    %c0_i32_1 = arith.constant 0 : i32
    %c0_i32_2 = arith.constant 0 : i32
    return %c0_i32, %c0_i32_0, %c0_i32_1 : i32, i32, i32
  }
  func.func @transform_7(%arg0: i32) -> (i32, i32, i32) {
    %c0_i32 = arith.constant 0 : i32
    %c0_i32_0 = arith.constant 0 : i32
    %c0_i32_1 = arith.constant 0 : i32
    %c0_i32_2 = arith.constant 0 : i32
    return %c0_i32, %c0_i32_0, %c0_i32_1 : i32, i32, i32
  }
  func.func @transform_8(%arg0: i32) -> (i32, i32, i32) {
    %c0_i32 = arith.constant 0 : i32
    %c0_i32_0 = arith.constant 0 : i32
    %c0_i32_1 = arith.constant 0 : i32
    %c0_i32_2 = arith.constant 0 : i32
    return %c0_i32, %c0_i32_0, %c0_i32_1 : i32, i32, i32
  }
  func.func @transform_9(%arg0: i32) -> (i32, i32, i32) {
    %c0_i32 = arith.constant 0 : i32
    %c0_i32_0 = arith.constant 0 : i32
    %c0_i32_1 = arith.constant 0 : i32
    %c0_i32_2 = arith.constant 0 : i32
    return %c0_i32, %c0_i32_0, %c0_i32_1 : i32, i32, i32
  }
  func.func @transform_10(%arg0: i32) -> (i32, i32, i32) {
    %c0_i32 = arith.constant 0 : i32
    %c0_i32_0 = arith.constant 0 : i32
    %c0_i32_1 = arith.constant 0 : i32
    %c0_i32_2 = arith.constant 0 : i32
    return %c0_i32, %c0_i32_0, %c0_i32_1 : i32, i32, i32
  }
  func.func @transform_11(%arg0: i32) -> (i32, i32, i32) {
    %c0_i32 = arith.constant 0 : i32
    %c0_i32_0 = arith.constant 0 : i32
    %c0_i32_1 = arith.constant 0 : i32
    %c0_i32_2 = arith.constant 0 : i32
    return %c0_i32, %c0_i32_0, %c0_i32_1 : i32, i32, i32
  }
  func.func @transform_12(%arg0: i32) -> (i32, i32, i32) {
    %c0_i32 = arith.constant 0 : i32
    %c0_i32_0 = arith.constant 0 : i32
    %c0_i32_1 = arith.constant 0 : i32
    %c0_i32_2 = arith.constant 0 : i32
    return %c0_i32, %c0_i32_0, %c0_i32_1 : i32, i32, i32
  }
  func.func @transform_13(%arg0: i32) -> (i32, i32, i32) {
    %c0_i32 = arith.constant 0 : i32
    %c0_i32_0 = arith.constant 0 : i32
    %c0_i32_1 = arith.constant 0 : i32
    %c0_i32_2 = arith.constant 0 : i32
    return %c0_i32, %c0_i32_0, %c0_i32_1 : i32, i32, i32
  }
  func.func @transform_14(%arg0: i32) -> (i32, i32, i32) {
    %c0_i32 = arith.constant 0 : i32
    %c0_i32_0 = arith.constant 0 : i32
    %c0_i32_1 = arith.constant 0 : i32
    %c0_i32_2 = arith.constant 0 : i32
    return %c0_i32, %c0_i32_0, %c0_i32_1 : i32, i32, i32
  }
  func.func @transform_15(%arg0: i32) -> (i32, i32, i32) {
    %c0_i32 = arith.constant 0 : i32
    %c0_i32_0 = arith.constant 0 : i32
    %c0_i32_1 = arith.constant 0 : i32
    %c0_i32_2 = arith.constant 0 : i32
    return %c0_i32, %c0_i32_0, %c0_i32_1 : i32, i32, i32
  }
  func.func @transform_16(%arg0: i32) -> (i32, i32) {
    %c0_i32 = arith.constant 0 : i32
    %c0_i32_0 = arith.constant 0 : i32
    %c0_i32_1 = arith.constant 0 : i32
    return %c0_i32, %c0_i32_0 : i32, i32
  }
  func.func @transform_17(%arg0: i32) -> (i32, i32) {
    %c0_i32 = arith.constant 0 : i32
    %c0_i32_0 = arith.constant 0 : i32
    %c0_i32_1 = arith.constant 0 : i32
    return %c0_i32, %c0_i32_0 : i32, i32
  }
  func.func @transform_18(%arg0: i32) -> (i32, i32) {
    %c0_i32 = arith.constant 0 : i32
    %c0_i32_0 = arith.constant 0 : i32
    %c0_i32_1 = arith.constant 0 : i32
    return %c0_i32, %c0_i32_0 : i32, i32
  }
  func.func @transform_19(%arg0: i32) -> (i32, i32) {
    %c0_i32 = arith.constant 0 : i32
    %c0_i32_0 = arith.constant 0 : i32
    %c0_i32_1 = arith.constant 0 : i32
    return %c0_i32, %c0_i32_0 : i32, i32
  }
  func.func @transform_20(%arg0: i32) -> (i32, i32, i32) {
    %c0_i32 = arith.constant 0 : i32
    %c0_i32_0 = arith.constant 0 : i32
    %c0_i32_1 = arith.constant 0 : i32
    return %arg0, %c0_i32, %c0_i32_0 : i32, i32, i32
  }
}

</mosaic_0001>

<llo_original>
// kernel: vision_mamba3d_forward.1
$region0: #{vision_mamba3d_forward.1}
  #allocation0 [shape = 'u32[]', space=smem, size = 0x4, offset = 0x4, fixed_abs, tag = 'smem constant byte address 0x4 - core index']
  #allocation1 [shape = 'u32[144,128]{1,0:T(1,128)}', space=vmem, size = 0x12000, scoped, tag = 'internal scratch']
  #allocation2 [shape = 'f32[8,16,64]{2,1,0:T(8,128)}', space=vmem, size = 0x10000, scoped, tag = 'scratch operand']
  #allocation3 [shape = 'f32[8,16,64]{2,1,0:T(8,128)}', space=vmem, size = 0x10000, scoped, tag = 'scratch operand']
  #allocation4 [shape = 'f32[8,16,64]{2,1,0:T(8,128)}', space=vmem, size = 0x10000, scoped, tag = 'scratch operand']
  %s0 = inlined_call_operand.vmem [shape: f32[2,8,1024], index: 0, kind: input, shape index: {}]
  %s1 = inlined_call_operand.vmem [shape: f32[1024,32], index: 1, kind: input, shape index: {}]
  %s2 = inlined_call_operand.vmem [shape: f32[1,32], index: 2, kind: input, shape index: {}]
  %s3 = inlined_call_operand.vmem [shape: f32[2,1,32], index: 3, kind: input, shape index: {}]
  %s4 = inlined_call_operand.vmem [shape: f32[2,1,32], index: 4, kind: input, shape index: {}]
  %s5 = inlined_call_operand.vmem [shape: f32[2,32,64], index: 5, kind: input, shape index: {}]
  %s6 = inlined_call_operand.vmem [shape: f32[2,32,64], index: 6, kind: input, shape index: {}]
  %s7 = inlined_call_operand.vmem [shape: f32[2,4,64], index: 7, kind: input, shape index: {}]
  %s8 = inlined_call_operand.vmem [shape: f32[2,1,64], index: 8, kind: input, shape index: {}]
  %s9 = inlined_call_operand.vmem [shape: f32[2,64,16], index: 9, kind: input, shape index: {}]
  %s10 = inlined_call_operand.vmem [shape: f32[2,64,16], index: 10, kind: input, shape index: {}]
  %s11 = inlined_call_operand.vmem [shape: f32[2,64,64], index: 11, kind: input, shape index: {}]
  %s12 = inlined_call_operand.vmem [shape: f32[2,1,64], index: 12, kind: input, shape index: {}]
  %s13 = inlined_call_operand.vmem [shape: f32[2,16,64], index: 13, kind: input, shape index: {}]
  %s14 = inlined_call_operand.vmem [shape: f32[2,1,64], index: 14, kind: input, shape index: {}]
  %s15 = inlined_call_operand.vmem [shape: f32[2,64,32], index: 15, kind: input, shape index: {}]
  %s16 = inlined_call_operand.vmem [shape: f32[1,32], index: 16, kind: input, shape index: {}]
  %s17 = inlined_call_operand.vmem [shape: f32[1,32], index: 17, kind: input, shape index: {}]
  %s18 = inlined_call_operand.vmem [shape: f32[32,2], index: 18, kind: input, shape index: {}]
  %s19 = inlined_call_operand.vmem [shape: f32[1,2], index: 19, kind: input, shape index: {}]
  %s20 = inlined_call_operand.hbm [shape: f32[2,1,2], index: 20, kind: output, shape index: {}]
  %s21 = sld [smem:[#allocation0]]
  $region113: #{vision_mamba3d_forward.1} parent=0
    _
  %s23 = ssub.s32 1, %s21
  %s24 = scalar_select 0, %s23, %s21
  $region1: #{vision_mamba3d_forward.1} parent=0
    #allocation5 [shape = 'u8[1024]{0}', space=vmem, size = 0x400, scoped, tag = 'output window, operand 0']
    #allocation6 [shape = 's32[2]{0}', space=sflag, size = 0x8, scoped, tag = 'scoped memory for vision_mamba3d_forward.1']
    %25 = vsyncpa [#allocation6], 0
    %s26 = scalar_lea.sflag [#allocation6], 1
    %27 = vsyncpa %s26, 0
    loop: start=0, step=1, limit=4
    $region2: #{vision_mamba3d_forward.1} parent=1 // loop_pre_header
      _
    $region3: #{vision_mamba3d_forward.1} parent=1 // loop_header
      %s29 = sphi 0, %s33
      %p30 = scmp.ge.s32.totalorder %s29, 4
      %s39 = sphi 0, %s41
      %s42 = sphi 0, %s39
      %s43 = sphi 0, %s42
      %s59 = sphi 0, %s43
      %s63 = sphi 0, %s63
      %s65 = sphi 0, %s63
      %s66 = sphi 0, %s65
      %s80 = sphi 0, %s66
      %s84 = sphi 0, %s84
      %s86 = sphi 0, %s84
      %s87 = sphi 0, %s86
      %s101 = sphi 0, %s87
      %s105 = sphi 0, %s105
      %s107 = sphi 0, %s105
      %s108 = sphi 0, %s107
      %s122 = sphi 0, %s108
      %s126 = sphi 0, %s126
      %s128 = sphi 0, %s126
      %s129 = sphi 0, %s128
      %s143 = sphi 0, %s129
      %s147 = sphi 0, %s147
      %s149 = sphi 0, %s147
      %s150 = sphi 0, %s149
      %s164 = sphi 0, %s150
      %s168 = sphi 0, %s168
      %s170 = sphi 0, %s168
      %s171 = sphi 0, %s170
      %s185 = sphi 0, %s171
      %s189 = sphi 0, %s189
      %s191 = sphi 0, %s189
      %s192 = sphi 0, %s191
      %s206 = sphi 0, %s192
      %s210 = sphi 0, %s210
      %s212 = sphi 0, %s210
      %s213 = sphi 0, %s212
      %s227 = sphi 0, %s213
      %s231 = sphi 0, %s231
      %s233 = sphi 0, %s231
      %s234 = sphi 0, %s233
      %s248 = sphi 0, %s234
      %s252 = sphi 0, %s252
      %s254 = sphi 0, %s252
      %s255 = sphi 0, %s254
      %s269 = sphi 0, %s255
      %s273 = sphi 0, %s273
      %s275 = sphi 0, %s273
      %s276 = sphi 0, %s275
      %s290 = sphi 0, %s276
      %s294 = sphi 0, %s294
      %s296 = sphi 0, %s294
      %s297 = sphi 0, %s296
      %s311 = sphi 0, %s297
      %s315 = sphi 0, %s315
      %s317 = sphi 0, %s315
      %s318 = sphi 0, %s317
      %s332 = sphi 0, %s318
      %s336 = sphi 0, %s336
      %s338 = sphi 0, %s336
      %s339 = sphi 0, %s338
      %s353 = sphi 0, %s339
      %s357 = sphi 0, %s357
      %s359 = sphi 0, %s357
      %s360 = sphi 0, %s359
      %s374 = sphi 0, %s360
      %s378 = sphi 0, %s378
      %s380 = sphi 0, %s378
      %s381 = sphi 0, %s380
      %s395 = sphi 0, %s381
      %s399 = sphi 0, %s399
      %s401 = sphi 0, %s399
      %s402 = sphi 0, %s401
      %s416 = sphi 0, %s402
      %s420 = sphi 0, %s420
      %s422 = sphi 0, %s420
      %s423 = sphi 0, %s422
      %s437 = sphi 0, %s423
      %s441 = sphi 0, %s441
      %s443 = sphi 0, %s441
      %s444 = sphi 0, %s443
      %s458 = sphi 0, %s444
      %s464 = sphi 0, %s466
      %s467 = sphi 0, %s464
      %s468 = sphi 0, %s467
      %s484 = sphi 0, %s468
    $region4: #{vision_mamba3d_forward.1} parent=1 // loop_header_branch
      %32 = sbr.rel (%p30) target = $region8
    $region5: #{vision_mamba3d_forward.1} parent=1 // loop_body
      %s34 = ssub.s32 %s29, 1
      %s35 = ssub.s32 %s29, 2
      %s36 = sadd.s32 %s29, 1
      %s37 = ssub.s32 %s29, %s36
      %p38 = scmp.eq.s32.totalorder %s37, 0
      %s40 = sadd.s32 %s39, 1
      %s41 = scalar_select %p38, %s39, %s40
      %p44 = pneg %p38
      %p45 = scmp.eq.s32.totalorder %s29, 1
      %p46 = por %p44, %p45
      %p47 = scmp.ne.s32.totalorder %s39, %s42
      %p48 = scmp.eq.s32.totalorder %s29, 0
      %p49 = por %p47, %p48
      %p50 = scmp.ne.s32.totalorder %s39, %s42
      %p51 = scmp.eq.s32.totalorder %s34, 1
      %p52 = por %p50, %p51
      %p53 = scmp.ne.s32.totalorder %s42, %s43
      %p54 = scmp.eq.s32.totalorder %s34, 0
      %p55 = por %p53, %p54
      %p56 = scmp.ne.s32.totalorder %s42, %s43
      %p57 = scmp.eq.s32.totalorder %s35, 1
      %p58 = por %p56, %p57
      %p60 = scmp.ne.s32.totalorder %s43, %s59
      %p61 = scmp.eq.s32.totalorder %s35, 0
      %p62 = por %p60, %p61
      %s64 = sadd.s32 %s63, 1
      %p67 = scmp.eq.s32.totalorder %s29, 1
      %p68 = scmp.ne.s32.totalorder %s63, %s65
      %p69 = scmp.eq.s32.totalorder %s29, 0
      %p70 = por %p68, %p69
      %p71 = scmp.ne.s32.totalorder %s63, %s65
      %p72 = scmp.eq.s32.totalorder %s34, 1
      %p73 = por %p71, %p72
      %p74 = scmp.ne.s32.totalorder %s65, %s66
      %p75 = scmp.eq.s32.totalorder %s34, 0
      %p76 = por %p74, %p75
      %p77 = scmp.ne.s32.totalorder %s65, %s66
      %p78 = scmp.eq.s32.totalorder %s35, 1
      %p79 = por %p77, %p78
      %p81 = scmp.ne.s32.totalorder %s66, %s80
      %p82 = scmp.eq.s32.totalorder %s35, 0
      %p83 = por %p81, %p82
      %s85 = sadd.s32 %s84, 1
      %p88 = scmp.eq.s32.totalorder %s29, 1
      %p89 = scmp.ne.s32.totalorder %s84, %s86
      %p90 = scmp.eq.s32.totalorder %s29, 0
      %p91 = por %p89, %p90
      %p92 = scmp.ne.s32.totalorder %s84, %s86
      %p93 = scmp.eq.s32.totalorder %s34, 1
      %p94 = por %p92, %p93
      %p95 = scmp.ne.s32.totalorder %s86, %s87
      %p96 = scmp.eq.s32.totalorder %s34, 0
      %p97 = por %p95, %p96
      %p98 = scmp.ne.s32.totalorder %s86, %s87
      %p99 = scmp.eq.s32.totalorder %s35, 1
      %p100 = por %p98, %p99
      %p102 = scmp.ne.s32.totalorder %s87, %s101
      %p103 = scmp.eq.s32.totalorder %s35, 0
      %p104 = por %p102, %p103
      %s106 = sadd.s32 %s105, 1
      %p109 = scmp.eq.s32.totalorder %s29, 1
      %p110 = scmp.ne.s32.totalorder %s105, %s107
      %p111 = scmp.eq.s32.totalorder %s29, 0
      %p112 = por %p110, %p111
      %p113 = scmp.ne.s32.totalorder %s105, %s107
      %p114 = scmp.eq.s32.totalorder %s34, 1
      %p115 = por %p113, %p114
      %p116 = scmp.ne.s32.totalorder %s107, %s108
      %p117 = scmp.eq.s32.totalorder %s34, 0
      %p118 = por %p116, %p117
      %p119 = scmp.ne.s32.totalorder %s107, %s108
      %p120 = scmp.eq.s32.totalorder %s35, 1
      %p121 = por %p119, %p120
      %p123 = scmp.ne.s32.totalorder %s108, %s122
      %p124 = scmp.eq.s32.totalorder %s35, 0
      %p125 = por %p123, %p124
      %s127 = sadd.s32 %s126, 1
      %p130 = scmp.eq.s32.totalorder %s29, 1
      %p131 = scmp.ne.s32.totalorder %s126, %s128
      %p132 = scmp.eq.s32.totalorder %s29, 0
      %p133 = por %p131, %p132
      %p134 = scmp.ne.s32.totalorder %s126, %s128
      %p135 = scmp.eq.s32.totalorder %s34, 1
      %p136 = por %p134, %p135
      %p137 = scmp.ne.s32.totalorder %s128, %s129
      %p138 = scmp.eq.s32.totalorder %s34, 0
      %p139 = por %p137, %p138
      %p140 = scmp.ne.s32.totalorder %s128, %s129
      %p141 = scmp.eq.s32.totalorder %s35, 1
      %p142 = por %p140, %p141
      %p144 = scmp.ne.s32.totalorder %s129, %s143
      %p145 = scmp.eq.s32.totalorder %s35, 0
      %p146 = por %p144, %p145
      %s148 = sadd.s32 %s147, 1
      %p151 = scmp.eq.s32.totalorder %s29, 1
      %p152 = scmp.ne.s32.totalorder %s147, %s149
      %p153 = scmp.eq.s32.totalorder %s29, 0
      %p154 = por %p152, %p153
      %p155 = scmp.ne.s32.totalorder %s147, %s149
      %p156 = scmp.eq.s32.totalorder %s34, 1
      %p157 = por %p155, %p156
      %p158 = scmp.ne.s32.totalorder %s149, %s150
      %p159 = scmp.eq.s32.totalorder %s34, 0
      %p160 = por %p158, %p159
      %p161 = scmp.ne.s32.totalorder %s149, %s150
      %p162 = scmp.eq.s32.totalorder %s35, 1
      %p163 = por %p161, %p162
      %p165 = scmp.ne.s32.totalorder %s150, %s164
      %p166 = scmp.eq.s32.totalorder %s35, 0
      %p167 = por %p165, %p166
      %s169 = sadd.s32 %s168, 1
      %p172 = scmp.eq.s32.totalorder %s29, 1
      %p173 = scmp.ne.s32.totalorder %s168, %s170
      %p174 = scmp.eq.s32.totalorder %s29, 0
      %p175 = por %p173, %p174
      %p176 = scmp.ne.s32.totalorder %s168, %s170
      %p177 = scmp.eq.s32.totalorder %s34, 1
      %p178 = por %p176, %p177
      %p179 = scmp.ne.s32.totalorder %s170, %s171
      %p180 = scmp.eq.s32.totalorder %s34, 0
      %p181 = por %p179, %p180
      %p182 = scmp.ne.s32.totalorder %s170, %s171
      %p183 = scmp.eq.s32.totalorder %s35, 1
      %p184 = por %p182, %p183
      %p186 = scmp.ne.s32.totalorder %s171, %s185
      %p187 = scmp.eq.s32.totalorder %s35, 0
      %p188 = por %p186, %p187
      %s190 = sadd.s32 %s189, 1
      %p193 = scmp.eq.s32.totalorder %s29, 1
      %p194 = scmp.ne.s32.totalorder %s189, %s191
      %p195 = scmp.eq.s32.totalorder %s29, 0
      %p196 = por %p194, %p195
      %p197 = scmp.ne.s32.totalorder %s189, %s191
      %p198 = scmp.eq.s32.totalorder %s34, 1
      %p199 = por %p197, %p198
      %p200 = scmp.ne.s32.totalorder %s191, %s192
      %p201 = scmp.eq.s32.totalorder %s34, 0
      %p202 = por %p200, %p201
      %p203 = scmp.ne.s32.totalorder %s191, %s192
      %p204 = scmp.eq.s32.totalorder %s35, 1
      %p205 = por %p203, %p204
      %p207 = scmp.ne.s32.totalorder %s192, %s206
      %p208 = scmp.eq.s32.totalorder %s35, 0
      %p209 = por %p207, %p208
      %s211 = sadd.s32 %s210, 1
      %p214 = scmp.eq.s32.totalorder %s29, 1
      %p215 = scmp.ne.s32.totalorder %s210, %s212
      %p216 = scmp.eq.s32.totalorder %s29, 0
      %p217 = por %p215, %p216
      %p218 = scmp.ne.s32.totalorder %s210, %s212
      %p219 = scmp.eq.s32.totalorder %s34, 1
      %p220 = por %p218, %p219
      %p221 = scmp.ne.s32.totalorder %s212, %s213
      %p222 = scmp.eq.s32.totalorder %s34, 0
      %p223 = por %p221, %p222
      %p224 = scmp.ne.s32.totalorder %s212, %s213
      %p225 = scmp.eq.s32.totalorder %s35, 1
      %p226 = por %p224, %p225
      %p228 = scmp.ne.s32.totalorder %s213, %s227
      %p229 = scmp.eq.s32.totalorder %s35, 0
      %p230 = por %p228, %p229
      %s232 = sadd.s32 %s231, 1
      %p235 = scmp.eq.s32.totalorder %s29, 1
      %p236 = scmp.ne.s32.totalorder %s231, %s233
      %p237 = scmp.eq.s32.totalorder %s29, 0
      %p238 = por %p236, %p237
      %p239 = scmp.ne.s32.totalorder %s231, %s233
      %p240 = scmp.eq.s32.totalorder %s34, 1
      %p241 = por %p239, %p240
      %p242 = scmp.ne.s32.totalorder %s233, %s234
      %p243 = scmp.eq.s32.totalorder %s34, 0
      %p244 = por %p242, %p243
      %p245 = scmp.ne.s32.totalorder %s233, %s234
      %p246 = scmp.eq.s32.totalorder %s35, 1
      %p247 = por %p245, %p246
      %p249 = scmp.ne.s32.totalorder %s234, %s248
      %p250 = scmp.eq.s32.totalorder %s35, 0
      %p251 = por %p249, %p250
      %s253 = sadd.s32 %s252, 1
      %p256 = scmp.eq.s32.totalorder %s29, 1
      %p257 = scmp.ne.s32.totalorder %s252, %s254
      %p258 = scmp.eq.s32.totalorder %s29, 0
      %p259 = por %p257, %p258
      %p260 = scmp.ne.s32.totalorder %s252, %s254
      %p261 = scmp.eq.s32.totalorder %s34, 1
      %p262 = por %p260, %p261
      %p263 = scmp.ne.s32.totalorder %s254, %s255
      %p264 = scmp.eq.s32.totalorder %s34, 0
      %p265 = por %p263, %p264
      %p266 = scmp.ne.s32.totalorder %s254, %s255
      %p267 = scmp.eq.s32.totalorder %s35, 1
      %p268 = por %p266, %p267
      %p270 = scmp.ne.s32.totalorder %s255, %s269
      %p271 = scmp.eq.s32.totalorder %s35, 0
      %p272 = por %p270, %p271
      %s274 = sadd.s32 %s273, 1
      %p277 = scmp.eq.s32.totalorder %s29, 1
      %p278 = scmp.ne.s32.totalorder %s273, %s275
      %p279 = scmp.eq.s32.totalorder %s29, 0
      %p280 = por %p278, %p279
      %p281 = scmp.ne.s32.totalorder %s273, %s275
      %p282 = scmp.eq.s32.totalorder %s34, 1
      %p283 = por %p281, %p282
      %p284 = scmp.ne.s32.totalorder %s275, %s276
      %p285 = scmp.eq.s32.totalorder %s34, 0
      %p286 = por %p284, %p285
      %p287 = scmp.ne.s32.totalorder %s275, %s276
      %p288 = scmp.eq.s32.totalorder %s35, 1
      %p289 = por %p287, %p288
      %p291 = scmp.ne.s32.totalorder %s276, %s290
      %p292 = scmp.eq.s32.totalorder %s35, 0
      %p293 = por %p291, %p292
      %s295 = sadd.s32 %s294, 1
      %p298 = scmp.eq.s32.totalorder %s29, 1
      %p299 = scmp.ne.s32.totalorder %s294, %s296
      %p300 = scmp.eq.s32.totalorder %s29, 0
      %p301 = por %p299, %p300
      %p302 = scmp.ne.s32.totalorder %s294, %s296
      %p303 = scmp.eq.s32.totalorder %s34, 1
      %p304 = por %p302, %p303
      %p305 = scmp.ne.s32.totalorder %s296, %s297
      %p306 = scmp.eq.s32.totalorder %s34, 0
      %p307 = por %p305, %p306
      %p308 = scmp.ne.s32.totalorder %s296, %s297
      %p309 = scmp.eq.s32.totalorder %s35, 1
      %p310 = por %p308, %p309
      %p312 = scmp.ne.s32.totalorder %s297, %s311
      %p313 = scmp.eq.s32.totalorder %s35, 0
      %p314 = por %p312, %p313
      %s316 = sadd.s32 %s315, 1
      %p319 = scmp.eq.s32.totalorder %s29, 1
      %p320 = scmp.ne.s32.totalorder %s315, %s317
      %p321 = scmp.eq.s32.totalorder %s29, 0
      %p322 = por %p320, %p321
      %p323 = scmp.ne.s32.totalorder %s315, %s317
      %p324 = scmp.eq.s32.totalorder %s34, 1
      %p325 = por %p323, %p324
      %p326 = scmp.ne.s32.totalorder %s317, %s318
      %p327 = scmp.eq.s32.totalorder %s34, 0
      %p328 = por %p326, %p327
      %p329 = scmp.ne.s32.totalorder %s317, %s318
      %p330 = scmp.eq.s32.totalorder %s35, 1
      %p331 = por %p329, %p330
      %p333 = scmp.ne.s32.totalorder %s318, %s332
      %p334 = scmp.eq.s32.totalorder %s35, 0
      %p335 = por %p333, %p334
      %s337 = sadd.s32 %s336, 1
      %p340 = scmp.eq.s32.totalorder %s29, 1
      %p341 = scmp.ne.s32.totalorder %s336, %s338
      %p342 = scmp.eq.s32.totalorder %s29, 0
      %p343 = por %p341, %p342
      %p344 = scmp.ne.s32.totalorder %s336, %s338
      %p345 = scmp.eq.s32.totalorder %s34, 1
      %p346 = por %p344, %p345
      %p347 = scmp.ne.s32.totalorder %s338, %s339
      %p348 = scmp.eq.s32.totalorder %s34, 0
      %p349 = por %p347, %p348
      %p350 = scmp.ne.s32.totalorder %s338, %s339
      %p351 = scmp.eq.s32.totalorder %s35, 1
      %p352 = por %p350, %p351
      %p354 = scmp.ne.s32.totalorder %s339, %s353
      %p355 = scmp.eq.s32.totalorder %s35, 0
      %p356 = por %p354, %p355
      %s358 = sadd.s32 %s357, 1
      %p361 = scmp.eq.s32.totalorder %s29, 1
      %p362 = scmp.ne.s32.totalorder %s357, %s359
      %p363 = scmp.eq.s32.totalorder %s29, 0
      %p364 = por %p362, %p363
      %p365 = scmp.ne.s32.totalorder %s357, %s359
      %p366 = scmp.eq.s32.totalorder %s34, 1
      %p367 = por %p365, %p366
      %p368 = scmp.ne.s32.totalorder %s359, %s360
      %p369 = scmp.eq.s32.totalorder %s34, 0
      %p370 = por %p368, %p369
      %p371 = scmp.ne.s32.totalorder %s359, %s360
      %p372 = scmp.eq.s32.totalorder %s35, 1
      %p373 = por %p371, %p372
      %p375 = scmp.ne.s32.totalorder %s360, %s374
      %p376 = scmp.eq.s32.totalorder %s35, 0
      %p377 = por %p375, %p376
      %s379 = sadd.s32 %s378, 1
      %p382 = scmp.eq.s32.totalorder %s29, 1
      %p383 = scmp.ne.s32.totalorder %s378, %s380
      %p384 = scmp.eq.s32.totalorder %s29, 0
      %p385 = por %p383, %p384
      %p386 = scmp.ne.s32.totalorder %s378, %s380
      %p387 = scmp.eq.s32.totalorder %s34, 1
      %p388 = por %p386, %p387
      %p389 = scmp.ne.s32.totalorder %s380, %s381
      %p390 = scmp.eq.s32.totalorder %s34, 0
      %p391 = por %p389, %p390
      %p392 = scmp.ne.s32.totalorder %s380, %s381
      %p393 = scmp.eq.s32.totalorder %s35, 1
      %p394 = por %p392, %p393
      %p396 = scmp.ne.s32.totalorder %s381, %s395
      %p397 = scmp.eq.s32.totalorder %s35, 0
      %p398 = por %p396, %p397
      %s400 = sadd.s32 %s399, 1
      %p403 = scmp.eq.s32.totalorder %s29, 1
      %p404 = scmp.ne.s32.totalorder %s399, %s401
      %p405 = scmp.eq.s32.totalorder %s29, 0
      %p406 = por %p404, %p405
      %p407 = scmp.ne.s32.totalorder %s399, %s401
      %p408 = scmp.eq.s32.totalorder %s34, 1
      %p409 = por %p407, %p408
      %p410 = scmp.ne.s32.totalorder %s401, %s402
      %p411 = scmp.eq.s32.totalorder %s34, 0
      %p412 = por %p410, %p411
      %p413 = scmp.ne.s32.totalorder %s401, %s402
      %p414 = scmp.eq.s32.totalorder %s35, 1
      %p415 = por %p413, %p414
      %p417 = scmp.ne.s32.totalorder %s402, %s416
      %p418 = scmp.eq.s32.totalorder %s35, 0
      %p419 = por %p417, %p418
      %s421 = sadd.s32 %s420, 1
      %p424 = scmp.eq.s32.totalorder %s29, 1
      %p425 = scmp.ne.s32.totalorder %s420, %s422
      %p426 = scmp.eq.s32.totalorder %s29, 0
      %p427 = por %p425, %p426
      %p428 = scmp.ne.s32.totalorder %s420, %s422
      %p429 = scmp.eq.s32.totalorder %s34, 1
      %p430 = por %p428, %p429
      %p431 = scmp.ne.s32.totalorder %s422, %s423
      %p432 = scmp.eq.s32.totalorder %s34, 0
      %p433 = por %p431, %p432
      %p434 = scmp.ne.s32.totalorder %s422, %s423
      %p435 = scmp.eq.s32.totalorder %s35, 1
      %p436 = por %p434, %p435
      %p438 = scmp.ne.s32.totalorder %s423, %s437
      %p439 = scmp.eq.s32.totalorder %s35, 0
      %p440 = por %p438, %p439
      %s442 = sadd.s32 %s441, 1
      %p445 = scmp.eq.s32.totalorder %s29, 1
      %p446 = scmp.ne.s32.totalorder %s441, %s443
      %p447 = scmp.eq.s32.totalorder %s29, 0
      %p448 = por %p446, %p447
      %p449 = scmp.ne.s32.totalorder %s441, %s443
      %p450 = scmp.eq.s32.totalorder %s34, 1
      %p451 = por %p449, %p450
      %p452 = scmp.ne.s32.totalorder %s443, %s444
      %p453 = scmp.eq.s32.totalorder %s34, 0
      %p454 = por %p452, %p453
      %p455 = scmp.ne.s32.totalorder %s443, %s444
      %p456 = scmp.eq.s32.totalorder %s35, 1
      %p457 = por %p455, %p456
      %p459 = scmp.ne.s32.totalorder %s444, %s458
      %p460 = scmp.eq.s32.totalorder %s35, 0
      %p461 = por %p459, %p460
      %s462 = ssub.s32 %s29, %s36
      %p463 = scmp.eq.s32.totalorder %s462, 0
      %s465 = sadd.s32 %s464, 1
      %s466 = scalar_select %p463, %s464, %s465
      %p469 = pneg %p463
      %p470 = scmp.eq.s32.totalorder %s29, 1
      %p471 = por %p469, %p470
      %p472 = scmp.ne.s32.totalorder %s464, %s467
      %p473 = scmp.eq.s32.totalorder %s29, 0
      %p474 = por %p472, %p473
      %p475 = scmp.ne.s32.totalorder %s464, %s467
      %p476 = scmp.eq.s32.totalorder %s34, 1
      %p477 = por %p475, %p476
      %p478 = scmp.ne.s32.totalorder %s467, %s468
      %p479 = scmp.eq.s32.totalorder %s34, 0
      %p480 = por %p478, %p479
      %p481 = scmp.ne.s32.totalorder %s467, %s468
      %p482 = scmp.eq.s32.totalorder %s35, 1
      %p483 = por %p481, %p482
      %p485 = scmp.ne.s32.totalorder %s468, %s484
      %p486 = scmp.eq.s32.totalorder %s35, 0
      %p487 = por %p485, %p486
      %p488 = scmp.le.s32.totalorder 1, %s29
      %p489 = scmp.lt.s32.totalorder %s29, 3
      %p490 = pnand %p488, %p489
      %p491 = pneg %p490
      // Predicated region
      $region9: #{vision_mamba3d_forward.1} parent=5 // pred_check
        _
      $region10: #{vision_mamba3d_forward.1} parent=5 // pred_check_branch
        %493 = sbr.rel (%p490) target = $region12
      $region11: #{vision_mamba3d_forward.1} parent=5 // pred_region
        %s494 = ssub.s32 %s29, 1
        // Predicated region
        $region13: #{vision_mamba3d_forward.1} parent=11 // pred_check
          %p495 = pneg %p76
        $region14: #{vision_mamba3d_forward.1} parent=11 // pred_check_branch
          %497 = sbr.rel (%p495) target = $region16
        $region15: #{vision_mamba3d_forward.1} parent=11 // pred_region
          _
        $region16: #{vision_mamba3d_forward.1} parent=11 // pred_fallthru
          _
        // Predicated region
        $region17: #{vision_mamba3d_forward.1} parent=11 // pred_check
          %p498 = pneg %p97
        $region18: #{vision_mamba3d_forward.1} parent=11 // pred_check_branch
          %500 = sbr.rel (%p498) target = $region20
        $region19: #{vision_mamba3d_forward.1} parent=11 // pred_region
          _
        $region20: #{vision_mamba3d_forward.1} parent=11 // pred_fallthru
          _
        // Predicated region
        $region21: #{vision_mamba3d_forward.1} parent=11 // pred_check
          %p501 = pneg %p118
        $region22: #{vision_mamba3d_forward.1} parent=11 // pred_check_branch
          %503 = sbr.rel (%p501) target = $region24
        $region23: #{vision_mamba3d_forward.1} parent=11 // pred_region
          _
        $region24: #{vision_mamba3d_forward.1} parent=11 // pred_fallthru
          _
        // Predicated region
        $region25: #{vision_mamba3d_forward.1} parent=11 // pred_check
          %p504 = pneg %p139
        $region26: #{vision_mamba3d_forward.1} parent=11 // pred_check_branch
          %506 = sbr.rel (%p504) target = $region28
        $region27: #{vision_mamba3d_forward.1} parent=11 // pred_region
          _
        $region28: #{vision_mamba3d_forward.1} parent=11 // pred_fallthru
          _
        // Predicated region
        $region29: #{vision_mamba3d_forward.1} parent=11 // pred_check
          %p507 = pneg %p160
        $region30: #{vision_mamba3d_forward.1} parent=11 // pred_check_branch
          %509 = sbr.rel (%p507) target = $region32
        $region31: #{vision_mamba3d_forward.1} parent=11 // pred_region
          _
        $region32: #{vision_mamba3d_forward.1} parent=11 // pred_fallthru
          _
        // Predicated region
        $region33: #{vision_mamba3d_forward.1} parent=11 // pred_check
          %p510 = pneg %p181
        $region34: #{vision_mamba3d_forward.1} parent=11 // pred_check_branch
          %512 = sbr.rel (%p510) target = $region36
        $region35: #{vision_mamba3d_forward.1} parent=11 // pred_region
          _
        $region36: #{vision_mamba3d_forward.1} parent=11 // pred_fallthru
          _
        // Predicated region
        $region37: #{vision_mamba3d_forward.1} parent=11 // pred_check
          %p513 = pneg %p202
        $region38: #{vision_mamba3d_forward.1} parent=11 // pred_check_branch
          %515 = sbr.rel (%p513) target = $region40
        $region39: #{vision_mamba3d_forward.1} parent=11 // pred_region
          _
        $region40: #{vision_mamba3d_forward.1} parent=11 // pred_fallthru
          _
        // Predicated region
        $region41: #{vision_mamba3d_forward.1} parent=11 // pred_check
          %p516 = pneg %p223
        $region42: #{vision_mamba3d_forward.1} parent=11 // pred_check_branch
          %518 = sbr.rel (%p516) target = $region44
        $region43: #{vision_mamba3d_forward.1} parent=11 // pred_region
          _
        $region44: #{vision_mamba3d_forward.1} parent=11 // pred_fallthru
          _
        // Predicated region
        $region45: #{vision_mamba3d_forward.1} parent=11 // pred_check
          %p519 = pneg %p244
        $region46: #{vision_mamba3d_forward.1} parent=11 // pred_check_branch
          %521 = sbr.rel (%p519) target = $region48
        $region47: #{vision_mamba3d_forward.1} parent=11 // pred_region
          _
        $region48: #{vision_mamba3d_forward.1} parent=11 // pred_fallthru
          _
        // Predicated region
        $region49: #{vision_mamba3d_forward.1} parent=11 // pred_check
          %p522 = pneg %p265
        $region50: #{vision_mamba3d_forward.1} parent=11 // pred_check_branch
          %524 = sbr.rel (%p522) target = $region52
        $region51: #{vision_mamba3d_forward.1} parent=11 // pred_region
          _
        $region52: #{vision_mamba3d_forward.1} parent=11 // pred_fallthru
          _
        // Predicated region
        $region53: #{vision_mamba3d_forward.1} parent=11 // pred_check
          %p525 = pneg %p286
        $region54: #{vision_mamba3d_forward.1} parent=11 // pred_check_branch
          %527 = sbr.rel (%p525) target = $region56
        $region55: #{vision_mamba3d_forward.1} parent=11 // pred_region
          _
        $region56: #{vision_mamba3d_forward.1} parent=11 // pred_fallthru
          _
        // Predicated region
        $region57: #{vision_mamba3d_forward.1} parent=11 // pred_check
          %p528 = pneg %p307
        $region58: #{vision_mamba3d_forward.1} parent=11 // pred_check_branch
          %530 = sbr.rel (%p528) target = $region60
        $region59: #{vision_mamba3d_forward.1} parent=11 // pred_region
          _
        $region60: #{vision_mamba3d_forward.1} parent=11 // pred_fallthru
          _
        // Predicated region
        $region61: #{vision_mamba3d_forward.1} parent=11 // pred_check
          %p531 = pneg %p328
        $region62: #{vision_mamba3d_forward.1} parent=11 // pred_check_branch
          %533 = sbr.rel (%p531) target = $region64
        $region63: #{vision_mamba3d_forward.1} parent=11 // pred_region
          _
        $region64: #{vision_mamba3d_forward.1} parent=11 // pred_fallthru
          _
        // Predicated region
        $region65: #{vision_mamba3d_forward.1} parent=11 // pred_check
          %p534 = pneg %p349
        $region66: #{vision_mamba3d_forward.1} parent=11 // pred_check_branch
          %536 = sbr.rel (%p534) target = $region68
        $region67: #{vision_mamba3d_forward.1} parent=11 // pred_region
          _
        $region68: #{vision_mamba3d_forward.1} parent=11 // pred_fallthru
          _
        // Predicated region
        $region69: #{vision_mamba3d_forward.1} parent=11 // pred_check
          %p537 = pneg %p370
        $region70: #{vision_mamba3d_forward.1} parent=11 // pred_check_branch
          %539 = sbr.rel (%p537) target = $region72
        $region71: #{vision_mamba3d_forward.1} parent=11 // pred_region
          _
        $region72: #{vision_mamba3d_forward.1} parent=11 // pred_fallthru
          _
        // Predicated region
        $region73: #{vision_mamba3d_forward.1} parent=11 // pred_check
          %p540 = pneg %p391
        $region74: #{vision_mamba3d_forward.1} parent=11 // pred_check_branch
          %542 = sbr.rel (%p540) target = $region76
        $region75: #{vision_mamba3d_forward.1} parent=11 // pred_region
          _
        $region76: #{vision_mamba3d_forward.1} parent=11 // pred_fallthru
          _
        // Predicated region
        $region77: #{vision_mamba3d_forward.1} parent=11 // pred_check
          %p543 = pneg %p412
        $region78: #{vision_mamba3d_forward.1} parent=11 // pred_check_branch
          %545 = sbr.rel (%p543) target = $region80
        $region79: #{vision_mamba3d_forward.1} parent=11 // pred_region
          _
        $region80: #{vision_mamba3d_forward.1} parent=11 // pred_fallthru
          _
        // Predicated region
        $region81: #{vision_mamba3d_forward.1} parent=11 // pred_check
          %p546 = pneg %p433
        $region82: #{vision_mamba3d_forward.1} parent=11 // pred_check_branch
          %548 = sbr.rel (%p546) target = $region84
        $region83: #{vision_mamba3d_forward.1} parent=11 // pred_region
          _
        $region84: #{vision_mamba3d_forward.1} parent=11 // pred_fallthru
          _
        // Predicated region
        $region85: #{vision_mamba3d_forward.1} parent=11 // pred_check
          %p549 = pneg %p454
        $region86: #{vision_mamba3d_forward.1} parent=11 // pred_check_branch
          %551 = sbr.rel (%p549) target = $region88
        $region87: #{vision_mamba3d_forward.1} parent=11 // pred_region
          _
        $region88: #{vision_mamba3d_forward.1} parent=11 // pred_fallthru
          _
      $region12: #{vision_mamba3d_forward.1} parent=5 // pred_fallthru
        _
      %p552 = scmp.lt.s32.totalorder %s29, 2
      // Predicated region
      $region89: #{vision_mamba3d_forward.1} parent=5 // pred_check
        %p553 = pneg %p552
      $region90: #{vision_mamba3d_forward.1} parent=5 // pred_check_branch
        %555 = sbr.rel (%p553) target = $region92
      $region91: #{vision_mamba3d_forward.1} parent=5 // pred_region
        // Predicated region
        $region93: #{vision_mamba3d_forward.1} parent=91 // pred_check
          %p556 = pneg %p49
        $region94: #{vision_mamba3d_forward.1} parent=91 // pred_check_branch
          %558 = sbr.rel (%p556) target = $region96
        $region95: #{vision_mamba3d_forward.1} parent=91 // pred_region
          %p559 = scmp.lt.s32.totalorder %s29, 1
          %s560 = scalar_select %p559, %s29, 1
          %s561 = smul.addr %s560, 8
          %s562 = smul.addr %s561, 8
          %s563 = scalar_lea.vmem %s0, %s562
        $region96: #{vision_mamba3d_forward.1} parent=91 // pred_fallthru
          _
      $region92: #{vision_mamba3d_forward.1} parent=5 // pred_fallthru
        _
      %p564 = scmp.le.s32.totalorder 1, %s29
      %p565 = scmp.lt.s32.totalorder %s29, 3
      %p566 = pnand %p564, %p565
      %p567 = pneg %p566
      // Predicated region
      $region97: #{vision_mamba3d_forward.1} parent=5 // pred_check
        _
      $region98: #{vision_mamba3d_forward.1} parent=5 // pred_check_branch
        %569 = sbr.rel (%p566) target = $region100
      $region99: #{vision_mamba3d_forward.1} parent=5 // pred_region
        %s570 = ssub.s32 %s29, 1
        %p571 = scmp.lt.s32.totalorder %s34, 1
        %s572 = scalar_select %p571, %s34, 1
        %s573 = smul.addr %s572, 8
        %s574 = smul.addr %s573, 8
        %s575 = scalar_lea.vmem %s0, %s574
        %p576 = pneg %p55
        %p577 = pneg %p52
        %p578 = pneg %p76
        %p579 = pneg %p73
        %p580 = pneg %p97
        %p581 = pneg %p94
        %p582 = pneg %p118
        %p583 = pneg %p115
        %p584 = pneg %p139
        %p585 = pneg %p136
        %p586 = pneg %p160
        %p587 = pneg %p157
        %p588 = pneg %p181
        %p589 = pneg %p178
        %p590 = pneg %p202
        %p591 = pneg %p199
        %p592 = pneg %p223
        %p593 = pneg %p220
        %p594 = pneg %p244
        %p595 = pneg %p241
        %p596 = pneg %p265
        %p597 = pneg %p262
        %p598 = pneg %p286
        %p599 = pneg %p283
        %p600 = pneg %p307
        %p601 = pneg %p304
        %p602 = pneg %p328
        %p603 = pneg %p325
        %p604 = pneg %p349
        %p605 = pneg %p346
        %p606 = pneg %p370
        %p607 = pneg %p367
        %p608 = pneg %p391
        %p609 = pneg %p388
        %p610 = pneg %p412
        %p611 = pneg %p409
        %p612 = pneg %p433
        %p613 = pneg %p430
        %p614 = pneg %p454
        %p615 = pneg %p451
        %p616 = pneg %p480
        %p617 = pneg %p477
        %s618 = sand.u32 %s467, 1
        %s619 = scalar_lea.sflag [#allocation6], %s618
        %s620 = sand.u32 %s467, 1
        %s621 = scalar_lea.vmem [#allocation5], %s620
        %p622 = scmp.lt.s32.totalorder %s34, 1
        %s623 = scalar_select %p622, %s34, 1
        %s624 = smul.addr %s623, 8
        %s625 = smul.addr %s624, 8
        %s626 = scalar_lea.vmem %s0, %s625
        %v627 = vld [vmem:[%s626] sm:$0xff]
        %v628 = vld [vmem:[%s626 + $0x8] sm:$0xff]
        %v629 = vld [vmem:[%s626 + $0x10] sm:$0xff]
        %v630 = vld [vmem:[%s626 + $0x18] sm:$0xff]
        %v631 = vld [vmem:[%s626 + $0x20] sm:$0xff]
        %v632 = vld [vmem:[%s626 + $0x28] sm:$0xff]
        %v633 = vld [vmem:[%s626 + $0x30] sm:$0xff]
        %v634 = vld [vmem:[%s626 + $0x38] sm:$0xff]
        %v635 = vld [vmem:[%s1] sm:$0xff]
        %v636 = vld [vmem:[%s1 + $0x8] sm:$0xff]
        %v637 = vld [vmem:[%s1 + $0x10] sm:$0xff]
        %v638 = vld [vmem:[%s1 + $0x18] sm:$0xff]
        %v639 = vld [vmem:[%s1 + $0x20] sm:$0xff]
        %v640 = vld [vmem:[%s1 + $0x28] sm:$0xff]
        %v641 = vld [vmem:[%s1 + $0x30] sm:$0xff]
        %v642 = vld [vmem:[%s1 + $0x38] sm:$0xff]
        %v643 = vld [vmem:[%s1 + $0x40] sm:$0xff]
        %v644 = vld [vmem:[%s1 + $0x48] sm:$0xff]
        %v645 = vld [vmem:[%s1 + $0x50] sm:$0xff]
        %v646 = vld [vmem:[%s1 + $0x58] sm:$0xff]
        %v647 = vld [vmem:[%s1 + $0x60] sm:$0xff]
        %v648 = vld [vmem:[%s1 + $0x68] sm:$0xff]
        %v649 = vld [vmem:[%s1 + $0x70] sm:$0xff]
        %v650 = vld [vmem:[%s1 + $0x78] sm:$0xff]
        %v651 = vld [vmem:[%s1 + $0x80] sm:$0xff]
        %v652 = vld [vmem:[%s1 + $0x88] sm:$0xff]
        %v653 = vld [vmem:[%s1 + $0x90] sm:$0xff]
        %v654 = vld [vmem:[%s1 + $0x98] sm:$0xff]
        %v655 = vld [vmem:[%s1 + $0xa0] sm:$0xff]
        %v656 = vld [vmem:[%s1 + $0xa8] sm:$0xff]
        %v657 = vld [vmem:[%s1 + $0xb0] sm:$0xff]
        %v658 = vld [vmem:[%s1 + $0xb8] sm:$0xff]
        %v659 = vld [vmem:[%s1 + $0xc0] sm:$0xff]
        %v660 = vld [vmem:[%s1 + $0xc8] sm:$0xff]
        %v661 = vld [vmem:[%s1 + $0xd0] sm:$0xff]
        %v662 = vld [vmem:[%s1 + $0xd8] sm:$0xff]
        %v663 = vld [vmem:[%s1 + $0xe0] sm:$0xff]
        %v664 = vld [vmem:[%s1 + $0xe8] sm:$0xff]
        %v665 = vld [vmem:[%s1 + $0xf0] sm:$0xff]
        %v666 = vld [vmem:[%s1 + $0xf8] sm:$0xff]
        %v667 = vld [vmem:[%s1 + $0x100] sm:$0xff]
        %v668 = vld [vmem:[%s1 + $0x108] sm:$0xff]
        %v669 = vld [vmem:[%s1 + $0x110] sm:$0xff]
        %v670 = vld [vmem:[%s1 + $0x118] sm:$0xff]
        %v671 = vld [vmem:[%s1 + $0x120] sm:$0xff]
        %v672 = vld [vmem:[%s1 + $0x128] sm:$0xff]
        %v673 = vld [vmem:[%s1 + $0x130] sm:$0xff]
        %v674 = vld [vmem:[%s1 + $0x138] sm:$0xff]
        %v675 = vld [vmem:[%s1 + $0x140] sm:$0xff]
        %v676 = vld [vmem:[%s1 + $0x148] sm:$0xff]
        %v677 = vld [vmem:[%s1 + $0x150] sm:$0xff]
        %v678 = vld [vmem:[%s1 + $0x158] sm:$0xff]
        %v679 = vld [vmem:[%s1 + $0x160] sm:$0xff]
        %v680 = vld [vmem:[%s1 + $0x168] sm:$0xff]
        %v681 = vld [vmem:[%s1 + $0x170] sm:$0xff]
        %v682 = vld [vmem:[%s1 + $0x178] sm:$0xff]
        %v683 = vld [vmem:[%s1 + $0x180] sm:$0xff]
        %v684 = vld [vmem:[%s1 + $0x188] sm:$0xff]
        %v685 = vld [vmem:[%s1 + $0x190] sm:$0xff]
        %v686 = vld [vmem:[%s1 + $0x198] sm:$0xff]
        %v687 = vld [vmem:[%s1 + $0x1a0] sm:$0xff]
        %v688 = vld [vmem:[%s1 + $0x1a8] sm:$0xff]
        %v689 = vld [vmem:[%s1 + $0x1b0] sm:$0xff]
        %v690 = vld [vmem:[%s1 + $0x1b8] sm:$0xff]
        %v691 = vld [vmem:[%s1 + $0x1c0] sm:$0xff]
        %v692 = vld [vmem:[%s1 + $0x1c8] sm:$0xff]
        %v693 = vld [vmem:[%s1 + $0x1d0] sm:$0xff]
        %v694 = vld [vmem:[%s1 + $0x1d8] sm:$0xff]
        %v695 = vld [vmem:[%s1 + $0x1e0] sm:$0xff]
        %v696 = vld [vmem:[%s1 + $0x1e8] sm:$0xff]
        %v697 = vld [vmem:[%s1 + $0x1f0] sm:$0xff]
        %v698 = vld [vmem:[%s1 + $0x1f8] sm:$0xff]
        %v699 = vld [vmem:[%s1 + $0x200] sm:$0xff]
        %v700 = vld [vmem:[%s1 + $0x208] sm:$0xff]
        %v701 = vld [vmem:[%s1 + $0x210] sm:$0xff]
        %v702 = vld [vmem:[%s1 + $0x218] sm:$0xff]
        %v703 = vld [vmem:[%s1 + $0x220] sm:$0xff]
        %v704 = vld [vmem:[%s1 + $0x228] sm:$0xff]
        %v705 = vld [vmem:[%s1 + $0x230] sm:$0xff]
        %v706 = vld [vmem:[%s1 + $0x238] sm:$0xff]
        %v707 = vld [vmem:[%s1 + $0x240] sm:$0xff]
        %v708 = vld [vmem:[%s1 + $0x248] sm:$0xff]
        %v709 = vld [vmem:[%s1 + $0x250] sm:$0xff]
        %v710 = vld [vmem:[%s1 + $0x258] sm:$0xff]
        %v711 = vld [vmem:[%s1 + $0x260] sm:$0xff]
        %v712 = vld [vmem:[%s1 + $0x268] sm:$0xff]
        %v713 = vld [vmem:[%s1 + $0x270] sm:$0xff]
        %v714 = vld [vmem:[%s1 + $0x278] sm:$0xff]
        %v715 = vld [vmem:[%s1 + $0x280] sm:$0xff]
        %v716 = vld [vmem:[%s1 + $0x288] sm:$0xff]
        %v717 = vld [vmem:[%s1 + $0x290] sm:$0xff]
        %v718 = vld [vmem:[%s1 + $0x298] sm:$0xff]
        %v719 = vld [vmem:[%s1 + $0x2a0] sm:$0xff]
        %v720 = vld [vmem:[%s1 + $0x2a8] sm:$0xff]
        %v721 = vld [vmem:[%s1 + $0x2b0] sm:$0xff]
        %v722 = vld [vmem:[%s1 + $0x2b8] sm:$0xff]
        %v723 = vld [vmem:[%s1 + $0x2c0] sm:$0xff]
        %v724 = vld [vmem:[%s1 + $0x2c8] sm:$0xff]
        %v725 = vld [vmem:[%s1 + $0x2d0] sm:$0xff]
        %v726 = vld [vmem:[%s1 + $0x2d8] sm:$0xff]
        %v727 = vld [vmem:[%s1 + $0x2e0] sm:$0xff]
        %v728 = vld [vmem:[%s1 + $0x2e8] sm:$0xff]
        %v729 = vld [vmem:[%s1 + $0x2f0] sm:$0xff]
        %v730 = vld [vmem:[%s1 + $0x2f8] sm:$0xff]
        %v731 = vld [vmem:[%s1 + $0x300] sm:$0xff]
        %v732 = vld [vmem:[%s1 + $0x308] sm:$0xff]
        %v733 = vld [vmem:[%s1 + $0x310] sm:$0xff]
        %v734 = vld [vmem:[%s1 + $0x318] sm:$0xff]
        %v735 = vld [vmem:[%s1 + $0x320] sm:$0xff]
        %v736 = vld [vmem:[%s1 + $0x328] sm:$0xff]
        %v737 = vld [vmem:[%s1 + $0x330] sm:$0xff]
        %v738 = vld [vmem:[%s1 + $0x338] sm:$0xff]
        %v739 = vld [vmem:[%s1 + $0x340] sm:$0xff]
        %v740 = vld [vmem:[%s1 + $0x348] sm:$0xff]
        %v741 = vld [vmem:[%s1 + $0x350] sm:$0xff]
        %v742 = vld [vmem:[%s1 + $0x358] sm:$0xff]
        %v743 = vld [vmem:[%s1 + $0x360] sm:$0xff]
        %v744 = vld [vmem:[%s1 + $0x368] sm:$0xff]
        %v745 = vld [vmem:[%s1 + $0x370] sm:$0xff]
        %v746 = vld [vmem:[%s1 + $0x378] sm:$0xff]
        %v747 = vld [vmem:[%s1 + $0x380] sm:$0xff]
        %v748 = vld [vmem:[%s1 + $0x388] sm:$0xff]
        %v749 = vld [vmem:[%s1 + $0x390] sm:$0xff]
        %v750 = vld [vmem:[%s1 + $0x398] sm:$0xff]
        %v751 = vld [vmem:[%s1 + $0x3a0] sm:$0xff]
        %v752 = vld [vmem:[%s1 + $0x3a8] sm:$0xff]
        %v753 = vld [vmem:[%s1 + $0x3b0] sm:$0xff]
        %v754 = vld [vmem:[%s1 + $0x3b8] sm:$0xff]
        %v755 = vld [vmem:[%s1 + $0x3c0] sm:$0xff]
        %v756 = vld [vmem:[%s1 + $0x3c8] sm:$0xff]
        %v757 = vld [vmem:[%s1 + $0x3d0] sm:$0xff]
        %v758 = vld [vmem:[%s1 + $0x3d8] sm:$0xff]
        %v759 = vld [vmem:[%s1 + $0x3e0] sm:$0xff]
        %v760 = vld [vmem:[%s1 + $0x3e8] sm:$0xff]
        %v761 = vld [vmem:[%s1 + $0x3f0] sm:$0xff]
        %v762 = vld [vmem:[%s1 + $0x3f8] sm:$0xff]
        %v763 = vld [vmem:[%s2] sm:$0x1]
        %v765 = vlaneseq
        %v766 = vshrl.u32 %v765, 7
        %v767 = vsub.s32 0, %v766
        %v768 = vrot.slane %v763, %v767
        %770 = vmatprep.subr.mxu0 0.0
        %771 = vmatpush1.msra.mxu0 %v635
        %772 = vmatprep.subr.mxu0 0.0
        %773 = vmatpush1.msra.mxu0 %v636
        %774 = vmatprep.subr.mxu0 0.0
        %775 = vmatpush1.msra.mxu0 %v637
        %776 = vmatprep.subr.mxu0 0.0
        %777 = vmatpush1.msra.mxu0 %v638
        %778 = vmatprep.subr.mxu0 0.0
        %779 = vmatpush1.msra.mxu0 %v639
        %780 = vmatprep.subr.mxu0 0.0
        %781 = vmatpush1.msra.mxu0 %v640
        %782 = vmatprep.subr.mxu0 0.0
        %783 = vmatpush1.msra.mxu0 %v641
        %784 = vmatprep.subr.mxu0 0.0
        %785 = vmatpush1.msra.mxu0 %v642
        %786 = vmatprep.subr.mxu0 0.0
        %787 = vmatpush1.msra.mxu0 %v643
        %788 = vmatprep.subr.mxu0 0.0
        %789 = vmatpush1.msra.mxu0 %v644
        %790 = vmatprep.subr.mxu0 0.0
        %791 = vmatpush1.msra.mxu0 %v645
        %792 = vmatprep.subr.mxu0 0.0
        %793 = vmatpush1.msra.mxu0 %v646
        %794 = vmatprep.subr.mxu0 0.0
        %795 = vmatpush1.msra.mxu0 %v647
        %796 = vmatprep.subr.mxu0 0.0
        %797 = vmatpush1.msra.mxu0 %v648
        %798 = vmatprep.subr.mxu0 0.0
        %799 = vmatpush1.msra.mxu0 %v649
        %800 = vmatprep.subr.mxu0 0.0
        %801 = vmatpush1.msra.mxu0 %v650
        %802 = vmatprep.subr.mxu0 0.0
        %803 = vmatpush1.msra.mxu0 %v651
        %804 = vmatprep.subr.mxu0 0.0
        %805 = vmatpush1.msra.mxu0 %v652
        %806 = vmatprep.subr.mxu0 0.0
        %807 = vmatpush1.msra.mxu0 %v653
        %808 = vmatprep.subr.mxu0 0.0
        %809 = vmatpush1.msra.mxu0 %v654
        %810 = vmatprep.subr.mxu0 0.0
        %811 = vmatpush1.msra.mxu0 %v655
        %812 = vmatprep.subr.mxu0 0.0
        %813 = vmatpush1.msra.mxu0 %v656
        %814 = vmatprep.subr.mxu0 0.0
        %815 = vmatpush1.msra.mxu0 %v657
        %816 = vmatprep.subr.mxu0 0.0
        %817 = vmatpush1.msra.mxu0 %v658
        %818 = vmatprep.subr.mxu0 0.0
        %819 = vmatpush1.msra.mxu0 %v659
        %820 = vmatprep.subr.mxu0 0.0
        %821 = vmatpush1.msra.mxu0 %v660
        %822 = vmatprep.subr.mxu0 0.0
        %823 = vmatpush1.msra.mxu0 %v661
        %824 = vmatprep.subr.mxu0 0.0
        %825 = vmatpush1.msra.mxu0 %v662
        %826 = vmatprep.subr.mxu0 0.0
        %827 = vmatpush1.msra.mxu0 %v663
        %828 = vmatprep.subr.mxu0 0.0
        %829 = vmatpush1.msra.mxu0 %v664
        %830 = vmatprep.subr.mxu0 0.0
        %831 = vmatpush1.msra.mxu0 %v665
        %832 = vmatprep.subr.mxu0 0.0
        %833 = vmatpush1.msra.mxu0 %v666
        %834 = vmatprep.mubr.f32.mxu0 %v628
        %835 = vmatmul.mubr.f32.gmra.mrb[0].mxu0 %v627
        %v836 = vpop.f32.mrb[0].mxu0
        %v837 = vadd.f32 %v768, %v836
        %v838 = vpop.f32.mrb[0].mxu0
        %839 = vdwg.mxu0
        %840 = vmatprep.subr.mxu0 0.0
        %841 = vmatpush1.msra.mxu0 %v667
        %842 = vmatprep.subr.mxu0 0.0
        %843 = vmatpush1.msra.mxu0 %v668
        %844 = vmatprep.subr.mxu0 0.0
        %845 = vmatpush1.msra.mxu0 %v669
        %846 = vmatprep.subr.mxu0 0.0
        %847 = vmatpush1.msra.mxu0 %v670
        %848 = vmatprep.subr.mxu0 0.0
        %849 = vmatpush1.msra.mxu0 %v671
        %850 = vmatprep.subr.mxu0 0.0
        %851 = vmatpush1.msra.mxu0 %v672
        %852 = vmatprep.subr.mxu0 0.0
        %853 = vmatpush1.msra.mxu0 %v673
        %854 = vmatprep.subr.mxu0 0.0
        %855 = vmatpush1.msra.mxu0 %v674
        %856 = vmatprep.subr.mxu0 0.0
        %857 = vmatpush1.msra.mxu0 %v675
        %858 = vmatprep.subr.mxu0 0.0
        %859 = vmatpush1.msra.mxu0 %v676
        %860 = vmatprep.subr.mxu0 0.0
        %861 = vmatpush1.msra.mxu0 %v677
        %862 = vmatprep.subr.mxu0 0.0
        %863 = vmatpush1.msra.mxu0 %v678
        %864 = vmatprep.subr.mxu0 0.0
        %865 = vmatpush1.msra.mxu0 %v679
        %866 = vmatprep.subr.mxu0 0.0
        %867 = vmatpush1.msra.mxu0 %v680
        %868 = vmatprep.subr.mxu0 0.0
        %869 = vmatpush1.msra.mxu0 %v681
        %870 = vmatprep.subr.mxu0 0.0
        %871 = vmatpush1.msra.mxu0 %v682
        %872 = vmatprep.subr.mxu0 0.0
        %873 = vmatpush1.msra.mxu0 %v683
        %874 = vmatprep.subr.mxu0 0.0
        %875 = vmatpush1.msra.mxu0 %v684
        %876 = vmatprep.subr.mxu0 0.0
        %877 = vmatpush1.msra.mxu0 %v685
        %878 = vmatprep.subr.mxu0 0.0
        %879 = vmatpush1.msra.mxu0 %v686
        %880 = vmatprep.subr.mxu0 0.0
        %881 = vmatpush1.msra.mxu0 %v687
        %882 = vmatprep.subr.mxu0 0.0
        %883 = vmatpush1.msra.mxu0 %v688
        %884 = vmatprep.subr.mxu0 0.0
        %885 = vmatpush1.msra.mxu0 %v689
        %886 = vmatprep.subr.mxu0 0.0
        %887 = vmatpush1.msra.mxu0 %v690
        %888 = vmatprep.subr.mxu0 0.0
        %889 = vmatpush1.msra.mxu0 %v691
        %890 = vmatprep.subr.mxu0 0.0
        %891 = vmatpush1.msra.mxu0 %v692
        %892 = vmatprep.subr.mxu0 0.0
        %893 = vmatpush1.msra.mxu0 %v693
        %894 = vmatprep.subr.mxu0 0.0
        %895 = vmatpush1.msra.mxu0 %v694
        %896 = vmatprep.subr.mxu0 0.0
        %897 = vmatpush1.msra.mxu0 %v695
        %898 = vmatprep.subr.mxu0 0.0
        %899 = vmatpush1.msra.mxu0 %v696
        %900 = vmatprep.subr.mxu0 0.0
        %901 = vmatpush1.msra.mxu0 %v697
        %902 = vmatprep.subr.mxu0 0.0
        %903 = vmatpush1.msra.mxu0 %v698
        %904 = vmatprep.mubr.f32.mxu0 %v630
        %905 = vmatmul.mubr.f32.gmra.mrb[0].mxu0 %v629
        %v906 = vpop.f32.mrb[0].mxu0
        %v907 = vadd.f32 %v837, %v906
        %v908 = vpop.f32.mrb[0].mxu0
        %909 = vdwg.mxu0
        %910 = vmatprep.subr.mxu0 0.0
        %911 = vmatpush1.msra.mxu0 %v699
        %912 = vmatprep.subr.mxu0 0.0
        %913 = vmatpush1.msra.mxu0 %v700
        %914 = vmatprep.subr.mxu0 0.0
        %915 = vmatpush1.msra.mxu0 %v701
        %916 = vmatprep.subr.mxu0 0.0
        %917 = vmatpush1.msra.mxu0 %v702
        %918 = vmatprep.subr.mxu0 0.0
        %919 = vmatpush1.msra.mxu0 %v703
        %920 = vmatprep.subr.mxu0 0.0
        %921 = vmatpush1.msra.mxu0 %v704
        %922 = vmatprep.subr.mxu0 0.0
        %923 = vmatpush1.msra.mxu0 %v705
        %924 = vmatprep.subr.mxu0 0.0
        %925 = vmatpush1.msra.mxu0 %v706
        %926 = vmatprep.subr.mxu0 0.0
        %927 = vmatpush1.msra.mxu0 %v707
        %928 = vmatprep.subr.mxu0 0.0
        %929 = vmatpush1.msra.mxu0 %v708
        %930 = vmatprep.subr.mxu0 0.0
        %931 = vmatpush1.msra.mxu0 %v709
        %932 = vmatprep.subr.mxu0 0.0
        %933 = vmatpush1.msra.mxu0 %v710
        %934 = vmatprep.subr.mxu0 0.0
        %935 = vmatpush1.msra.mxu0 %v711
        %936 = vmatprep.subr.mxu0 0.0
        %937 = vmatpush1.msra.mxu0 %v712
        %938 = vmatprep.subr.mxu0 0.0
        %939 = vmatpush1.msra.mxu0 %v713
        %940 = vmatprep.subr.mxu0 0.0
        %941 = vmatpush1.msra.mxu0 %v714
        %942 = vmatprep.subr.mxu0 0.0
        %943 = vmatpush1.msra.mxu0 %v715
        %944 = vmatprep.subr.mxu0 0.0
        %945 = vmatpush1.msra.mxu0 %v716
        %946 = vmatprep.subr.mxu0 0.0
        %947 = vmatpush1.msra.mxu0 %v717
        %948 = vmatprep.subr.mxu0 0.0
        %949 = vmatpush1.msra.mxu0 %v718
        %950 = vmatprep.subr.mxu0 0.0
        %951 = vmatpush1.msra.mxu0 %v719
        %952 = vmatprep.subr.mxu0 0.0
        %953 = vmatpush1.msra.mxu0 %v720
        %954 = vmatprep.subr.mxu0 0.0
        %955 = vmatpush1.msra.mxu0 %v721
        %956 = vmatprep.subr.mxu0 0.0
        %957 = vmatpush1.msra.mxu0 %v722
        %958 = vmatprep.subr.mxu0 0.0
        %959 = vmatpush1.msra.mxu0 %v723
        %960 = vmatprep.subr.mxu0 0.0
        %961 = vmatpush1.msra.mxu0 %v724
        %962 = vmatprep.subr.mxu0 0.0
        %963 = vmatpush1.msra.mxu0 %v725
        %964 = vmatprep.subr.mxu0 0.0
        %965 = vmatpush1.msra.mxu0 %v726
        %966 = vmatprep.subr.mxu0 0.0
        %967 = vmatpush1.msra.mxu0 %v727
        %968 = vmatprep.subr.mxu0 0.0
        %969 = vmatpush1.msra.mxu0 %v728
        %970 = vmatprep.subr.mxu0 0.0
        %971 = vmatpush1.msra.mxu0 %v729
        %972 = vmatprep.subr.mxu0 0.0
        %973 = vmatpush1.msra.mxu0 %v730
        %974 = vmatprep.mubr.f32.mxu0 %v632
        %975 = vmatmul.mubr.f32.gmra.mrb[0].mxu0 %v631
        %v976 = vpop.f32.mrb[0].mxu0
        %v977 = vadd.f32 %v907, %v976
        %v978 = vpop.f32.mrb[0].mxu0
        %979 = vdwg.mxu0
        %980 = vmatprep.subr.mxu0 0.0
        %981 = vmatpush1.msra.mxu0 %v731
        %982 = vmatprep.subr.mxu0 0.0
        %983 = vmatpush1.msra.mxu0 %v732
        %984 = vmatprep.subr.mxu0 0.0
        %985 = vmatpush1.msra.mxu0 %v733
        %986 = vmatprep.subr.mxu0 0.0
        %987 = vmatpush1.msra.mxu0 %v734
        %988 = vmatprep.subr.mxu0 0.0
        %989 = vmatpush1.msra.mxu0 %v735
        %990 = vmatprep.subr.mxu0 0.0
        %991 = vmatpush1.msra.mxu0 %v736
        %992 = vmatprep.subr.mxu0 0.0
        %993 = vmatpush1.msra.mxu0 %v737
        %994 = vmatprep.subr.mxu0 0.0
        %995 = vmatpush1.msra.mxu0 %v738
        %996 = vmatprep.subr.mxu0 0.0
        %997 = vmatpush1.msra.mxu0 %v739
        %998 = vmatprep.subr.mxu0 0.0
        %999 = vmatpush1.msra.mxu0 %v740
        %1000 = vmatprep.subr.mxu0 0.0
        %1001 = vmatpush1.msra.mxu0 %v741
        %1002 = vmatprep.subr.mxu0 0.0
        %1003 = vmatpush1.msra.mxu0 %v742
        %1004 = vmatprep.subr.mxu0 0.0
        %1005 = vmatpush1.msra.mxu0 %v743
        %1006 = vmatprep.subr.mxu0 0.0
        %1007 = vmatpush1.msra.mxu0 %v744
        %1008 = vmatprep.subr.mxu0 0.0
        %1009 = vmatpush1.msra.mxu0 %v745
        %1010 = vmatprep.subr.mxu0 0.0
        %1011 = vmatpush1.msra.mxu0 %v746
        %1012 = vmatprep.subr.mxu0 0.0
        %1013 = vmatpush1.msra.mxu0 %v747
        %1014 = vmatprep.subr.mxu0 0.0
        %1015 = vmatpush1.msra.mxu0 %v748
        %1016 = vmatprep.subr.mxu0 0.0
        %1017 = vmatpush1.msra.mxu0 %v749
        %1018 = vmatprep.subr.mxu0 0.0
        %1019 = vmatpush1.msra.mxu0 %v750
        %1020 = vmatprep.subr.mxu0 0.0
        %1021 = vmatpush1.msra.mxu0 %v751
        %1022 = vmatprep.subr.mxu0 0.0
        %1023 = vmatpush1.msra.mxu0 %v752
        %1024 = vmatprep.subr.mxu0 0.0
        %1025 = vmatpush1.msra.mxu0 %v753
        %1026 = vmatprep.subr.mxu0 0.0
        %1027 = vmatpush1.msra.mxu0 %v754
        %1028 = vmatprep.subr.mxu0 0.0
        %1029 = vmatpush1.msra.mxu0 %v755
        %1030 = vmatprep.subr.mxu0 0.0
        %1031 = vmatpush1.msra.mxu0 %v756
        %1032 = vmatprep.subr.mxu0 0.0
        %1033 = vmatpush1.msra.mxu0 %v757
        %1034 = vmatprep.subr.mxu0 0.0
        %1035 = vmatpush1.msra.mxu0 %v758
        %1036 = vmatprep.subr.mxu0 0.0
        %1037 = vmatpush1.msra.mxu0 %v759
        %1038 = vmatprep.subr.mxu0 0.0
        %1039 = vmatpush1.msra.mxu0 %v760
        %1040 = vmatprep.subr.mxu0 0.0
        %1041 = vmatpush1.msra.mxu0 %v761
        %1042 = vmatprep.subr.mxu0 0.0
        %1043 = vmatpush1.msra.mxu0 %v762
        %1044 = vmatprep.mubr.f32.mxu0 %v634
        %1045 = vmatmul.mubr.f32.gmra.mrb[0].mxu0 %v633
        %v1046 = vpop.f32.mrb[0].mxu0
        %v1047 = vadd.f32 %v977, %v1046
        %v1048 = vpop.f32.mrb[0].mxu0
        %1049 = vdwg.mxu0
        %v1050 = vlaneseq
        %v1051 = vshrl.u32 %v1050, 7
        %v1052 = vadd.f32 %v1047, 0.0
        %v1053 = vld [vmem:[%s3] sm:$0x1]
        %v1054 = vld [vmem:[%s4] sm:$0x1]
        %vm1055 = vcmask 261120
        %v1056 = vsel %vm1055, %v1052, 0.0
        %1057 = vadd.xlane.f32.xlu0 %v1056
        %v1058 = vpop.xlane.xlu0 %1057
        %v1059 = vrcp.pop 32.0
        %v1060 = vmul.f32 %v1058, %v1059
        %v1061 = vsub.f32 %v1052, %v1060
        %v1062 = vmul.f32 %v1061, %v1061
        %v1063 = vsel %vm1055, %v1062, 0.0
        %1064 = vadd.xlane.f32.xlu0 %v1063
        %v1065 = vpop.xlane.xlu0 %1064
        %v1066 = vmul.f32 %v1065, %v1059
        %v1067 = vadd.f32 %v1066, 1e-05
        %v1068 = vrsqrt.pop %v1067
        %v1069 = vmul.f32 %v1061, %v1068
        %v1071 = vlaneseq
        %v1072 = vshrl.u32 %v1071, 7
        %v1073 = vsub.s32 0, %v1072
        %v1074 = vrot.slane %v1053, %v1073
        %v1076 = vmul.f32 %v1069, %v1074
        %v1078 = vlaneseq
        %v1079 = vshrl.u32 %v1078, 7
        %v1080 = vsub.s32 0, %v1079
        %v1081 = vrot.slane %v1054, %v1080
        %v1083 = vadd.f32 %v1076, %v1081
        %v1084 = vld [vmem:[%s5] sm:$0xff]
        %v1085 = vld [vmem:[%s5 + $0x8] sm:$0xff]
        %v1086 = vld [vmem:[%s5 + $0x10] sm:$0xff]
        %v1087 = vld [vmem:[%s5 + $0x18] sm:$0xff]
        %v1089 = vsel %vm1055, %v1083, 0
        %1091 = vmatprep.subr.mxu0 0.0
        %1092 = vmatpush1.msra.mxu0 %v1084
        %1093 = vmatprep.subr.mxu0 0.0
        %1094 = vmatpush1.msra.mxu0 %v1085
        %1095 = vmatprep.subr.mxu0 0.0
        %1096 = vmatpush1.msra.mxu0 %v1086
        %1097 = vmatprep.subr.mxu0 0.0
        %1098 = vmatpush1.msra.mxu0 %v1087
        %1099 = vmatprep.subr.mxu0 0.0
        %1100 = vmatpush1.msra.mxu0 0.0
        %1101 = vmatprep.subr.mxu0 0.0
        %1102 = vmatpush1.msra.mxu0 0.0
        %1103 = vmatprep.subr.mxu0 0.0
        %1104 = vmatpush1.msra.mxu0 0.0
        %1105 = vmatprep.subr.mxu0 0.0
        %1106 = vmatpush1.msra.mxu0 0.0
        %1107 = vmatprep.subr.mxu0 0.0
        %1108 = vmatpush1.msra.mxu0 0.0
        %1109 = vmatprep.subr.mxu0 0.0
        %1110 = vmatpush1.msra.mxu0 0.0
        %1111 = vmatprep.subr.mxu0 0.0
        %1112 = vmatpush1.msra.mxu0 0.0
        %1113 = vmatprep.subr.mxu0 0.0
        %1114 = vmatpush1.msra.mxu0 0.0
        %1115 = vmatprep.subr.mxu0 0.0
        %1116 = vmatpush1.msra.mxu0 0.0
        %1117 = vmatprep.subr.mxu0 0.0
        %1118 = vmatpush1.msra.mxu0 0.0
        %1119 = vmatprep.subr.mxu0 0.0
        %1120 = vmatpush1.msra.mxu0 0.0
        %1121 = vmatprep.subr.mxu0 0.0
        %1122 = vmatpush1.msra.mxu0 0.0
        %1123 = vmatprep.subr.mxu0 0.0
        %1124 = vmatpush1.msra.mxu0 0.0
        %1125 = vmatprep.subr.mxu0 0.0
        %1126 = vmatpush1.msra.mxu0 0.0
        %1127 = vmatprep.subr.mxu0 0.0
        %1128 = vmatpush1.msra.mxu0 0.0
        %1129 = vmatprep.subr.mxu0 0.0
        %1130 = vmatpush1.msra.mxu0 0.0
        %1131 = vmatprep.subr.mxu0 0.0
        %1132 = vmatpush1.msra.mxu0 0.0
        %1133 = vmatprep.subr.mxu0 0.0
        %1134 = vmatpush1.msra.mxu0 0.0
        %1135 = vmatprep.subr.mxu0 0.0
        %1136 = vmatpush1.msra.mxu0 0.0
        %1137 = vmatprep.subr.mxu0 0.0
        %1138 = vmatpush1.msra.mxu0 0.0
        %1139 = vmatprep.subr.mxu0 0.0
        %1140 = vmatpush1.msra.mxu0 0.0
        %1141 = vmatprep.subr.mxu0 0.0
        %1142 = vmatpush1.msra.mxu0 0.0
        %1143 = vmatprep.subr.mxu0 0.0
        %1144 = vmatpush1.msra.mxu0 0.0
        %1145 = vmatprep.subr.mxu0 0.0
        %1146 = vmatpush1.msra.mxu0 0.0
        %1147 = vmatprep.subr.mxu0 0.0
        %1148 = vmatpush1.msra.mxu0 0.0
        %1149 = vmatprep.subr.mxu0 0.0
        %1150 = vmatpush1.msra.mxu0 0.0
        %1151 = vmatprep.subr.mxu0 0.0
        %1152 = vmatpush1.msra.mxu0 0.0
        %1153 = vmatprep.subr.mxu0 0.0
        %1154 = vmatpush1.msra.mxu0 0.0
        %1155 = vmatprep.mubr.f32.mxu0 0.0
        %1156 = vmatmul.mubr.f32.gmra.mrb[0].mxu0 %v1089
        %v1157 = vpop.f32.mrb[0].mxu0
        %v1158 = vadd.f32 0.0, %v1157
        %v1159 = vpop.f32.mrb[0].mxu0
        %1160 = vdwg.mxu0
        %v1161 = vld [vmem:[%s6] sm:$0xff]
        %v1162 = vld [vmem:[%s6 + $0x8] sm:$0xff]
        %v1163 = vld [vmem:[%s6 + $0x10] sm:$0xff]
        %v1164 = vld [vmem:[%s6 + $0x18] sm:$0xff]
        %1165 = vmatprep.subr.mxu0 0.0
        %1166 = vmatpush1.msra.mxu0 %v1161
        %1167 = vmatprep.subr.mxu0 0.0
        %1168 = vmatpush1.msra.mxu0 %v1162
        %1169 = vmatprep.subr.mxu0 0.0
        %1170 = vmatpush1.msra.mxu0 %v1163
        %1171 = vmatprep.subr.mxu0 0.0
        %1172 = vmatpush1.msra.mxu0 %v1164
        %1173 = vmatprep.subr.mxu0 0.0
        %1174 = vmatpush1.msra.mxu0 0.0
        %1175 = vmatprep.subr.mxu0 0.0
        %1176 = vmatpush1.msra.mxu0 0.0
        %1177 = vmatprep.subr.mxu0 0.0
        %1178 = vmatpush1.msra.mxu0 0.0
        %1179 = vmatprep.subr.mxu0 0.0
        %1180 = vmatpush1.msra.mxu0 0.0
        %1181 = vmatprep.subr.mxu0 0.0
        %1182 = vmatpush1.msra.mxu0 0.0
        %1183 = vmatprep.subr.mxu0 0.0
        %1184 = vmatpush1.msra.mxu0 0.0
        %1185 = vmatprep.subr.mxu0 0.0
        %1186 = vmatpush1.msra.mxu0 0.0
        %1187 = vmatprep.subr.mxu0 0.0
        %1188 = vmatpush1.msra.mxu0 0.0
        %1189 = vmatprep.subr.mxu0 0.0
        %1190 = vmatpush1.msra.mxu0 0.0
        %1191 = vmatprep.subr.mxu0 0.0
        %1192 = vmatpush1.msra.mxu0 0.0
        %1193 = vmatprep.subr.mxu0 0.0
        %1194 = vmatpush1.msra.mxu0 0.0
        %1195 = vmatprep.subr.mxu0 0.0
        %1196 = vmatpush1.msra.mxu0 0.0
        %1197 = vmatprep.subr.mxu0 0.0
        %1198 = vmatpush1.msra.mxu0 0.0
        %1199 = vmatprep.subr.mxu0 0.0
        %1200 = vmatpush1.msra.mxu0 0.0
        %1201 = vmatprep.subr.mxu0 0.0
        %1202 = vmatpush1.msra.mxu0 0.0
        %1203 = vmatprep.subr.mxu0 0.0
        %1204 = vmatpush1.msra.mxu0 0.0
        %1205 = vmatprep.subr.mxu0 0.0
        %1206 = vmatpush1.msra.mxu0 0.0
        %1207 = vmatprep.subr.mxu0 0.0
        %1208 = vmatpush1.msra.mxu0 0.0
        %1209 = vmatprep.subr.mxu0 0.0
        %1210 = vmatpush1.msra.mxu0 0.0
        %1211 = vmatprep.subr.mxu0 0.0
        %1212 = vmatpush1.msra.mxu0 0.0
        %1213 = vmatprep.subr.mxu0 0.0
        %1214 = vmatpush1.msra.mxu0 0.0
        %1215 = vmatprep.subr.mxu0 0.0
        %1216 = vmatpush1.msra.mxu0 0.0
        %1217 = vmatprep.subr.mxu0 0.0
        %1218 = vmatpush1.msra.mxu0 0.0
        %1219 = vmatprep.subr.mxu0 0.0
        %1220 = vmatpush1.msra.mxu0 0.0
        %1221 = vmatprep.subr.mxu0 0.0
        %1222 = vmatpush1.msra.mxu0 0.0
        %1223 = vmatprep.subr.mxu0 0.0
        %1224 = vmatpush1.msra.mxu0 0.0
        %1225 = vmatprep.subr.mxu0 0.0
        %1226 = vmatpush1.msra.mxu0 0.0
        %1227 = vmatprep.subr.mxu0 0.0
        %1228 = vmatpush1.msra.mxu0 0.0
        %1229 = vmatprep.mubr.f32.mxu0 0.0
        %1230 = vmatmul.mubr.f32.gmra.mrb[0].mxu0 %v1089
        %v1231 = vpop.f32.mrb[0].mxu0
        %v1232 = vadd.f32 0.0, %v1231
        %v1233 = vpop.f32.mrb[0].mxu0
        %1234 = vdwg.mxu0
        %v1235 = vld [vmem:[%s7] sm:$0xf]
        %v1236 = vlaneseq
        %v1237 = vshrl.u32 %v1236, 7
        %v1238 = vsub.s32 3, %v1237
        %v1239 = vrot.slane %v1235, %v1238
        %v1240 = vmul.f32 %v1158, %v1239
        %v1241 = vrot.slane %v1158, 5
        %vm1242 = vcmp.ge.s32.totalorder %v1051, 3
        %v1243 = vsel %vm1242, 1, 0
        %vm1244 = vcmp.eq.s32.totalorder %v1243, 1
        %v1245 = vsel %vm1244, %v1241, 0.0
        %v1246 = vlaneseq
        %v1247 = vshrl.u32 %v1246, 7
        %v1248 = vsub.s32 0, %v1247
        %v1249 = vrot.slane %v1235, %v1248
        %v1250 = vmul.f32 %v1245, %v1249
        %v1251 = vadd.f32 %v1240, %v1250
        %v1252 = vrot.slane %v1158, 6
        %vm1253 = vcmp.ge.s32.totalorder %v1051, 2
        %v1254 = vsel %vm1253, 1, 0
        %vm1255 = vcmp.eq.s32.totalorder %v1254, 1
        %v1256 = vsel %vm1255, %v1252, 0.0
        %v1257 = vlaneseq
        %v1258 = vshrl.u32 %v1257, 7
        %v1259 = vsub.s32 1, %v1258
        %v1260 = vrot.slane %v1235, %v1259
        %v1261 = vmul.f32 %v1256, %v1260
        %v1262 = vadd.f32 %v1251, %v1261
        %v1263 = vrot.slane %v1158, 7
        %vm1264 = vcmp.ge.s32.totalorder %v1051, 1
        %v1265 = vsel %vm1264, 1, 0
        %vm1266 = vcmp.eq.s32.totalorder %v1265, 1
        %v1267 = vsel %vm1266, %v1263, 0.0
        %v1268 = vlaneseq
        %v1269 = vshrl.u32 %v1268, 7
        %v1270 = vsub.s32 2, %v1269
        %v1271 = vrot.slane %v1235, %v1270
        %v1272 = vmul.f32 %v1267, %v1271
        %v1273 = vadd.f32 %v1262, %v1272
        %v1274 = vld [vmem:[%s8] sm:$0x1]
        %v1276 = vlaneseq
        %v1277 = vshrl.u32 %v1276, 7
        %v1278 = vsub.s32 0, %v1277
        %v1279 = vrot.slane %v1274, %v1278
        %v1281 = vadd.f32 %v1273, %v1279
        %v1282 = vxor.u32 %v1281, 2147483648
        %v1283 = vmul.f32 %v1282, 1.442695
        %v1284 = vpow.pop %v1283
        %v1285 = vadd.f32 %v1284, 1.0
        %v1286 = vrcp.pop %v1285
        %v1287 = vmul.f32 1.0, %v1286
        %v1288 = vmul.f32 %v1281, %v1287
        %v1289 = vld [vmem:[%s9] sm:$0xff]
        %v1290 = vld [vmem:[%s9 + $0x8] sm:$0xff]
        %v1291 = vld [vmem:[%s9 + $0x10] sm:$0xff]
        %v1292 = vld [vmem:[%s9 + $0x18] sm:$0xff]
        %v1293 = vld [vmem:[%s9 + $0x20] sm:$0xff]
        %v1294 = vld [vmem:[%s9 + $0x28] sm:$0xff]
        %v1295 = vld [vmem:[%s9 + $0x30] sm:$0xff]
        %v1296 = vld [vmem:[%s9 + $0x38] sm:$0xff]
        %vm1297 = vcmask 523264
        %v1299 = vsel %vm1297, %v1288, 0
        %1301 = vmatprep.subr.mxu0 0.0
        %1302 = vmatpush1.msra.mxu0 %v1289
        %1303 = vmatprep.subr.mxu0 0.0
        %1304 = vmatpush1.msra.mxu0 %v1290
        %1305 = vmatprep.subr.mxu0 0.0
        %1306 = vmatpush1.msra.mxu0 %v1291
        %1307 = vmatprep.subr.mxu0 0.0
        %1308 = vmatpush1.msra.mxu0 %v1292
        %1309 = vmatprep.subr.mxu0 0.0
        %1310 = vmatpush1.msra.mxu0 %v1293
        %1311 = vmatprep.subr.mxu0 0.0
        %1312 = vmatpush1.msra.mxu0 %v1294
        %1313 = vmatprep.subr.mxu0 0.0
        %1314 = vmatpush1.msra.mxu0 %v1295
        %1315 = vmatprep.subr.mxu0 0.0
        %1316 = vmatpush1.msra.mxu0 %v1296
        %1317 = vmatprep.subr.mxu0 0.0
        %1318 = vmatpush1.msra.mxu0 0.0
        %1319 = vmatprep.subr.mxu0 0.0
        %1320 = vmatpush1.msra.mxu0 0.0
        %1321 = vmatprep.subr.mxu0 0.0
        %1322 = vmatpush1.msra.mxu0 0.0
        %1323 = vmatprep.subr.mxu0 0.0
        %1324 = vmatpush1.msra.mxu0 0.0
        %1325 = vmatprep.subr.mxu0 0.0
        %1326 = vmatpush1.msra.mxu0 0.0
        %1327 = vmatprep.subr.mxu0 0.0
        %1328 = vmatpush1.msra.mxu0 0.0
        %1329 = vmatprep.subr.mxu0 0.0
        %1330 = vmatpush1.msra.mxu0 0.0
        %1331 = vmatprep.subr.mxu0 0.0
        %1332 = vmatpush1.msra.mxu0 0.0
        %1333 = vmatprep.subr.mxu0 0.0
        %1334 = vmatpush1.msra.mxu0 0.0
        %1335 = vmatprep.subr.mxu0 0.0
        %1336 = vmatpush1.msra.mxu0 0.0
        %1337 = vmatprep.subr.mxu0 0.0
        %1338 = vmatpush1.msra.mxu0 0.0
        %1339 = vmatprep.subr.mxu0 0.0
        %1340 = vmatpush1.msra.mxu0 0.0
        %1341 = vmatprep.subr.mxu0 0.0
        %1342 = vmatpush1.msra.mxu0 0.0
        %1343 = vmatprep.subr.mxu0 0.0
        %1344 = vmatpush1.msra.mxu0 0.0
        %1345 = vmatprep.subr.mxu0 0.0
        %1346 = vmatpush1.msra.mxu0 0.0
        %1347 = vmatprep.subr.mxu0 0.0
        %1348 = vmatpush1.msra.mxu0 0.0
        %1349 = vmatprep.subr.mxu0 0.0
        %1350 = vmatpush1.msra.mxu0 0.0
        %1351 = vmatprep.subr.mxu0 0.0
        %1352 = vmatpush1.msra.mxu0 0.0
        %1353 = vmatprep.subr.mxu0 0.0
        %1354 = vmatpush1.msra.mxu0 0.0
        %1355 = vmatprep.subr.mxu0 0.0
        %1356 = vmatpush1.msra.mxu0 0.0
        %1357 = vmatprep.subr.mxu0 0.0
        %1358 = vmatpush1.msra.mxu0 0.0
        %1359 = vmatprep.subr.mxu0 0.0
        %1360 = vmatpush1.msra.mxu0 0.0
        %1361 = vmatprep.subr.mxu0 0.0
        %1362 = vmatpush1.msra.mxu0 0.0
        %1363 = vmatprep.subr.mxu0 0.0
        %1364 = vmatpush1.msra.mxu0 0.0
        %1365 = vmatprep.mubr.f32.mxu0 0.0
        %1366 = vmatmul.mubr.f32.gmra.mrb[0].mxu0 %v1299
        %v1367 = vpop.f32.mrb[0].mxu0
        %v1368 = vadd.f32 0.0, %v1367
        %v1369 = vpop.f32.mrb[0].mxu0
        %1370 = vdwg.mxu0
        %v1371 = vld [vmem:[%s10] sm:$0xff]
        %v1372 = vld [vmem:[%s10 + $0x8] sm:$0xff]
        %v1373 = vld [vmem:[%s10 + $0x10] sm:$0xff]
        %v1374 = vld [vmem:[%s10 + $0x18] sm:$0xff]
        %v1375 = vld [vmem:[%s10 + $0x20] sm:$0xff]
        %v1376 = vld [vmem:[%s10 + $0x28] sm:$0xff]
        %v1377 = vld [vmem:[%s10 + $0x30] sm:$0xff]
        %v1378 = vld [vmem:[%s10 + $0x38] sm:$0xff]
        %1379 = vmatprep.subr.mxu0 0.0
        %1380 = vmatpush1.msra.mxu0 %v1371
        %1381 = vmatprep.subr.mxu0 0.0
        %1382 = vmatpush1.msra.mxu0 %v1372
        %1383 = vmatprep.subr.mxu0 0.0
        %1384 = vmatpush1.msra.mxu0 %v1373
        %1385 = vmatprep.subr.mxu0 0.0
        %1386 = vmatpush1.msra.mxu0 %v1374
        %1387 = vmatprep.subr.mxu0 0.0
        %1388 = vmatpush1.msra.mxu0 %v1375
        %1389 = vmatprep.subr.mxu0 0.0
        %1390 = vmatpush1.msra.mxu0 %v1376
        %1391 = vmatprep.subr.mxu0 0.0
        %1392 = vmatpush1.msra.mxu0 %v1377
        %1393 = vmatprep.subr.mxu0 0.0
        %1394 = vmatpush1.msra.mxu0 %v1378
        %1395 = vmatprep.subr.mxu0 0.0
        %1396 = vmatpush1.msra.mxu0 0.0
        %1397 = vmatprep.subr.mxu0 0.0
        %1398 = vmatpush1.msra.mxu0 0.0
        %1399 = vmatprep.subr.mxu0 0.0
        %1400 = vmatpush1.msra.mxu0 0.0
        %1401 = vmatprep.subr.mxu0 0.0
        %1402 = vmatpush1.msra.mxu0 0.0
        %1403 = vmatprep.subr.mxu0 0.0
        %1404 = vmatpush1.msra.mxu0 0.0
        %1405 = vmatprep.subr.mxu0 0.0
        %1406 = vmatpush1.msra.mxu0 0.0
        %1407 = vmatprep.subr.mxu0 0.0
        %1408 = vmatpush1.msra.mxu0 0.0
        %1409 = vmatprep.subr.mxu0 0.0
        %1410 = vmatpush1.msra.mxu0 0.0
        %1411 = vmatprep.subr.mxu0 0.0
        %1412 = vmatpush1.msra.mxu0 0.0
        %1413 = vmatprep.subr.mxu0 0.0
        %1414 = vmatpush1.msra.mxu0 0.0
        %1415 = vmatprep.subr.mxu0 0.0
        %1416 = vmatpush1.msra.mxu0 0.0
        %1417 = vmatprep.subr.mxu0 0.0
        %1418 = vmatpush1.msra.mxu0 0.0
        %1419 = vmatprep.subr.mxu0 0.0
        %1420 = vmatpush1.msra.mxu0 0.0
        %1421 = vmatprep.subr.mxu0 0.0
        %1422 = vmatpush1.msra.mxu0 0.0
        %1423 = vmatprep.subr.mxu0 0.0
        %1424 = vmatpush1.msra.mxu0 0.0
        %1425 = vmatprep.subr.mxu0 0.0
        %1426 = vmatpush1.msra.mxu0 0.0
        %1427 = vmatprep.subr.mxu0 0.0
        %1428 = vmatpush1.msra.mxu0 0.0
        %1429 = vmatprep.subr.mxu0 0.0
        %1430 = vmatpush1.msra.mxu0 0.0
        %1431 = vmatprep.subr.mxu0 0.0
        %1432 = vmatpush1.msra.mxu0 0.0
        %1433 = vmatprep.subr.mxu0 0.0
        %1434 = vmatpush1.msra.mxu0 0.0
        %1435 = vmatprep.subr.mxu0 0.0
        %1436 = vmatpush1.msra.mxu0 0.0
        %1437 = vmatprep.subr.mxu0 0.0
        %1438 = vmatpush1.msra.mxu0 0.0
        %1439 = vmatprep.subr.mxu0 0.0
        %1440 = vmatpush1.msra.mxu0 0.0
        %1441 = vmatprep.subr.mxu0 0.0
        %1442 = vmatpush1.msra.mxu0 0.0
        %1443 = vmatprep.mubr.f32.mxu0 0.0
        %1444 = vmatmul.mubr.f32.gmra.mrb[0].mxu0 %v1299
        %v1445 = vpop.f32.mrb[0].mxu0
        %v1446 = vadd.f32 0.0, %v1445
        %v1447 = vpop.f32.mrb[0].mxu0
        %1448 = vdwg.mxu0
        %v1449 = vld [vmem:[%s11] sm:$0xff]
        %v1450 = vld [vmem:[%s11 + $0x8] sm:$0xff]
        %v1451 = vld [vmem:[%s11 + $0x10] sm:$0xff]
        %v1452 = vld [vmem:[%s11 + $0x18] sm:$0xff]
        %v1453 = vld [vmem:[%s11 + $0x20] sm:$0xff]
        %v1454 = vld [vmem:[%s11 + $0x28] sm:$0xff]
        %v1455 = vld [vmem:[%s11 + $0x30] sm:$0xff]
        %v1456 = vld [vmem:[%s11 + $0x38] sm:$0xff]
        %v1457 = vld [vmem:[%s12] sm:$0x1]
        %v1459 = vlaneseq
        %v1460 = vshrl.u32 %v1459, 7
        %v1461 = vsub.s32 0, %v1460
        %v1462 = vrot.slane %v1457, %v1461
        %1464 = vmatprep.subr.mxu0 0.0
        %1465 = vmatpush1.msra.mxu0 %v1449
        %1466 = vmatprep.subr.mxu0 0.0
        %1467 = vmatpush1.msra.mxu0 %v1450
        %1468 = vmatprep.subr.mxu0 0.0
        %1469 = vmatpush1.msra.mxu0 %v1451
        %1470 = vmatprep.subr.mxu0 0.0
        %1471 = vmatpush1.msra.mxu0 %v1452
        %1472 = vmatprep.subr.mxu0 0.0
        %1473 = vmatpush1.msra.mxu0 %v1453
        %1474 = vmatprep.subr.mxu0 0.0
        %1475 = vmatpush1.msra.mxu0 %v1454
        %1476 = vmatprep.subr.mxu0 0.0
        %1477 = vmatpush1.msra.mxu0 %v1455
        %1478 = vmatprep.subr.mxu0 0.0
        %1479 = vmatpush1.msra.mxu0 %v1456
        %1480 = vmatprep.subr.mxu0 0.0
        %1481 = vmatpush1.msra.mxu0 0.0
        %1482 = vmatprep.subr.mxu0 0.0
        %1483 = vmatpush1.msra.mxu0 0.0
        %1484 = vmatprep.subr.mxu0 0.0
        %1485 = vmatpush1.msra.mxu0 0.0
        %1486 = vmatprep.subr.mxu0 0.0
        %1487 = vmatpush1.msra.mxu0 0.0
        %1488 = vmatprep.subr.mxu0 0.0
        %1489 = vmatpush1.msra.mxu0 0.0
        %1490 = vmatprep.subr.mxu0 0.0
        %1491 = vmatpush1.msra.mxu0 0.0
        %1492 = vmatprep.subr.mxu0 0.0
        %1493 = vmatpush1.msra.mxu0 0.0
        %1494 = vmatprep.subr.mxu0 0.0
        %1495 = vmatpush1.msra.mxu0 0.0
        %1496 = vmatprep.subr.mxu0 0.0
        %1497 = vmatpush1.msra.mxu0 0.0
        %1498 = vmatprep.subr.mxu0 0.0
        %1499 = vmatpush1.msra.mxu0 0.0
        %1500 = vmatprep.subr.mxu0 0.0
        %1501 = vmatpush1.msra.mxu0 0.0
        %1502 = vmatprep.subr.mxu0 0.0
        %1503 = vmatpush1.msra.mxu0 0.0
        %1504 = vmatprep.subr.mxu0 0.0
        %1505 = vmatpush1.msra.mxu0 0.0
        %1506 = vmatprep.subr.mxu0 0.0
        %1507 = vmatpush1.msra.mxu0 0.0
        %1508 = vmatprep.subr.mxu0 0.0
        %1509 = vmatpush1.msra.mxu0 0.0
        %1510 = vmatprep.subr.mxu0 0.0
        %1511 = vmatpush1.msra.mxu0 0.0
        %1512 = vmatprep.subr.mxu0 0.0
        %1513 = vmatpush1.msra.mxu0 0.0
        %1514 = vmatprep.subr.mxu0 0.0
        %1515 = vmatpush1.msra.mxu0 0.0
        %1516 = vmatprep.subr.mxu0 0.0
        %1517 = vmatpush1.msra.mxu0 0.0
        %1518 = vmatprep.subr.mxu0 0.0
        %1519 = vmatpush1.msra.mxu0 0.0
        %1520 = vmatprep.subr.mxu0 0.0
        %1521 = vmatpush1.msra.mxu0 0.0
        %1522 = vmatprep.subr.mxu0 0.0
        %1523 = vmatpush1.msra.mxu0 0.0
        %1524 = vmatprep.subr.mxu0 0.0
        %1525 = vmatpush1.msra.mxu0 0.0
        %1526 = vmatprep.subr.mxu0 0.0
        %1527 = vmatpush1.msra.mxu0 0.0
        %1528 = vmatprep.mubr.f32.mxu0 0.0
        %1529 = vmatmul.mubr.f32.gmra.mrb[0].mxu0 %v1299
        %v1530 = vpop.f32.mrb[0].mxu0
        %v1531 = vadd.f32 %v1462, %v1530
        %v1532 = vpop.f32.mrb[0].mxu0
        %1533 = vdwg.mxu0
        %v1534 = vmax.f32 %v1531, 0.0
        %v1535 = vand.u32 2147483647, %v1531
        %v1536 = vsub.f32 0.0, %v1535
        %v1537 = vmul.f32 %v1536, 1.442695
        %v1538 = vpow.pop %v1537
        %v1539 = vadd.f32 %v1538, 1.0
        %v1540 = vlog2.pop %v1539
        %v1541 = vmul.f32 %v1540, 0.6931472
        %v1542 = vmul.f32 -0.5, %v1538
        %v1543 = vadd.f32 %v1542, 1.0
        %v1544 = vmul.f32 %v1543, %v1538
        %v1545 = vand.u32 2147483647, %v1538
        %vm1546 = vcmp.lt.f32.partialorder %v1545, 0.0004427343
        %v1547 = vsel %vm1546, %v1544, %v1541
        %v1548 = vadd.f32 %v1534, %v1547
        %v1549 = vld [vmem:[%s13] sm:$0xff]
        %v1550 = vld [vmem:[%s13 + $0x8] sm:$0xff]
        %v1551 = vmul.f32 %v1549, 1.442695
        %v1552 = vpow.pop %v1551
        %v1553 = vmul.f32 %v1550, 1.442695
        %v1554 = vpow.pop %v1553
        %v1555 = vsub.f32 0.0, %v1552
        %v1556 = vsub.f32 0.0, %v1554
        %v1558 = vcombine.high %v1548, %v1548
        %v1560 = vunpack.c.l.s4 1966171168
        %v1561 = vunpack.c.0.s8 %v1560
        %v1562 = vlaneseq
        %v1563 = vshrl.u32 %v1562, 7
        %v1564 = vsub.s32 %v1561, %v1563
        %v1565 = vrot.slane %v1548, %v1564
        %v1567 = vunpack.c.l.s4 1966171168
        %v1568 = vunpack.c.0.s8 %v1567
        %v1569 = vlaneseq
        %v1570 = vshrl.u32 %v1569, 7
        %v1571 = vsub.s32 %v1568, %v1570
        %v1572 = vrot.slane %v1558, %v1571
        %v1573 = vcombine.high %v1565, %v1565
        %v1574 = vcombine.high %v1572, %v1572
        %v1576 = vunpack.c.l.s4 1966171168
        %v1577 = vunpack.c.0.s8 %v1576
        %v1578 = vlaneseq
        %v1579 = vshrl.u32 %v1578, 7
        %v1580 = vsub.s32 %v1577, %v1579
        %v1581 = vrot.slane %v1565, %v1580
        %v1583 = vunpack.c.l.s4 1966171168
        %v1584 = vunpack.c.0.s8 %v1583
        %v1585 = vlaneseq
        %v1586 = vshrl.u32 %v1585, 7
        %v1587 = vsub.s32 %v1584, %v1586
        %v1588 = vrot.slane %v1572, %v1587
        %v1590 = vunpack.c.l.s4 1966171168
        %v1591 = vunpack.c.0.s8 %v1590
        %v1592 = vlaneseq
        %v1593 = vshrl.u32 %v1592, 7
        %v1594 = vsub.s32 %v1591, %v1593
        %v1595 = vrot.slane %v1573, %v1594
        %v1597 = vunpack.c.l.s4 1966171168
        %v1598 = vunpack.c.0.s8 %v1597
        %v1599 = vlaneseq
        %v1600 = vshrl.u32 %v1599, 7
        %v1601 = vsub.s32 %v1598, %v1600
        %v1602 = vrot.slane %v1574, %v1601
        %v1603 = vcombine.high %v1581, %v1581
        %v1604 = vcombine.high %v1588, %v1588
        %v1605 = vcombine.high %v1595, %v1595
        %v1606 = vcombine.high %v1602, %v1602
        %v1607 = vlaneseq
        %v1608 = vshrl.u32 %v1607, 7
        %v1609 = vsub.s32 0, %v1608
        %v1610 = vrot.slane %v1581, %v1609
        %v1611 = vlaneseq
        %v1612 = vshrl.u32 %v1611, 7
        %v1613 = vsub.s32 0, %v1612
        %v1614 = vrot.slane %v1595, %v1613
        %v1615 = vlaneseq
        %v1616 = vshrl.u32 %v1615, 7
        %v1617 = vsub.s32 0, %v1616
        %v1618 = vrot.slane %v1603, %v1617
        %v1619 = vlaneseq
        %v1620 = vshrl.u32 %v1619, 7
        %v1621 = vsub.s32 0, %v1620
        %v1622 = vrot.slane %v1605, %v1621
        %v1623 = vlaneseq
        %v1624 = vshrl.u32 %v1623, 7
        %v1625 = vsub.s32 0, %v1624
        %v1626 = vrot.slane %v1588, %v1625
        %v1627 = vlaneseq
        %v1628 = vshrl.u32 %v1627, 7
        %v1629 = vsub.s32 0, %v1628
        %v1630 = vrot.slane %v1602, %v1629
        %v1631 = vlaneseq
        %v1632 = vshrl.u32 %v1631, 7
        %v1633 = vsub.s32 0, %v1632
        %v1634 = vrot.slane %v1604, %v1633
        %v1635 = vlaneseq
        %v1636 = vshrl.u32 %v1635, 7
        %v1637 = vsub.s32 0, %v1636
        %v1638 = vrot.slane %v1606, %v1637
        %v1647 = vmul.f32 %v1610, %v1555
        %v1648 = vmul.f32 %v1610, %v1556
        %v1649 = vmul.f32 %v1614, %v1555
        %v1650 = vmul.f32 %v1614, %v1556
        %v1651 = vmul.f32 %v1618, %v1555
        %v1652 = vmul.f32 %v1618, %v1556
        %v1653 = vmul.f32 %v1622, %v1555
        %v1654 = vmul.f32 %v1622, %v1556
        %v1655 = vmul.f32 %v1626, %v1555
        %v1656 = vmul.f32 %v1626, %v1556
        %v1657 = vmul.f32 %v1630, %v1555
        %v1658 = vmul.f32 %v1630, %v1556
        %v1659 = vmul.f32 %v1634, %v1555
        %v1660 = vmul.f32 %v1634, %v1556
        %v1661 = vmul.f32 %v1638, %v1555
        %v1662 = vmul.f32 %v1638, %v1556
        %v1663 = vmul.f32 %v1647, 1.442695
        %v1664 = vpow.pop %v1663
        %v1665 = vmul.f32 %v1648, 1.442695
        %v1666 = vpow.pop %v1665
        %v1667 = vmul.f32 %v1649, 1.442695
        %v1668 = vpow.pop %v1667
        %v1669 = vmul.f32 %v1650, 1.442695
        %v1670 = vpow.pop %v1669
        %v1671 = vmul.f32 %v1651, 1.442695
        %v1672 = vpow.pop %v1671
        %v1673 = vmul.f32 %v1652, 1.442695
        %v1674 = vpow.pop %v1673
        %v1675 = vmul.f32 %v1653, 1.442695
        %v1676 = vpow.pop %v1675
        %v1677 = vmul.f32 %v1654, 1.442695
        %v1678 = vpow.pop %v1677
        %v1679 = vmul.f32 %v1655, 1.442695
        %v1680 = vpow.pop %v1679
        %v1681 = vmul.f32 %v1656, 1.442695
        %v1682 = vpow.pop %v1681
        %v1683 = vmul.f32 %v1657, 1.442695
        %v1684 = vpow.pop %v1683
        %v1685 = vmul.f32 %v1658, 1.442695
        %v1686 = vpow.pop %v1685
        %v1687 = vmul.f32 %v1659, 1.442695
        %v1688 = vpow.pop %v1687
        %v1689 = vmul.f32 %v1660, 1.442695
        %v1690 = vpow.pop %v1689
        %v1691 = vmul.f32 %v1661, 1.442695
        %v1692 = vpow.pop %v1691
        %v1693 = vmul.f32 %v1662, 1.442695
        %v1694 = vpow.pop %v1693
        %1695 = vst.msk [vmem:[#allocation2] sm:$0xff] %vm1297, %v1664
        %1696 = vst.msk [vmem:[#allocation2 + $0x8] sm:$0xff] %vm1297, %v1666
        %1697 = vst.msk [vmem:[#allocation2 + $0x10] sm:$0xff] %vm1297, %v1668
        %1698 = vst.msk [vmem:[#allocation2 + $0x18] sm:$0xff] %vm1297, %v1670
        %1699 = vst.msk [vmem:[#allocation2 + $0x20] sm:$0xff] %vm1297, %v1672
        %1700 = vst.msk [vmem:[#allocation2 + $0x28] sm:$0xff] %vm1297, %v1674
        %1701 = vst.msk [vmem:[#allocation2 + $0x30] sm:$0xff] %vm1297, %v1676
        %1702 = vst.msk [vmem:[#allocation2 + $0x38] sm:$0xff] %vm1297, %v1678
        %1703 = vst.msk [vmem:[#allocation2 + $0x40] sm:$0xff] %vm1297, %v1680
        %1704 = vst.msk [vmem:[#allocation2 + $0x48] sm:$0xff] %vm1297, %v1682
        %1705 = vst.msk [vmem:[#allocation2 + $0x50] sm:$0xff] %vm1297, %v1684
        %1706 = vst.msk [vmem:[#allocation2 + $0x58] sm:$0xff] %vm1297, %v1686
        %1707 = vst.msk [vmem:[#allocation2 + $0x60] sm:$0xff] %vm1297, %v1688
        %1708 = vst.msk [vmem:[#allocation2 + $0x68] sm:$0xff] %vm1297, %v1690
        %1709 = vst.msk [vmem:[#allocation2 + $0x70] sm:$0xff] %vm1297, %v1692
        %1710 = vst.msk [vmem:[#allocation2 + $0x78] sm:$0xff] %vm1297, %v1694
        %v1711 = vlaneseq
        %v1712 = vshrl.u32 %v1711, 7
        %v1713 = vsub.s32 0, %v1712
        %v1714 = vrot.slane %v1368, %v1713
        %1716 = vbcast.lane.b32.xlu0 %v1714, 256
        %v1717 = vpop.permute.xlu0 %1716
        %s1719 = sor.u32 256, 8
        %1720 = vbcast.lane.b32.xlu0 %v1714, %s1719
        %v1721 = vpop.permute.xlu0 %1720
        %v1722 = vlaneseq
        %v1723 = vshrl.u32 %v1722, 7
        %v1724 = vsub.s32 1, %v1723
        %v1725 = vrot.slane %v1368, %v1724
        %1727 = vbcast.lane.b32.xlu0 %v1725, 256
        %v1728 = vpop.permute.xlu0 %1727
        %s1730 = sor.u32 256, 8
        %1731 = vbcast.lane.b32.xlu0 %v1725, %s1730
        %v1732 = vpop.permute.xlu0 %1731
        %v1733 = vlaneseq
        %v1734 = vshrl.u32 %v1733, 7
        %v1735 = vsub.s32 2, %v1734
        %v1736 = vrot.slane %v1368, %v1735
        %1738 = vbcast.lane.b32.xlu0 %v1736, 256
        %v1739 = vpop.permute.xlu0 %1738
        %s1741 = sor.u32 256, 8
        %1742 = vbcast.lane.b32.xlu0 %v1736, %s1741
        %v1743 = vpop.permute.xlu0 %1742
        %v1744 = vlaneseq
        %v1745 = vshrl.u32 %v1744, 7
        %v1746 = vsub.s32 3, %v1745
        %v1747 = vrot.slane %v1368, %v1746
        %1749 = vbcast.lane.b32.xlu0 %v1747, 256
        %v1750 = vpop.permute.xlu0 %1749
        %s1752 = sor.u32 256, 8
        %1753 = vbcast.lane.b32.xlu0 %v1747, %s1752
        %v1754 = vpop.permute.xlu0 %1753
        %v1755 = vlaneseq
        %v1756 = vshrl.u32 %v1755, 7
        %v1757 = vsub.s32 4, %v1756
        %v1758 = vrot.slane %v1368, %v1757
        %1760 = vbcast.lane.b32.xlu0 %v1758, 256
        %v1761 = vpop.permute.xlu0 %1760
        %s1763 = sor.u32 256, 8
        %1764 = vbcast.lane.b32.xlu0 %v1758, %s1763
        %v1765 = vpop.permute.xlu0 %1764
        %v1766 = vlaneseq
        %v1767 = vshrl.u32 %v1766, 7
        %v1768 = vsub.s32 5, %v1767
        %v1769 = vrot.slane %v1368, %v1768
        %1771 = vbcast.lane.b32.xlu0 %v1769, 256
        %v1772 = vpop.permute.xlu0 %1771
        %s1774 = sor.u32 256, 8
        %1775 = vbcast.lane.b32.xlu0 %v1769, %s1774
        %v1776 = vpop.permute.xlu0 %1775
        %v1777 = vlaneseq
        %v1778 = vshrl.u32 %v1777, 7
        %v1779 = vsub.s32 6, %v1778
        %v1780 = vrot.slane %v1368, %v1779
        %1782 = vbcast.lane.b32.xlu0 %v1780, 256
        %v1783 = vpop.permute.xlu0 %1782
        %s1785 = sor.u32 256, 8
        %1786 = vbcast.lane.b32.xlu0 %v1780, %s1785
        %v1787 = vpop.permute.xlu0 %1786
        %v1788 = vlaneseq
        %v1789 = vshrl.u32 %v1788, 7
        %v1790 = vsub.s32 7, %v1789
        %v1791 = vrot.slane %v1368, %v1790
        %1793 = vbcast.lane.b32.xlu0 %v1791, 256
        %v1794 = vpop.permute.xlu0 %1793
        %s1796 = sor.u32 256, 8
        %1797 = vbcast.lane.b32.xlu0 %v1791, %s1796
        %v1798 = vpop.permute.xlu0 %1797
        %v1799 = vmul.f32 %v1548, %v1288
        %v1801 = vcombine.high %v1799, %v1799
        %v1803 = vunpack.c.l.s4 1966171168
        %v1804 = vunpack.c.0.s8 %v1803
        %v1805 = vlaneseq
        %v1806 = vshrl.u32 %v1805, 7
        %v1807 = vsub.s32 %v1804, %v1806
        %v1808 = vrot.slane %v1799, %v1807
        %v1810 = vunpack.c.l.s4 1966171168
        %v1811 = vunpack.c.0.s8 %v1810
        %v1812 = vlaneseq
        %v1813 = vshrl.u32 %v1812, 7
        %v1814 = vsub.s32 %v1811, %v1813
        %v1815 = vrot.slane %v1801, %v1814
        %v1816 = vcombine.high %v1808, %v1808
        %v1817 = vcombine.high %v1815, %v1815
        %v1819 = vunpack.c.l.s4 1966171168
        %v1820 = vunpack.c.0.s8 %v1819
        %v1821 = vlaneseq
        %v1822 = vshrl.u32 %v1821, 7
        %v1823 = vsub.s32 %v1820, %v1822
        %v1824 = vrot.slane %v1808, %v1823
        %v1826 = vunpack.c.l.s4 1966171168
        %v1827 = vunpack.c.0.s8 %v1826
        %v1828 = vlaneseq
        %v1829 = vshrl.u32 %v1828, 7
        %v1830 = vsub.s32 %v1827, %v1829
        %v1831 = vrot.slane %v1815, %v1830
        %v1833 = vunpack.c.l.s4 1966171168
        %v1834 = vunpack.c.0.s8 %v1833
        %v1835 = vlaneseq
        %v1836 = vshrl.u32 %v1835, 7
        %v1837 = vsub.s32 %v1834, %v1836
        %v1838 = vrot.slane %v1816, %v1837
        %v1840 = vunpack.c.l.s4 1966171168
        %v1841 = vunpack.c.0.s8 %v1840
        %v1842 = vlaneseq
        %v1843 = vshrl.u32 %v1842, 7
        %v1844 = vsub.s32 %v1841, %v1843
        %v1845 = vrot.slane %v1817, %v1844
        %v1846 = vcombine.high %v1824, %v1824
        %v1847 = vcombine.high %v1831, %v1831
        %v1848 = vcombine.high %v1838, %v1838
        %v1849 = vcombine.high %v1845, %v1845
        %v1850 = vlaneseq
        %v1851 = vshrl.u32 %v1850, 7
        %v1852 = vsub.s32 0, %v1851
        %v1853 = vrot.slane %v1824, %v1852
        %v1854 = vlaneseq
        %v1855 = vshrl.u32 %v1854, 7
        %v1856 = vsub.s32 0, %v1855
        %v1857 = vrot.slane %v1838, %v1856
        %v1858 = vlaneseq
        %v1859 = vshrl.u32 %v1858, 7
        %v1860 = vsub.s32 0, %v1859
        %v1861 = vrot.slane %v1846, %v1860
        %v1862 = vlaneseq
        %v1863 = vshrl.u32 %v1862, 7
        %v1864 = vsub.s32 0, %v1863
        %v1865 = vrot.slane %v1848, %v1864
        %v1866 = vlaneseq
        %v1867 = vshrl.u32 %v1866, 7
        %v1868 = vsub.s32 0, %v1867
        %v1869 = vrot.slane %v1831, %v1868
        %v1870 = vlaneseq
        %v1871 = vshrl.u32 %v1870, 7
        %v1872 = vsub.s32 0, %v1871
        %v1873 = vrot.slane %v1845, %v1872
        %v1874 = vlaneseq
        %v1875 = vshrl.u32 %v1874, 7
        %v1876 = vsub.s32 0, %v1875
        %v1877 = vrot.slane %v1847, %v1876
        %v1878 = vlaneseq
        %v1879 = vshrl.u32 %v1878, 7
        %v1880 = vsub.s32 0, %v1879
        %v1881 = vrot.slane %v1849, %v1880
        %v1890 = vmul.f32 %v1717, %v1853
        %v1891 = vmul.f32 %v1721, %v1853
        %v1892 = vmul.f32 %v1728, %v1857
        %v1893 = vmul.f32 %v1732, %v1857
        %v1894 = vmul.f32 %v1739, %v1861
        %v1895 = vmul.f32 %v1743, %v1861
        %v1896 = vmul.f32 %v1750, %v1865
        %v1897 = vmul.f32 %v1754, %v1865
        %v1898 = vmul.f32 %v1761, %v1869
        %v1899 = vmul.f32 %v1765, %v1869
        %v1900 = vmul.f32 %v1772, %v1873
        %v1901 = vmul.f32 %v1776, %v1873
        %v1902 = vmul.f32 %v1783, %v1877
        %v1903 = vmul.f32 %v1787, %v1877
        %v1904 = vmul.f32 %v1794, %v1881
        %v1905 = vmul.f32 %v1798, %v1881
        %1906 = vst.msk [vmem:[#allocation3] sm:$0xff] %vm1297, %v1890
        %1907 = vst.msk [vmem:[#allocation3 + $0x8] sm:$0xff] %vm1297, %v1891
        %1908 = vst.msk [vmem:[#allocation3 + $0x10] sm:$0xff] %vm1297, %v1892
        %1909 = vst.msk [vmem:[#allocation3 + $0x18] sm:$0xff] %vm1297, %v1893
        %1910 = vst.msk [vmem:[#allocation3 + $0x20] sm:$0xff] %vm1297, %v1894
        %1911 = vst.msk [vmem:[#allocation3 + $0x28] sm:$0xff] %vm1297, %v1895
        %1912 = vst.msk [vmem:[#allocation3 + $0x30] sm:$0xff] %vm1297, %v1896
        %1913 = vst.msk [vmem:[#allocation3 + $0x38] sm:$0xff] %vm1297, %v1897
        %1914 = vst.msk [vmem:[#allocation3 + $0x40] sm:$0xff] %vm1297, %v1898
        %1915 = vst.msk [vmem:[#allocation3 + $0x48] sm:$0xff] %vm1297, %v1899
        %1916 = vst.msk [vmem:[#allocation3 + $0x50] sm:$0xff] %vm1297, %v1900
        %1917 = vst.msk [vmem:[#allocation3 + $0x58] sm:$0xff] %vm1297, %v1901
        %1918 = vst.msk [vmem:[#allocation3 + $0x60] sm:$0xff] %vm1297, %v1902
        %1919 = vst.msk [vmem:[#allocation3 + $0x68] sm:$0xff] %vm1297, %v1903
        %1920 = vst.msk [vmem:[#allocation3 + $0x70] sm:$0xff] %vm1297, %v1904
        %1921 = vst.msk [vmem:[#allocation3 + $0x78] sm:$0xff] %vm1297, %v1905
        %v1922 = vld [vmem:[#allocation2] sm:$0xff]
        %v1923 = vld [vmem:[#allocation2 + $0x8] sm:$0xff]
        %v1924 = vmul.f32 %v1922, 0.0
        %v1925 = vmul.f32 %v1923, 0.0
        %v1926 = vld [vmem:[#allocation3] sm:$0xff]
        %v1927 = vld [vmem:[#allocation3 + $0x8] sm:$0xff]
        %v1928 = vadd.f32 %v1924, %v1926
        %v1929 = vadd.f32 %v1925, %v1927
        %1930 = vst.msk [vmem:[#allocation4] sm:$0xff] %vm1297, %v1928
        %1931 = vst.msk [vmem:[#allocation4 + $0x8] sm:$0xff] %vm1297, %v1929
        %s1932 = scalar_lea.vmem [#allocation2], 16
        %v1933 = vld [vmem:[%s1932] sm:$0xff]
        %v1934 = vld [vmem:[%s1932 + $0x8] sm:$0xff]
        %v1935 = vmul.f32 %v1933, %v1928
        %v1936 = vmul.f32 %v1934, %v1929
        %s1937 = scalar_lea.vmem [#allocation3], 16
        %v1938 = vld [vmem:[%s1937] sm:$0xff]
        %v1939 = vld [vmem:[%s1937 + $0x8] sm:$0xff]
        %v1940 = vadd.f32 %v1935, %v1938
        %v1941 = vadd.f32 %v1936, %v1939
        %s1942 = scalar_lea.vmem [#allocation4], 16
        %1943 = vst.msk [vmem:[%s1942] sm:$0xff] %vm1297, %v1940
        %1944 = vst.msk [vmem:[%s1942 + $0x8] sm:$0xff] %vm1297, %v1941
        %s1945 = scalar_lea.vmem [#allocation2], 32
        %v1946 = vld [vmem:[%s1945] sm:$0xff]
        %v1947 = vld [vmem:[%s1945 + $0x8] sm:$0xff]
        %v1948 = vmul.f32 %v1946, %v1940
        %v1949 = vmul.f32 %v1947, %v1941
        %s1950 = scalar_lea.vmem [#allocation3], 32
        %v1951 = vld [vmem:[%s1950] sm:$0xff]
        %v1952 = vld [vmem:[%s1950 + $0x8] sm:$0xff]
        %v1953 = vadd.f32 %v1948, %v1951
        %v1954 = vadd.f32 %v1949, %v1952
        %s1955 = scalar_lea.vmem [#allocation4], 32
        %1956 = vst.msk [vmem:[%s1955] sm:$0xff] %vm1297, %v1953
        %1957 = vst.msk [vmem:[%s1955 + $0x8] sm:$0xff] %vm1297, %v1954
        %s1958 = scalar_lea.vmem [#allocation2], 48
        %v1959 = vld [vmem:[%s1958] sm:$0xff]
        %v1960 = vld [vmem:[%s1958 + $0x8] sm:$0xff]
        %v1961 = vmul.f32 %v1959, %v1953
        %v1962 = vmul.f32 %v1960, %v1954
        %s1963 = scalar_lea.vmem [#allocation3], 48
        %v1964 = vld [vmem:[%s1963] sm:$0xff]
        %v1965 = vld [vmem:[%s1963 + $0x8] sm:$0xff]
        %v1966 = vadd.f32 %v1961, %v1964
        %v1967 = vadd.f32 %v1962, %v1965
        %s1968 = scalar_lea.vmem [#allocation4], 48
        %1969 = vst.msk [vmem:[%s1968] sm:$0xff] %vm1297, %v1966
        %1970 = vst.msk [vmem:[%s1968 + $0x8] sm:$0xff] %vm1297, %v1967
        %s1971 = scalar_lea.vmem [#allocation2], 64
        %v1972 = vld [vmem:[%s1971] sm:$0xff]
        %v1973 = vld [vmem:[%s1971 + $0x8] sm:$0xff]
        %v1974 = vmul.f32 %v1972, %v1966
        %v1975 = vmul.f32 %v1973, %v1967
        %s1976 = scalar_lea.vmem [#allocation3], 64
        %v1977 = vld [vmem:[%s1976] sm:$0xff]
        %v1978 = vld [vmem:[%s1976 + $0x8] sm:$0xff]
        %v1979 = vadd.f32 %v1974, %v1977
        %v1980 = vadd.f32 %v1975, %v1978
        %s1981 = scalar_lea.vmem [#allocation4], 64
        %1982 = vst.msk [vmem:[%s1981] sm:$0xff] %vm1297, %v1979
        %1983 = vst.msk [vmem:[%s1981 + $0x8] sm:$0xff] %vm1297, %v1980
        %s1984 = scalar_lea.vmem [#allocation2], 80
        %v1985 = vld [vmem:[%s1984] sm:$0xff]
        %v1986 = vld [vmem:[%s1984 + $0x8] sm:$0xff]
        %v1987 = vmul.f32 %v1985, %v1979
        %v1988 = vmul.f32 %v1986, %v1980
        %s1989 = scalar_lea.vmem [#allocation3], 80
        %v1990 = vld [vmem:[%s1989] sm:$0xff]
        %v1991 = vld [vmem:[%s1989 + $0x8] sm:$0xff]
        %v1992 = vadd.f32 %v1987, %v1990
        %v1993 = vadd.f32 %v1988, %v1991
        %s1994 = scalar_lea.vmem [#allocation4], 80
        %1995 = vst.msk [vmem:[%s1994] sm:$0xff] %vm1297, %v1992
        %1996 = vst.msk [vmem:[%s1994 + $0x8] sm:$0xff] %vm1297, %v1993
        %s1997 = scalar_lea.vmem [#allocation2], 96
        %v1998 = vld [vmem:[%s1997] sm:$0xff]
        %v1999 = vld [vmem:[%s1997 + $0x8] sm:$0xff]
        %v2000 = vmul.f32 %v1998, %v1992
        %v2001 = vmul.f32 %v1999, %v1993
        %s2002 = scalar_lea.vmem [#allocation3], 96
        %v2003 = vld [vmem:[%s2002] sm:$0xff]
        %v2004 = vld [vmem:[%s2002 + $0x8] sm:$0xff]
        %v2005 = vadd.f32 %v2000, %v2003
        %v2006 = vadd.f32 %v2001, %v2004
        %s2007 = scalar_lea.vmem [#allocation4], 96
        %2008 = vst.msk [vmem:[%s2007] sm:$0xff] %vm1297, %v2005
        %2009 = vst.msk [vmem:[%s2007 + $0x8] sm:$0xff] %vm1297, %v2006
        %s2010 = scalar_lea.vmem [#allocation2], 112
        %v2011 = vld [vmem:[%s2010] sm:$0xff]
        %v2012 = vld [vmem:[%s2010 + $0x8] sm:$0xff]
        %v2013 = vmul.f32 %v2011, %v2005
        %v2014 = vmul.f32 %v2012, %v2006
        %s2015 = scalar_lea.vmem [#allocation3], 112
        %v2016 = vld [vmem:[%s2015] sm:$0xff]
        %v2017 = vld [vmem:[%s2015 + $0x8] sm:$0xff]
        %v2018 = vadd.f32 %v2013, %v2016
        %v2019 = vadd.f32 %v2014, %v2017
        %s2020 = scalar_lea.vmem [#allocation4], 112
        %2021 = vst.msk [vmem:[%s2020] sm:$0xff] %vm1297, %v2018
        %2022 = vst.msk [vmem:[%s2020 + $0x8] sm:$0xff] %vm1297, %v2019
        %v2023 = vlaneseq
        %v2024 = vshrl.u32 %v2023, 7
        %v2025 = vsub.s32 0, %v2024
        %v2026 = vrot.slane %v1446, %v2025
        %2028 = vbcast.lane.b32.xlu0 %v2026, 256
        %v2029 = vpop.permute.xlu0 %2028
        %s2031 = sor.u32 256, 8
        %2032 = vbcast.lane.b32.xlu0 %v2026, %s2031
        %v2033 = vpop.permute.xlu0 %2032
        %v2034 = vlaneseq
        %v2035 = vshrl.u32 %v2034, 7
        %v2036 = vsub.s32 1, %v2035
        %v2037 = vrot.slane %v1446, %v2036
        %2039 = vbcast.lane.b32.xlu0 %v2037, 256
        %v2040 = vpop.permute.xlu0 %2039
        %s2042 = sor.u32 256, 8
        %2043 = vbcast.lane.b32.xlu0 %v2037, %s2042
        %v2044 = vpop.permute.xlu0 %2043
        %v2045 = vlaneseq
        %v2046 = vshrl.u32 %v2045, 7
        %v2047 = vsub.s32 2, %v2046
        %v2048 = vrot.slane %v1446, %v2047
        %2050 = vbcast.lane.b32.xlu0 %v2048, 256
        %v2051 = vpop.permute.xlu0 %2050
        %s2053 = sor.u32 256, 8
        %2054 = vbcast.lane.b32.xlu0 %v2048, %s2053
        %v2055 = vpop.permute.xlu0 %2054
        %v2056 = vlaneseq
        %v2057 = vshrl.u32 %v2056, 7
        %v2058 = vsub.s32 3, %v2057
        %v2059 = vrot.slane %v1446, %v2058
        %2061 = vbcast.lane.b32.xlu0 %v2059, 256
        %v2062 = vpop.permute.xlu0 %2061
        %s2064 = sor.u32 256, 8
        %2065 = vbcast.lane.b32.xlu0 %v2059, %s2064
        %v2066 = vpop.permute.xlu0 %2065
        %v2067 = vlaneseq
        %v2068 = vshrl.u32 %v2067, 7
        %v2069 = vsub.s32 4, %v2068
        %v2070 = vrot.slane %v1446, %v2069
        %2072 = vbcast.lane.b32.xlu0 %v2070, 256
        %v2073 = vpop.permute.xlu0 %2072
        %s2075 = sor.u32 256, 8
        %2076 = vbcast.lane.b32.xlu0 %v2070, %s2075
        %v2077 = vpop.permute.xlu0 %2076
        %v2078 = vlaneseq
        %v2079 = vshrl.u32 %v2078, 7
        %v2080 = vsub.s32 5, %v2079
        %v2081 = vrot.slane %v1446, %v2080
        %2083 = vbcast.lane.b32.xlu0 %v2081, 256
        %v2084 = vpop.permute.xlu0 %2083
        %s2086 = sor.u32 256, 8
        %2087 = vbcast.lane.b32.xlu0 %v2081, %s2086
        %v2088 = vpop.permute.xlu0 %2087
        %v2089 = vlaneseq
        %v2090 = vshrl.u32 %v2089, 7
        %v2091 = vsub.s32 6, %v2090
        %v2092 = vrot.slane %v1446, %v2091
        %2094 = vbcast.lane.b32.xlu0 %v2092, 256
        %v2095 = vpop.permute.xlu0 %2094
        %s2097 = sor.u32 256, 8
        %2098 = vbcast.lane.b32.xlu0 %v2092, %s2097
        %v2099 = vpop.permute.xlu0 %2098
        %v2100 = vlaneseq
        %v2101 = vshrl.u32 %v2100, 7
        %v2102 = vsub.s32 7, %v2101
        %v2103 = vrot.slane %v1446, %v2102
        %2105 = vbcast.lane.b32.xlu0 %v2103, 256
        %v2106 = vpop.permute.xlu0 %2105
        %s2108 = sor.u32 256, 8
        %2109 = vbcast.lane.b32.xlu0 %v2103, %s2108
        %v2110 = vpop.permute.xlu0 %2109
        %v2111 = vld [vmem:[#allocation4] sm:$0xff]
        %v2112 = vld [vmem:[#allocation4 + $0x8] sm:$0xff]
        %v2113 = vld [vmem:[#allocation4 + $0x10] sm:$0xff]
        %v2114 = vld [vmem:[#allocation4 + $0x18] sm:$0xff]
        %v2115 = vld [vmem:[#allocation4 + $0x20] sm:$0xff]
        %v2116 = vld [vmem:[#allocation4 + $0x28] sm:$0xff]
        %v2117 = vld [vmem:[#allocation4 + $0x30] sm:$0xff]
        %v2118 = vld [vmem:[#allocation4 + $0x38] sm:$0xff]
        %v2119 = vld [vmem:[#allocation4 + $0x40] sm:$0xff]
        %v2120 = vld [vmem:[#allocation4 + $0x48] sm:$0xff]
        %v2121 = vld [vmem:[#allocation4 + $0x50] sm:$0xff]
        %v2122 = vld [vmem:[#allocation4 + $0x58] sm:$0xff]
        %v2123 = vld [vmem:[#allocation4 + $0x60] sm:$0xff]
        %v2124 = vld [vmem:[#allocation4 + $0x68] sm:$0xff]
        %v2125 = vld [vmem:[#allocation4 + $0x70] sm:$0xff]
        %v2126 = vld [vmem:[#allocation4 + $0x78] sm:$0xff]
        %v2127 = vmul.f32 %v2029, %v2111
        %v2128 = vmul.f32 %v2033, %v2112
        %v2129 = vmul.f32 %v2040, %v2113
        %v2130 = vmul.f32 %v2044, %v2114
        %v2131 = vmul.f32 %v2051, %v2115
        %v2132 = vmul.f32 %v2055, %v2116
        %v2133 = vmul.f32 %v2062, %v2117
        %v2134 = vmul.f32 %v2066, %v2118
        %v2135 = vmul.f32 %v2073, %v2119
        %v2136 = vmul.f32 %v2077, %v2120
        %v2137 = vmul.f32 %v2084, %v2121
        %v2138 = vmul.f32 %v2088, %v2122
        %v2139 = vmul.f32 %v2095, %v2123
        %v2140 = vmul.f32 %v2099, %v2124
        %v2141 = vmul.f32 %v2106, %v2125
        %v2142 = vmul.f32 %v2110, %v2126
        %v2143 = vsel %vm1297, %v2127, 0.0
        %v2144 = vsel %vm1297, %v2128, 0.0
        %v2145 = vadd.f32 %v2143, %v2144
        %v2146 = vrot.slane %v2145, 4
        %v2147 = vadd.f32 %v2145, %v2146
        %v2148 = vrot.slane %v2147, 2
        %v2149 = vadd.f32 %v2147, %v2148
        %v2150 = vrot.slane %v2149, 1
        %v2151 = vadd.f32 %v2149, %v2150
        %v2152 = vsel %vm1297, %v2129, 0.0
        %v2153 = vsel %vm1297, %v2130, 0.0
        %v2154 = vadd.f32 %v2152, %v2153
        %v2155 = vrot.slane %v2154, 4
        %v2156 = vadd.f32 %v2154, %v2155
        %v2157 = vrot.slane %v2156, 2
        %v2158 = vadd.f32 %v2156, %v2157
        %v2159 = vrot.slane %v2158, 1
        %v2160 = vadd.f32 %v2158, %v2159
        %v2161 = vsel %vm1297, %v2131, 0.0
        %v2162 = vsel %vm1297, %v2132, 0.0
        %v2163 = vadd.f32 %v2161, %v2162
        %v2164 = vrot.slane %v2163, 4
        %v2165 = vadd.f32 %v2163, %v2164
        %v2166 = vrot.slane %v2165, 2
        %v2167 = vadd.f32 %v2165, %v2166
        %v2168 = vrot.slane %v2167, 1
        %v2169 = vadd.f32 %v2167, %v2168
        %v2170 = vsel %vm1297, %v2133, 0.0
        %v2171 = vsel %vm1297, %v2134, 0.0
        %v2172 = vadd.f32 %v2170, %v2171
        %v2173 = vrot.slane %v2172, 4
        %v2174 = vadd.f32 %v2172, %v2173
        %v2175 = vrot.slane %v2174, 2
        %v2176 = vadd.f32 %v2174, %v2175
        %v2177 = vrot.slane %v2176, 1
        %v2178 = vadd.f32 %v2176, %v2177
        %v2179 = vsel %vm1297, %v2135, 0.0
        %v2180 = vsel %vm1297, %v2136, 0.0
        %v2181 = vadd.f32 %v2179, %v2180
        %v2182 = vrot.slane %v2181, 4
        %v2183 = vadd.f32 %v2181, %v2182
        %v2184 = vrot.slane %v2183, 2
        %v2185 = vadd.f32 %v2183, %v2184
        %v2186 = vrot.slane %v2185, 1
        %v2187 = vadd.f32 %v2185, %v2186
        %v2188 = vsel %vm1297, %v2137, 0.0
        %v2189 = vsel %vm1297, %v2138, 0.0
        %v2190 = vadd.f32 %v2188, %v2189
        %v2191 = vrot.slane %v2190, 4
        %v2192 = vadd.f32 %v2190, %v2191
        %v2193 = vrot.slane %v2192, 2
        %v2194 = vadd.f32 %v2192, %v2193
        %v2195 = vrot.slane %v2194, 1
        %v2196 = vadd.f32 %v2194, %v2195
        %v2197 = vsel %vm1297, %v2139, 0.0
        %v2198 = vsel %vm1297, %v2140, 0.0
        %v2199 = vadd.f32 %v2197, %v2198
        %v2200 = vrot.slane %v2199, 4
        %v2201 = vadd.f32 %v2199, %v2200
        %v2202 = vrot.slane %v2201, 2
        %v2203 = vadd.f32 %v2201, %v2202
        %v2204 = vrot.slane %v2203, 1
        %v2205 = vadd.f32 %v2203, %v2204
        %v2206 = vsel %vm1297, %v2141, 0.0
        %v2207 = vsel %vm1297, %v2142, 0.0
        %v2208 = vadd.f32 %v2206, %v2207
        %v2209 = vrot.slane %v2208, 4
        %v2210 = vadd.f32 %v2208, %v2209
        %v2211 = vrot.slane %v2210, 2
        %v2212 = vadd.f32 %v2210, %v2211
        %v2213 = vrot.slane %v2212, 1
        %v2214 = vadd.f32 %v2212, %v2213
        %v2215 = vld [vmem:[%s14] sm:$0x1]
        %v2217 = vlaneseq
        %v2218 = vshrl.u32 %v2217, 7
        %v2219 = vsub.s32 0, %v2218
        %v2220 = vrot.slane %v2215, %v2219
        %v2222 = vmul.f32 %v1288, %v2220
        %v2224 = vrot.slane %v2222, 1
        %v2225 = vrot.slane %v2222, 2
        %v2226 = vrot.slane %v2222, 3
        %v2227 = vrot.slane %v2222, 4
        %v2228 = vrot.slane %v2222, 5
        %v2229 = vrot.slane %v2222, 6
        %v2230 = vrot.slane %v2222, 7
        %v2239 = vadd.f32 %v2151, %v2222
        %v2240 = vadd.f32 %v2160, %v2224
        %v2241 = vadd.f32 %v2169, %v2225
        %v2242 = vadd.f32 %v2178, %v2226
        %v2243 = vadd.f32 %v2187, %v2227
        %v2244 = vadd.f32 %v2196, %v2228
        %v2245 = vadd.f32 %v2205, %v2229
        %v2246 = vadd.f32 %v2214, %v2230
        %v2247 = vxor.u32 %v1232, 2147483648
        %v2248 = vmul.f32 %v2247, 1.442695
        %v2249 = vpow.pop %v2248
        %v2250 = vadd.f32 %v2249, 1.0
        %v2251 = vrcp.pop %v2250
        %v2252 = vmul.f32 1.0, %v2251
        %v2253 = vmul.f32 %v1232, %v2252
        %v2255 = vrot.slane %v2253, 1
        %v2256 = vrot.slane %v2253, 2
        %v2257 = vrot.slane %v2253, 3
        %v2258 = vrot.slane %v2253, 4
        %v2259 = vrot.slane %v2253, 5
        %v2260 = vrot.slane %v2253, 6
        %v2261 = vrot.slane %v2253, 7
        %v2270 = vmul.f32 %v2239, %v2253
        %v2271 = vmul.f32 %v2240, %v2255
        %v2272 = vmul.f32 %v2241, %v2256
        %v2273 = vmul.f32 %v2242, %v2257
        %v2274 = vmul.f32 %v2243, %v2258
        %v2275 = vmul.f32 %v2244, %v2259
        %v2276 = vmul.f32 %v2245, %v2260
        %v2277 = vmul.f32 %v2246, %v2261
        %v2278 = vld [vmem:[%s15] sm:$0xff]
        %v2279 = vld [vmem:[%s15 + $0x8] sm:$0xff]
        %v2280 = vld [vmem:[%s15 + $0x10] sm:$0xff]
        %v2281 = vld [vmem:[%s15 + $0x18] sm:$0xff]
        %v2282 = vld [vmem:[%s15 + $0x20] sm:$0xff]
        %v2283 = vld [vmem:[%s15 + $0x28] sm:$0xff]
        %v2284 = vld [vmem:[%s15 + $0x30] sm:$0xff]
        %v2285 = vld [vmem:[%s15 + $0x38] sm:$0xff]
        %v2294 = vrot.slane %v2271, 7
        %vm2295 = vcmask 1041409
        %v2296 = vsel %vm2295, %v2294, %v2270
        %v2297 = vrot.slane %v2272, 6
        %vm2298 = vcmask 1042434
        %v2299 = vsel %vm2298, %v2297, %v2296
        %v2300 = vrot.slane %v2273, 5
        %vm2301 = vcmask 1043459
        %v2302 = vsel %vm2301, %v2300, %v2299
        %v2303 = vrot.slane %v2274, 4
        %vm2304 = vcmask 1044484
        %v2305 = vsel %vm2304, %v2303, %v2302
        %v2306 = vrot.slane %v2275, 3
        %vm2307 = vcmask 1045509
        %v2308 = vsel %vm2307, %v2306, %v2305
        %v2309 = vrot.slane %v2276, 2
        %vm2310 = vcmask 1046534
        %v2311 = vsel %vm2310, %v2309, %v2308
        %v2312 = vrot.slane %v2277, 1
        %vm2313 = vcmask 1047559
        %v2314 = vsel %vm2313, %v2312, %v2311
        %v2315 = vsel %vm1297, %v2314, 0
        %2317 = vmatprep.subr.mxu0 0.0
        %2318 = vmatpush1.msra.mxu0 %v2278
        %2319 = vmatprep.subr.mxu0 0.0
        %2320 = vmatpush1.msra.mxu0 %v2279
        %2321 = vmatprep.subr.mxu0 0.0
        %2322 = vmatpush1.msra.mxu0 %v2280
        %2323 = vmatprep.subr.mxu0 0.0
        %2324 = vmatpush1.msra.mxu0 %v2281
        %2325 = vmatprep.subr.mxu0 0.0
        %2326 = vmatpush1.msra.mxu0 %v2282
        %2327 = vmatprep.subr.mxu0 0.0
        %2328 = vmatpush1.msra.mxu0 %v2283
        %2329 = vmatprep.subr.mxu0 0.0
        %2330 = vmatpush1.msra.mxu0 %v2284
        %2331 = vmatprep.subr.mxu0 0.0
        %2332 = vmatpush1.msra.mxu0 %v2285
        %2333 = vmatprep.subr.mxu0 0.0
        %2334 = vmatpush1.msra.mxu0 0.0
        %2335 = vmatprep.subr.mxu0 0.0
        %2336 = vmatpush1.msra.mxu0 0.0
        %2337 = vmatprep.subr.mxu0 0.0
        %2338 = vmatpush1.msra.mxu0 0.0
        %2339 = vmatprep.subr.mxu0 0.0
        %2340 = vmatpush1.msra.mxu0 0.0
        %2341 = vmatprep.subr.mxu0 0.0
        %2342 = vmatpush1.msra.mxu0 0.0
        %2343 = vmatprep.subr.mxu0 0.0
        %2344 = vmatpush1.msra.mxu0 0.0
        %2345 = vmatprep.subr.mxu0 0.0
        %2346 = vmatpush1.msra.mxu0 0.0
        %2347 = vmatprep.subr.mxu0 0.0
        %2348 = vmatpush1.msra.mxu0 0.0
        %2349 = vmatprep.subr.mxu0 0.0
        %2350 = vmatpush1.msra.mxu0 0.0
        %2351 = vmatprep.subr.mxu0 0.0
        %2352 = vmatpush1.msra.mxu0 0.0
        %2353 = vmatprep.subr.mxu0 0.0
        %2354 = vmatpush1.msra.mxu0 0.0
        %2355 = vmatprep.subr.mxu0 0.0
        %2356 = vmatpush1.msra.mxu0 0.0
        %2357 = vmatprep.subr.mxu0 0.0
        %2358 = vmatpush1.msra.mxu0 0.0
        %2359 = vmatprep.subr.mxu0 0.0
        %2360 = vmatpush1.msra.mxu0 0.0
        %2361 = vmatprep.subr.mxu0 0.0
        %2362 = vmatpush1.msra.mxu0 0.0
        %2363 = vmatprep.subr.mxu0 0.0
        %2364 = vmatpush1.msra.mxu0 0.0
        %2365 = vmatprep.subr.mxu0 0.0
        %2366 = vmatpush1.msra.mxu0 0.0
        %2367 = vmatprep.subr.mxu0 0.0
        %2368 = vmatpush1.msra.mxu0 0.0
        %2369 = vmatprep.subr.mxu0 0.0
        %2370 = vmatpush1.msra.mxu0 0.0
        %2371 = vmatprep.subr.mxu0 0.0
        %2372 = vmatpush1.msra.mxu0 0.0
        %2373 = vmatprep.subr.mxu0 0.0
        %2374 = vmatpush1.msra.mxu0 0.0
        %2375 = vmatprep.subr.mxu0 0.0
        %2376 = vmatpush1.msra.mxu0 0.0
        %2377 = vmatprep.subr.mxu0 0.0
        %2378 = vmatpush1.msra.mxu0 0.0
        %2379 = vmatprep.subr.mxu0 0.0
        %2380 = vmatpush1.msra.mxu0 0.0
        %2381 = vmatprep.mubr.f32.mxu0 0.0
        %2382 = vmatmul.mubr.f32.gmra.mrb[0].mxu0 %v2315
        %v2383 = vpop.f32.mrb[0].mxu0
        %v2384 = vadd.f32 0.0, %v2383
        %v2385 = vpop.f32.mrb[0].mxu0
        %2386 = vdwg.mxu0
        %v2387 = vadd.f32 %v1052, %v2384
        %s2388 = scalar_lea.vmem %s3, 1
        %v2389 = vld [vmem:[%s2388] sm:$0x1]
        %s2390 = scalar_lea.vmem %s4, 1
        %v2391 = vld [vmem:[%s2390] sm:$0x1]
        %v2392 = vsel %vm1055, %v2387, 0.0
        %2393 = vadd.xlane.f32.xlu0 %v2392
        %v2394 = vpop.xlane.xlu0 %2393
        %v2395 = vmul.f32 %v2394, %v1059
        %v2396 = vsub.f32 %v2387, %v2395
        %v2397 = vmul.f32 %v2396, %v2396
        %v2398 = vsel %vm1055, %v2397, 0.0
        %2399 = vadd.xlane.f32.xlu0 %v2398
        %v2400 = vpop.xlane.xlu0 %2399
        %v2401 = vmul.f32 %v2400, %v1059
        %v2402 = vadd.f32 %v2401, 1e-05
        %v2403 = vrsqrt.pop %v2402
        %v2404 = vmul.f32 %v2396, %v2403
        %v2406 = vlaneseq
        %v2407 = vshrl.u32 %v2406, 7
        %v2408 = vsub.s32 0, %v2407
        %v2409 = vrot.slane %v2389, %v2408
        %v2411 = vmul.f32 %v2404, %v2409
        %v2413 = vlaneseq
        %v2414 = vshrl.u32 %v2413, 7
        %v2415 = vsub.s32 0, %v2414
        %v2416 = vrot.slane %v2391, %v2415
        %v2418 = vadd.f32 %v2411, %v2416
        %s2419 = scalar_lea.vmem %s5, 32
        %v2420 = vld [vmem:[%s2419] sm:$0xff]
        %v2421 = vld [vmem:[%s2419 + $0x8] sm:$0xff]
        %v2422 = vld [vmem:[%s2419 + $0x10] sm:$0xff]
        %v2423 = vld [vmem:[%s2419 + $0x18] sm:$0xff]
        %v2425 = vsel %vm1055, %v2418, 0
        %2427 = vmatprep.subr.mxu0 0.0
        %2428 = vmatpush1.msra.mxu0 %v2420
        %2429 = vmatprep.subr.mxu0 0.0
        %2430 = vmatpush1.msra.mxu0 %v2421
        %2431 = vmatprep.subr.mxu0 0.0
        %2432 = vmatpush1.msra.mxu0 %v2422
        %2433 = vmatprep.subr.mxu0 0.0
        %2434 = vmatpush1.msra.mxu0 %v2423
        %2435 = vmatprep.subr.mxu0 0.0
        %2436 = vmatpush1.msra.mxu0 0.0
        %2437 = vmatprep.subr.mxu0 0.0
        %2438 = vmatpush1.msra.mxu0 0.0
        %2439 = vmatprep.subr.mxu0 0.0
        %2440 = vmatpush1.msra.mxu0 0.0
        %2441 = vmatprep.subr.mxu0 0.0
        %2442 = vmatpush1.msra.mxu0 0.0
        %2443 = vmatprep.subr.mxu0 0.0
        %2444 = vmatpush1.msra.mxu0 0.0
        %2445 = vmatprep.subr.mxu0 0.0
        %2446 = vmatpush1.msra.mxu0 0.0
        %2447 = vmatprep.subr.mxu0 0.0
        %2448 = vmatpush1.msra.mxu0 0.0
        %2449 = vmatprep.subr.mxu0 0.0
        %2450 = vmatpush1.msra.mxu0 0.0
        %2451 = vmatprep.subr.mxu0 0.0
        %2452 = vmatpush1.msra.mxu0 0.0
        %2453 = vmatprep.subr.mxu0 0.0
        %2454 = vmatpush1.msra.mxu0 0.0
        %2455 = vmatprep.subr.mxu0 0.0
        %2456 = vmatpush1.msra.mxu0 0.0
        %2457 = vmatprep.subr.mxu0 0.0
        %2458 = vmatpush1.msra.mxu0 0.0
        %2459 = vmatprep.subr.mxu0 0.0
        %2460 = vmatpush1.msra.mxu0 0.0
        %2461 = vmatprep.subr.mxu0 0.0
        %2462 = vmatpush1.msra.mxu0 0.0
        %2463 = vmatprep.subr.mxu0 0.0
        %2464 = vmatpush1.msra.mxu0 0.0
        %2465 = vmatprep.subr.mxu0 0.0
        %2466 = vmatpush1.msra.mxu0 0.0
        %2467 = vmatprep.subr.mxu0 0.0
        %2468 = vmatpush1.msra.mxu0 0.0
        %2469 = vmatprep.subr.mxu0 0.0
        %2470 = vmatpush1.msra.mxu0 0.0
        %2471 = vmatprep.subr.mxu0 0.0
        %2472 = vmatpush1.msra.mxu0 0.0
        %2473 = vmatprep.subr.mxu0 0.0
        %2474 = vmatpush1.msra.mxu0 0.0
        %2475 = vmatprep.subr.mxu0 0.0
        %2476 = vmatpush1.msra.mxu0 0.0
        %2477 = vmatprep.subr.mxu0 0.0
        %2478 = vmatpush1.msra.mxu0 0.0
        %2479 = vmatprep.subr.mxu0 0.0
        %2480 = vmatpush1.msra.mxu0 0.0
        %2481 = vmatprep.subr.mxu0 0.0
        %2482 = vmatpush1.msra.mxu0 0.0
        %2483 = vmatprep.subr.mxu0 0.0
        %2484 = vmatpush1.msra.mxu0 0.0
        %2485 = vmatprep.subr.mxu0 0.0
        %2486 = vmatpush1.msra.mxu0 0.0
        %2487 = vmatprep.subr.mxu0 0.0
        %2488 = vmatpush1.msra.mxu0 0.0
        %2489 = vmatprep.subr.mxu0 0.0
        %2490 = vmatpush1.msra.mxu0 0.0
        %2491 = vmatprep.mubr.f32.mxu0 0.0
        %2492 = vmatmul.mubr.f32.gmra.mrb[0].mxu0 %v2425
        %v2493 = vpop.f32.mrb[0].mxu0
        %v2494 = vadd.f32 0.0, %v2493
        %v2495 = vpop.f32.mrb[0].mxu0
        %2496 = vdwg.mxu0
        %s2497 = scalar_lea.vmem %s6, 32
        %v2498 = vld [vmem:[%s2497] sm:$0xff]
        %v2499 = vld [vmem:[%s2497 + $0x8] sm:$0xff]
        %v2500 = vld [vmem:[%s2497 + $0x10] sm:$0xff]
        %v2501 = vld [vmem:[%s2497 + $0x18] sm:$0xff]
        %2502 = vmatprep.subr.mxu0 0.0
        %2503 = vmatpush1.msra.mxu0 %v2498
        %2504 = vmatprep.subr.mxu0 0.0
        %2505 = vmatpush1.msra.mxu0 %v2499
        %2506 = vmatprep.subr.mxu0 0.0
        %2507 = vmatpush1.msra.mxu0 %v2500
        %2508 = vmatprep.subr.mxu0 0.0
        %2509 = vmatpush1.msra.mxu0 %v2501
        %2510 = vmatprep.subr.mxu0 0.0
        %2511 = vmatpush1.msra.mxu0 0.0
        %2512 = vmatprep.subr.mxu0 0.0
        %2513 = vmatpush1.msra.mxu0 0.0
        %2514 = vmatprep.subr.mxu0 0.0
        %2515 = vmatpush1.msra.mxu0 0.0
        %2516 = vmatprep.subr.mxu0 0.0
        %2517 = vmatpush1.msra.mxu0 0.0
        %2518 = vmatprep.subr.mxu0 0.0
        %2519 = vmatpush1.msra.mxu0 0.0
        %2520 = vmatprep.subr.mxu0 0.0
        %2521 = vmatpush1.msra.mxu0 0.0
        %2522 = vmatprep.subr.mxu0 0.0
        %2523 = vmatpush1.msra.mxu0 0.0
        %2524 = vmatprep.subr.mxu0 0.0
        %2525 = vmatpush1.msra.mxu0 0.0
        %2526 = vmatprep.subr.mxu0 0.0
        %2527 = vmatpush1.msra.mxu0 0.0
        %2528 = vmatprep.subr.mxu0 0.0
        %2529 = vmatpush1.msra.mxu0 0.0
        %2530 = vmatprep.subr.mxu0 0.0
        %2531 = vmatpush1.msra.mxu0 0.0
        %2532 = vmatprep.subr.mxu0 0.0
        %2533 = vmatpush1.msra.mxu0 0.0
        %2534 = vmatprep.subr.mxu0 0.0
        %2535 = vmatpush1.msra.mxu0 0.0
        %2536 = vmatprep.subr.mxu0 0.0
        %2537 = vmatpush1.msra.mxu0 0.0
        %2538 = vmatprep.subr.mxu0 0.0
        %2539 = vmatpush1.msra.mxu0 0.0
        %2540 = vmatprep.subr.mxu0 0.0
        %2541 = vmatpush1.msra.mxu0 0.0
        %2542 = vmatprep.subr.mxu0 0.0
        %2543 = vmatpush1.msra.mxu0 0.0
        %2544 = vmatprep.subr.mxu0 0.0
        %2545 = vmatpush1.msra.mxu0 0.0
        %2546 = vmatprep.subr.mxu0 0.0
        %2547 = vmatpush1.msra.mxu0 0.0
        %2548 = vmatprep.subr.mxu0 0.0
        %2549 = vmatpush1.msra.mxu0 0.0
        %2550 = vmatprep.subr.mxu0 0.0
        %2551 = vmatpush1.msra.mxu0 0.0
        %2552 = vmatprep.subr.mxu0 0.0
        %2553 = vmatpush1.msra.mxu0 0.0
        %2554 = vmatprep.subr.mxu0 0.0
        %2555 = vmatpush1.msra.mxu0 0.0
        %2556 = vmatprep.subr.mxu0 0.0
        %2557 = vmatpush1.msra.mxu0 0.0
        %2558 = vmatprep.subr.mxu0 0.0
        %2559 = vmatpush1.msra.mxu0 0.0
        %2560 = vmatprep.subr.mxu0 0.0
        %2561 = vmatpush1.msra.mxu0 0.0
        %2562 = vmatprep.subr.mxu0 0.0
        %2563 = vmatpush1.msra.mxu0 0.0
        %2564 = vmatprep.subr.mxu0 0.0
        %2565 = vmatpush1.msra.mxu0 0.0
        %2566 = vmatprep.mubr.f32.mxu0 0.0
        %2567 = vmatmul.mubr.f32.gmra.mrb[0].mxu0 %v2425
        %v2568 = vpop.f32.mrb[0].mxu0
        %v2569 = vadd.f32 0.0, %v2568
        %v2570 = vpop.f32.mrb[0].mxu0
        %2571 = vdwg.mxu0
        %s2572 = scalar_lea.vmem %s7, 4
        %v2573 = vld [vmem:[%s2572] sm:$0xf]
        %v2574 = vlaneseq
        %v2575 = vshrl.u32 %v2574, 7
        %v2576 = vsub.s32 3, %v2575
        %v2577 = vrot.slane %v2573, %v2576
        %v2578 = vmul.f32 %v2494, %v2577
        %v2579 = vrot.slane %v2494, 5
        %v2580 = vsel %vm1244, %v2579, 0.0
        %v2581 = vlaneseq
        %v2582 = vshrl.u32 %v2581, 7
        %v2583 = vsub.s32 0, %v2582
        %v2584 = vrot.slane %v2573, %v2583
        %v2585 = vmul.f32 %v2580, %v2584
        %v2586 = vadd.f32 %v2578, %v2585
        %v2587 = vrot.slane %v2494, 6
        %v2588 = vsel %vm1255, %v2587, 0.0
        %v2589 = vlaneseq
        %v2590 = vshrl.u32 %v2589, 7
        %v2591 = vsub.s32 1, %v2590
        %v2592 = vrot.slane %v2573, %v2591
        %v2593 = vmul.f32 %v2588, %v2592
        %v2594 = vadd.f32 %v2586, %v2593
        %v2595 = vrot.slane %v2494, 7
        %v2596 = vsel %vm1266, %v2595, 0.0
        %v2597 = vlaneseq
        %v2598 = vshrl.u32 %v2597, 7
        %v2599 = vsub.s32 2, %v2598
        %v2600 = vrot.slane %v2573, %v2599
        %v2601 = vmul.f32 %v2596, %v2600
        %v2602 = vadd.f32 %v2594, %v2601
        %s2603 = scalar_lea.vmem %s8, 1
        %v2604 = vld [vmem:[%s2603] sm:$0x1]
        %v2606 = vlaneseq
        %v2607 = vshrl.u32 %v2606, 7
        %v2608 = vsub.s32 0, %v2607
        %v2609 = vrot.slane %v2604, %v2608
        %v2611 = vadd.f32 %v2602, %v2609
        %v2612 = vxor.u32 %v2611, 2147483648
        %v2613 = vmul.f32 %v2612, 1.442695
        %v2614 = vpow.pop %v2613
        %v2615 = vadd.f32 %v2614, 1.0
        %v2616 = vrcp.pop %v2615
        %v2617 = vmul.f32 1.0, %v2616
        %v2618 = vmul.f32 %v2611, %v2617
        %s2619 = scalar_lea.vmem %s9, 64
        %v2620 = vld [vmem:[%s2619] sm:$0xff]
        %v2621 = vld [vmem:[%s2619 + $0x8] sm:$0xff]
        %v2622 = vld [vmem:[%s2619 + $0x10] sm:$0xff]
        %v2623 = vld [vmem:[%s2619 + $0x18] sm:$0xff]
        %v2624 = vld [vmem:[%s2619 + $0x20] sm:$0xff]
        %v2625 = vld [vmem:[%s2619 + $0x28] sm:$0xff]
        %v2626 = vld [vmem:[%s2619 + $0x30] sm:$0xff]
        %v2627 = vld [vmem:[%s2619 + $0x38] sm:$0xff]
        %v2629 = vsel %vm1297, %v2618, 0
        %2631 = vmatprep.subr.mxu0 0.0
        %2632 = vmatpush1.msra.mxu0 %v2620
        %2633 = vmatprep.subr.mxu0 0.0
        %2634 = vmatpush1.msra.mxu0 %v2621
        %2635 = vmatprep.subr.mxu0 0.0
        %2636 = vmatpush1.msra.mxu0 %v2622
        %2637 = vmatprep.subr.mxu0 0.0
        %2638 = vmatpush1.msra.mxu0 %v2623
        %2639 = vmatprep.subr.mxu0 0.0
        %2640 = vmatpush1.msra.mxu0 %v2624
        %2641 = vmatprep.subr.mxu0 0.0
        %2642 = vmatpush1.msra.mxu0 %v2625
        %2643 = vmatprep.subr.mxu0 0.0
        %2644 = vmatpush1.msra.mxu0 %v2626
        %2645 = vmatprep.subr.mxu0 0.0
        %2646 = vmatpush1.msra.mxu0 %v2627
        %2647 = vmatprep.subr.mxu0 0.0
        %2648 = vmatpush1.msra.mxu0 0.0
        %2649 = vmatprep.subr.mxu0 0.0
        %2650 = vmatpush1.msra.mxu0 0.0
        %2651 = vmatprep.subr.mxu0 0.0
        %2652 = vmatpush1.msra.mxu0 0.0
        %2653 = vmatprep.subr.mxu0 0.0
        %2654 = vmatpush1.msra.mxu0 0.0
        %2655 = vmatprep.subr.mxu0 0.0
        %2656 = vmatpush1.msra.mxu0 0.0
        %2657 = vmatprep.subr.mxu0 0.0
        %2658 = vmatpush1.msra.mxu0 0.0
        %2659 = vmatprep.subr.mxu0 0.0
        %2660 = vmatpush1.msra.mxu0 0.0
        %2661 = vmatprep.subr.mxu0 0.0
        %2662 = vmatpush1.msra.mxu0 0.0
        %2663 = vmatprep.subr.mxu0 0.0
        %2664 = vmatpush1.msra.mxu0 0.0
        %2665 = vmatprep.subr.mxu0 0.0
        %2666 = vmatpush1.msra.mxu0 0.0
        %2667 = vmatprep.subr.mxu0 0.0
        %2668 = vmatpush1.msra.mxu0 0.0
        %2669 = vmatprep.subr.mxu0 0.0
        %2670 = vmatpush1.msra.mxu0 0.0
        %2671 = vmatprep.subr.mxu0 0.0
        %2672 = vmatpush1.msra.mxu0 0.0
        %2673 = vmatprep.subr.mxu0 0.0
        %2674 = vmatpush1.msra.mxu0 0.0
        %2675 = vmatprep.subr.mxu0 0.0
        %2676 = vmatpush1.msra.mxu0 0.0
        %2677 = vmatprep.subr.mxu0 0.0
        %2678 = vmatpush1.msra.mxu0 0.0
        %2679 = vmatprep.subr.mxu0 0.0
        %2680 = vmatpush1.msra.mxu0 0.0
        %2681 = vmatprep.subr.mxu0 0.0
        %2682 = vmatpush1.msra.mxu0 0.0
        %2683 = vmatprep.subr.mxu0 0.0
        %2684 = vmatpush1.msra.mxu0 0.0
        %2685 = vmatprep.subr.mxu0 0.0
        %2686 = vmatpush1.msra.mxu0 0.0
        %2687 = vmatprep.subr.mxu0 0.0
        %2688 = vmatpush1.msra.mxu0 0.0
        %2689 = vmatprep.subr.mxu0 0.0
        %2690 = vmatpush1.msra.mxu0 0.0
        %2691 = vmatprep.subr.mxu0 0.0
        %2692 = vmatpush1.msra.mxu0 0.0
        %2693 = vmatprep.subr.mxu0 0.0
        %2694 = vmatpush1.msra.mxu0 0.0
        %2695 = vmatprep.mubr.f32.mxu0 0.0
        %2696 = vmatmul.mubr.f32.gmra.mrb[0].mxu0 %v2629
        %v2697 = vpop.f32.mrb[0].mxu0
        %v2698 = vadd.f32 0.0, %v2697
        %v2699 = vpop.f32.mrb[0].mxu0
        %2700 = vdwg.mxu0
        %s2701 = scalar_lea.vmem %s10, 64
        %v2702 = vld [vmem:[%s2701] sm:$0xff]
        %v2703 = vld [vmem:[%s2701 + $0x8] sm:$0xff]
        %v2704 = vld [vmem:[%s2701 + $0x10] sm:$0xff]
        %v2705 = vld [vmem:[%s2701 + $0x18] sm:$0xff]
        %v2706 = vld [vmem:[%s2701 + $0x20] sm:$0xff]
        %v2707 = vld [vmem:[%s2701 + $0x28] sm:$0xff]
        %v2708 = vld [vmem:[%s2701 + $0x30] sm:$0xff]
        %v2709 = vld [vmem:[%s2701 + $0x38] sm:$0xff]
        %2710 = vmatprep.subr.mxu0 0.0
        %2711 = vmatpush1.msra.mxu0 %v2702
        %2712 = vmatprep.subr.mxu0 0.0
        %2713 = vmatpush1.msra.mxu0 %v2703
        %2714 = vmatprep.subr.mxu0 0.0
        %2715 = vmatpush1.msra.mxu0 %v2704
        %2716 = vmatprep.subr.mxu0 0.0
        %2717 = vmatpush1.msra.mxu0 %v2705
        %2718 = vmatprep.subr.mxu0 0.0
        %2719 = vmatpush1.msra.mxu0 %v2706
        %2720 = vmatprep.subr.mxu0 0.0
        %2721 = vmatpush1.msra.mxu0 %v2707
        %2722 = vmatprep.subr.mxu0 0.0
        %2723 = vmatpush1.msra.mxu0 %v2708
        %2724 = vmatprep.subr.mxu0 0.0
        %2725 = vmatpush1.msra.mxu0 %v2709
        %2726 = vmatprep.subr.mxu0 0.0
        %2727 = vmatpush1.msra.mxu0 0.0
        %2728 = vmatprep.subr.mxu0 0.0
        %2729 = vmatpush1.msra.mxu0 0.0
        %2730 = vmatprep.subr.mxu0 0.0
        %2731 = vmatpush1.msra.mxu0 0.0
        %2732 = vmatprep.subr.mxu0 0.0
        %2733 = vmatpush1.msra.mxu0 0.0
        %2734 = vmatprep.subr.mxu0 0.0
        %2735 = vmatpush1.msra.mxu0 0.0
        %2736 = vmatprep.subr.mxu0 0.0
        %2737 = vmatpush1.msra.mxu0 0.0
        %2738 = vmatprep.subr.mxu0 0.0
        %2739 = vmatpush1.msra.mxu0 0.0
        %2740 = vmatprep.subr.mxu0 0.0
        %2741 = vmatpush1.msra.mxu0 0.0
        %2742 = vmatprep.subr.mxu0 0.0
        %2743 = vmatpush1.msra.mxu0 0.0
        %2744 = vmatprep.subr.mxu0 0.0
        %2745 = vmatpush1.msra.mxu0 0.0
        %2746 = vmatprep.subr.mxu0 0.0
        %2747 = vmatpush1.msra.mxu0 0.0
        %2748 = vmatprep.subr.mxu0 0.0
        %2749 = vmatpush1.msra.mxu0 0.0
        %2750 = vmatprep.subr.mxu0 0.0
        %2751 = vmatpush1.msra.mxu0 0.0
        %2752 = vmatprep.subr.mxu0 0.0
        %2753 = vmatpush1.msra.mxu0 0.0
        %2754 = vmatprep.subr.mxu0 0.0
        %2755 = vmatpush1.msra.mxu0 0.0
        %2756 = vmatprep.subr.mxu0 0.0
        %2757 = vmatpush1.msra.mxu0 0.0
        %2758 = vmatprep.subr.mxu0 0.0
        %2759 = vmatpush1.msra.mxu0 0.0
        %2760 = vmatprep.subr.mxu0 0.0
        %2761 = vmatpush1.msra.mxu0 0.0
        %2762 = vmatprep.subr.mxu0 0.0
        %2763 = vmatpush1.msra.mxu0 0.0
        %2764 = vmatprep.subr.mxu0 0.0
        %2765 = vmatpush1.msra.mxu0 0.0
        %2766 = vmatprep.subr.mxu0 0.0
        %2767 = vmatpush1.msra.mxu0 0.0
        %2768 = vmatprep.subr.mxu0 0.0
        %2769 = vmatpush1.msra.mxu0 0.0
        %2770 = vmatprep.subr.mxu0 0.0
        %2771 = vmatpush1.msra.mxu0 0.0
        %2772 = vmatprep.subr.mxu0 0.0
        %2773 = vmatpush1.msra.mxu0 0.0
        %2774 = vmatprep.mubr.f32.mxu0 0.0
        %2775 = vmatmul.mubr.f32.gmra.mrb[0].mxu0 %v2629
        %v2776 = vpop.f32.mrb[0].mxu0
        %v2777 = vadd.f32 0.0, %v2776
        %v2778 = vpop.f32.mrb[0].mxu0
        %2779 = vdwg.mxu0
        %s2780 = scalar_lea.vmem %s11, 64
        %v2781 = vld [vmem:[%s2780] sm:$0xff]
        %v2782 = vld [vmem:[%s2780 + $0x8] sm:$0xff]
        %v2783 = vld [vmem:[%s2780 + $0x10] sm:$0xff]
        %v2784 = vld [vmem:[%s2780 + $0x18] sm:$0xff]
        %v2785 = vld [vmem:[%s2780 + $0x20] sm:$0xff]
        %v2786 = vld [vmem:[%s2780 + $0x28] sm:$0xff]
        %v2787 = vld [vmem:[%s2780 + $0x30] sm:$0xff]
        %v2788 = vld [vmem:[%s2780 + $0x38] sm:$0xff]
        %s2789 = scalar_lea.vmem %s12, 1
        %v2790 = vld [vmem:[%s2789] sm:$0x1]
        %v2792 = vlaneseq
        %v2793 = vshrl.u32 %v2792, 7
        %v2794 = vsub.s32 0, %v2793
        %v2795 = vrot.slane %v2790, %v2794
        %2797 = vmatprep.subr.mxu0 0.0
        %2798 = vmatpush1.msra.mxu0 %v2781
        %2799 = vmatprep.subr.mxu0 0.0
        %2800 = vmatpush1.msra.mxu0 %v2782
        %2801 = vmatprep.subr.mxu0 0.0
        %2802 = vmatpush1.msra.mxu0 %v2783
        %2803 = vmatprep.subr.mxu0 0.0
        %2804 = vmatpush1.msra.mxu0 %v2784
        %2805 = vmatprep.subr.mxu0 0.0
        %2806 = vmatpush1.msra.mxu0 %v2785
        %2807 = vmatprep.subr.mxu0 0.0
        %2808 = vmatpush1.msra.mxu0 %v2786
        %2809 = vmatprep.subr.mxu0 0.0
        %2810 = vmatpush1.msra.mxu0 %v2787
        %2811 = vmatprep.subr.mxu0 0.0
        %2812 = vmatpush1.msra.mxu0 %v2788
        %2813 = vmatprep.subr.mxu0 0.0
        %2814 = vmatpush1.msra.mxu0 0.0
        %2815 = vmatprep.subr.mxu0 0.0
        %2816 = vmatpush1.msra.mxu0 0.0
        %2817 = vmatprep.subr.mxu0 0.0
        %2818 = vmatpush1.msra.mxu0 0.0
        %2819 = vmatprep.subr.mxu0 0.0
        %2820 = vmatpush1.msra.mxu0 0.0
        %2821 = vmatprep.subr.mxu0 0.0
        %2822 = vmatpush1.msra.mxu0 0.0
        %2823 = vmatprep.subr.mxu0 0.0
        %2824 = vmatpush1.msra.mxu0 0.0
        %2825 = vmatprep.subr.mxu0 0.0
        %2826 = vmatpush1.msra.mxu0 0.0
        %2827 = vmatprep.subr.mxu0 0.0
        %2828 = vmatpush1.msra.mxu0 0.0
        %2829 = vmatprep.subr.mxu0 0.0
        %2830 = vmatpush1.msra.mxu0 0.0
        %2831 = vmatprep.subr.mxu0 0.0
        %2832 = vmatpush1.msra.mxu0 0.0
        %2833 = vmatprep.subr.mxu0 0.0
        %2834 = vmatpush1.msra.mxu0 0.0
        %2835 = vmatprep.subr.mxu0 0.0
        %2836 = vmatpush1.msra.mxu0 0.0
        %2837 = vmatprep.subr.mxu0 0.0
        %2838 = vmatpush1.msra.mxu0 0.0
        %2839 = vmatprep.subr.mxu0 0.0
        %2840 = vmatpush1.msra.mxu0 0.0
        %2841 = vmatprep.subr.mxu0 0.0
        %2842 = vmatpush1.msra.mxu0 0.0
        %2843 = vmatprep.subr.mxu0 0.0
        %2844 = vmatpush1.msra.mxu0 0.0
        %2845 = vmatprep.subr.mxu0 0.0
        %2846 = vmatpush1.msra.mxu0 0.0
        %2847 = vmatprep.subr.mxu0 0.0
        %2848 = vmatpush1.msra.mxu0 0.0
        %2849 = vmatprep.subr.mxu0 0.0
        %2850 = vmatpush1.msra.mxu0 0.0
        %2851 = vmatprep.subr.mxu0 0.0
        %2852 = vmatpush1.msra.mxu0 0.0
        %2853 = vmatprep.subr.mxu0 0.0
        %2854 = vmatpush1.msra.mxu0 0.0
        %2855 = vmatprep.subr.mxu0 0.0
        %2856 = vmatpush1.msra.mxu0 0.0
        %2857 = vmatprep.subr.mxu0 0.0
        %2858 = vmatpush1.msra.mxu0 0.0
        %2859 = vmatprep.subr.mxu0 0.0
        %2860 = vmatpush1.msra.mxu0 0.0
        %2861 = vmatprep.mubr.f32.mxu0 0.0
        %2862 = vmatmul.mubr.f32.gmra.mrb[0].mxu0 %v2629
        %v2863 = vpop.f32.mrb[0].mxu0
        %v2864 = vadd.f32 %v2795, %v2863
        %v2865 = vpop.f32.mrb[0].mxu0
        %2866 = vdwg.mxu0
        %v2867 = vmax.f32 %v2864, 0.0
        %v2868 = vand.u32 2147483647, %v2864
        %v2869 = vsub.f32 0.0, %v2868
        %v2870 = vmul.f32 %v2869, 1.442695
        %v2871 = vpow.pop %v2870
        %v2872 = vadd.f32 %v2871, 1.0
        %v2873 = vlog2.pop %v2872
        %v2874 = vmul.f32 %v2873, 0.6931472
        %v2875 = vmul.f32 -0.5, %v2871
        %v2876 = vadd.f32 %v2875, 1.0
        %v2877 = vmul.f32 %v2876, %v2871
        %v2878 = vand.u32 2147483647, %v2871
        %vm2879 = vcmp.lt.f32.partialorder %v2878, 0.0004427343
        %v2880 = vsel %vm2879, %v2877, %v2874
        %v2881 = vadd.f32 %v2867, %v2880
        %s2882 = scalar_lea.vmem %s13, 16
        %v2883 = vld [vmem:[%s2882] sm:$0xff]
        %v2884 = vld [vmem:[%s2882 + $0x8] sm:$0xff]
        %v2885 = vmul.f32 %v2883, 1.442695
        %v2886 = vpow.pop %v2885
        %v2887 = vmul.f32 %v2884, 1.442695
        %v2888 = vpow.pop %v2887
        %v2889 = vsub.f32 0.0, %v2886
        %v2890 = vsub.f32 0.0, %v2888
        %v2892 = vcombine.high %v2881, %v2881
        %v2894 = vunpack.c.l.s4 1966171168
        %v2895 = vunpack.c.0.s8 %v2894
        %v2896 = vlaneseq
        %v2897 = vshrl.u32 %v2896, 7
        %v2898 = vsub.s32 %v2895, %v2897
        %v2899 = vrot.slane %v2881, %v2898
        %v2901 = vunpack.c.l.s4 1966171168
        %v2902 = vunpack.c.0.s8 %v2901
        %v2903 = vlaneseq
        %v2904 = vshrl.u32 %v2903, 7
        %v2905 = vsub.s32 %v2902, %v2904
        %v2906 = vrot.slane %v2892, %v2905
        %v2907 = vcombine.high %v2899, %v2899
        %v2908 = vcombine.high %v2906, %v2906
        %v2910 = vunpack.c.l.s4 1966171168
        %v2911 = vunpack.c.0.s8 %v2910
        %v2912 = vlaneseq
        %v2913 = vshrl.u32 %v2912, 7
        %v2914 = vsub.s32 %v2911, %v2913
        %v2915 = vrot.slane %v2899, %v2914
        %v2917 = vunpack.c.l.s4 1966171168
        %v2918 = vunpack.c.0.s8 %v2917
        %v2919 = vlaneseq
        %v2920 = vshrl.u32 %v2919, 7
        %v2921 = vsub.s32 %v2918, %v2920
        %v2922 = vrot.slane %v2906, %v2921
        %v2924 = vunpack.c.l.s4 1966171168
        %v2925 = vunpack.c.0.s8 %v2924
        %v2926 = vlaneseq
        %v2927 = vshrl.u32 %v2926, 7
        %v2928 = vsub.s32 %v2925, %v2927
        %v2929 = vrot.slane %v2907, %v2928
        %v2931 = vunpack.c.l.s4 1966171168
        %v2932 = vunpack.c.0.s8 %v2931
        %v2933 = vlaneseq
        %v2934 = vshrl.u32 %v2933, 7
        %v2935 = vsub.s32 %v2932, %v2934
        %v2936 = vrot.slane %v2908, %v2935
        %v2937 = vcombine.high %v2915, %v2915
        %v2938 = vcombine.high %v2922, %v2922
        %v2939 = vcombine.high %v2929, %v2929
        %v2940 = vcombine.high %v2936, %v2936
        %v2941 = vlaneseq
        %v2942 = vshrl.u32 %v2941, 7
        %v2943 = vsub.s32 0, %v2942
        %v2944 = vrot.slane %v2915, %v2943
        %v2945 = vlaneseq
        %v2946 = vshrl.u32 %v2945, 7
        %v2947 = vsub.s32 0, %v2946
        %v2948 = vrot.slane %v2929, %v2947
        %v2949 = vlaneseq
        %v2950 = vshrl.u32 %v2949, 7
        %v2951 = vsub.s32 0, %v2950
        %v2952 = vrot.slane %v2937, %v2951
        %v2953 = vlaneseq
        %v2954 = vshrl.u32 %v2953, 7
        %v2955 = vsub.s32 0, %v2954
        %v2956 = vrot.slane %v2939, %v2955
        %v2957 = vlaneseq
        %v2958 = vshrl.u32 %v2957, 7
        %v2959 = vsub.s32 0, %v2958
        %v2960 = vrot.slane %v2922, %v2959
        %v2961 = vlaneseq
        %v2962 = vshrl.u32 %v2961, 7
        %v2963 = vsub.s32 0, %v2962
        %v2964 = vrot.slane %v2936, %v2963
        %v2965 = vlaneseq
        %v2966 = vshrl.u32 %v2965, 7
        %v2967 = vsub.s32 0, %v2966
        %v2968 = vrot.slane %v2938, %v2967
        %v2969 = vlaneseq
        %v2970 = vshrl.u32 %v2969, 7
        %v2971 = vsub.s32 0, %v2970
        %v2972 = vrot.slane %v2940, %v2971
        %v2981 = vmul.f32 %v2944, %v2889
        %v2982 = vmul.f32 %v2944, %v2890
        %v2983 = vmul.f32 %v2948, %v2889
        %v2984 = vmul.f32 %v2948, %v2890
        %v2985 = vmul.f32 %v2952, %v2889
        %v2986 = vmul.f32 %v2952, %v2890
        %v2987 = vmul.f32 %v2956, %v2889
        %v2988 = vmul.f32 %v2956, %v2890
        %v2989 = vmul.f32 %v2960, %v2889
        %v2990 = vmul.f32 %v2960, %v2890
        %v2991 = vmul.f32 %v2964, %v2889
        %v2992 = vmul.f32 %v2964, %v2890
        %v2993 = vmul.f32 %v2968, %v2889
        %v2994 = vmul.f32 %v2968, %v2890
        %v2995 = vmul.f32 %v2972, %v2889
        %v2996 = vmul.f32 %v2972, %v2890
        %v2997 = vmul.f32 %v2981, 1.442695
        %v2998 = vpow.pop %v2997
        %v2999 = vmul.f32 %v2982, 1.442695
        %v3000 = vpow.pop %v2999
        %v3001 = vmul.f32 %v2983, 1.442695
        %v3002 = vpow.pop %v3001
        %v3003 = vmul.f32 %v2984, 1.442695
        %v3004 = vpow.pop %v3003
        %v3005 = vmul.f32 %v2985, 1.442695
        %v3006 = vpow.pop %v3005
        %v3007 = vmul.f32 %v2986, 1.442695
        %v3008 = vpow.pop %v3007
        %v3009 = vmul.f32 %v2987, 1.442695
        %v3010 = vpow.pop %v3009
        %v3011 = vmul.f32 %v2988, 1.442695
        %v3012 = vpow.pop %v3011
        %v3013 = vmul.f32 %v2989, 1.442695
        %v3014 = vpow.pop %v3013
        %v3015 = vmul.f32 %v2990, 1.442695
        %v3016 = vpow.pop %v3015
        %v3017 = vmul.f32 %v2991, 1.442695
        %v3018 = vpow.pop %v3017
        %v3019 = vmul.f32 %v2992, 1.442695
        %v3020 = vpow.pop %v3019
        %v3021 = vmul.f32 %v2993, 1.442695
        %v3022 = vpow.pop %v3021
        %v3023 = vmul.f32 %v2994, 1.442695
        %v3024 = vpow.pop %v3023
        %v3025 = vmul.f32 %v2995, 1.442695
        %v3026 = vpow.pop %v3025
        %v3027 = vmul.f32 %v2996, 1.442695
        %v3028 = vpow.pop %v3027
        %3029 = vst.msk [vmem:[#allocation2] sm:$0xff] %vm1297, %v2998
        %3030 = vst.msk [vmem:[#allocation2 + $0x8] sm:$0xff] %vm1297, %v3000
        %3031 = vst.msk [vmem:[#allocation2 + $0x10] sm:$0xff] %vm1297, %v3002
        %3032 = vst.msk [vmem:[#allocation2 + $0x18] sm:$0xff] %vm1297, %v3004
        %3033 = vst.msk [vmem:[#allocation2 + $0x20] sm:$0xff] %vm1297, %v3006
        %3034 = vst.msk [vmem:[#allocation2 + $0x28] sm:$0xff] %vm1297, %v3008
        %3035 = vst.msk [vmem:[#allocation2 + $0x30] sm:$0xff] %vm1297, %v3010
        %3036 = vst.msk [vmem:[#allocation2 + $0x38] sm:$0xff] %vm1297, %v3012
        %3037 = vst.msk [vmem:[#allocation2 + $0x40] sm:$0xff] %vm1297, %v3014
        %3038 = vst.msk [vmem:[#allocation2 + $0x48] sm:$0xff] %vm1297, %v3016
        %3039 = vst.msk [vmem:[#allocation2 + $0x50] sm:$0xff] %vm1297, %v3018
        %3040 = vst.msk [vmem:[#allocation2 + $0x58] sm:$0xff] %vm1297, %v3020
        %3041 = vst.msk [vmem:[#allocation2 + $0x60] sm:$0xff] %vm1297, %v3022
        %3042 = vst.msk [vmem:[#allocation2 + $0x68] sm:$0xff] %vm1297, %v3024
        %3043 = vst.msk [vmem:[#allocation2 + $0x70] sm:$0xff] %vm1297, %v3026
        %3044 = vst.msk [vmem:[#allocation2 + $0x78] sm:$0xff] %vm1297, %v3028
        %v3045 = vlaneseq
        %v3046 = vshrl.u32 %v3045, 7
        %v3047 = vsub.s32 0, %v3046
        %v3048 = vrot.slane %v2698, %v3047
        %3050 = vbcast.lane.b32.xlu0 %v3048, 256
        %v3051 = vpop.permute.xlu0 %3050
        %s3053 = sor.u32 256, 8
        %3054 = vbcast.lane.b32.xlu0 %v3048, %s3053
        %v3055 = vpop.permute.xlu0 %3054
        %v3056 = vlaneseq
        %v3057 = vshrl.u32 %v3056, 7
        %v3058 = vsub.s32 1, %v3057
        %v3059 = vrot.slane %v2698, %v3058
        %3061 = vbcast.lane.b32.xlu0 %v3059, 256
        %v3062 = vpop.permute.xlu0 %3061
        %s3064 = sor.u32 256, 8
        %3065 = vbcast.lane.b32.xlu0 %v3059, %s3064
        %v3066 = vpop.permute.xlu0 %3065
        %v3067 = vlaneseq
        %v3068 = vshrl.u32 %v3067, 7
        %v3069 = vsub.s32 2, %v3068
        %v3070 = vrot.slane %v2698, %v3069
        %3072 = vbcast.lane.b32.xlu0 %v3070, 256
        %v3073 = vpop.permute.xlu0 %3072
        %s3075 = sor.u32 256, 8
        %3076 = vbcast.lane.b32.xlu0 %v3070, %s3075
        %v3077 = vpop.permute.xlu0 %3076
        %v3078 = vlaneseq
        %v3079 = vshrl.u32 %v3078, 7
        %v3080 = vsub.s32 3, %v3079
        %v3081 = vrot.slane %v2698, %v3080
        %3083 = vbcast.lane.b32.xlu0 %v3081, 256
        %v3084 = vpop.permute.xlu0 %3083
        %s3086 = sor.u32 256, 8
        %3087 = vbcast.lane.b32.xlu0 %v3081, %s3086
        %v3088 = vpop.permute.xlu0 %3087
        %v3089 = vlaneseq
        %v3090 = vshrl.u32 %v3089, 7
        %v3091 = vsub.s32 4, %v3090
        %v3092 = vrot.slane %v2698, %v3091
        %3094 = vbcast.lane.b32.xlu0 %v3092, 256
        %v3095 = vpop.permute.xlu0 %3094
        %s3097 = sor.u32 256, 8
        %3098 = vbcast.lane.b32.xlu0 %v3092, %s3097
        %v3099 = vpop.permute.xlu0 %3098
        %v3100 = vlaneseq
        %v3101 = vshrl.u32 %v3100, 7
        %v3102 = vsub.s32 5, %v3101
        %v3103 = vrot.slane %v2698, %v3102
        %3105 = vbcast.lane.b32.xlu0 %v3103, 256
        %v3106 = vpop.permute.xlu0 %3105
        %s3108 = sor.u32 256, 8
        %3109 = vbcast.lane.b32.xlu0 %v3103, %s3108
        %v3110 = vpop.permute.xlu0 %3109
        %v3111 = vlaneseq
        %v3112 = vshrl.u32 %v3111, 7
        %v3113 = vsub.s32 6, %v3112
        %v3114 = vrot.slane %v2698, %v3113
        %3116 = vbcast.lane.b32.xlu0 %v3114, 256
        %v3117 = vpop.permute.xlu0 %3116
        %s3119 = sor.u32 256, 8
        %3120 = vbcast.lane.b32.xlu0 %v3114, %s3119
        %v3121 = vpop.permute.xlu0 %3120
        %v3122 = vlaneseq
        %v3123 = vshrl.u32 %v3122, 7
        %v3124 = vsub.s32 7, %v3123
        %v3125 = vrot.slane %v2698, %v3124
        %3127 = vbcast.lane.b32.xlu0 %v3125, 256
        %v3128 = vpop.permute.xlu0 %3127
        %s3130 = sor.u32 256, 8
        %3131 = vbcast.lane.b32.xlu0 %v3125, %s3130
        %v3132 = vpop.permute.xlu0 %3131
        %v3133 = vmul.f32 %v2881, %v2618
        %v3135 = vcombine.high %v3133, %v3133
        %v3137 = vunpack.c.l.s4 1966171168
        %v3138 = vunpack.c.0.s8 %v3137
        %v3139 = vlaneseq
        %v3140 = vshrl.u32 %v3139, 7
        %v3141 = vsub.s32 %v3138, %v3140
        %v3142 = vrot.slane %v3133, %v3141
        %v3144 = vunpack.c.l.s4 1966171168
        %v3145 = vunpack.c.0.s8 %v3144
        %v3146 = vlaneseq
        %v3147 = vshrl.u32 %v3146, 7
        %v3148 = vsub.s32 %v3145, %v3147
        %v3149 = vrot.slane %v3135, %v3148
        %v3150 = vcombine.high %v3142, %v3142
        %v3151 = vcombine.high %v3149, %v3149
        %v3153 = vunpack.c.l.s4 1966171168
        %v3154 = vunpack.c.0.s8 %v3153
        %v3155 = vlaneseq
        %v3156 = vshrl.u32 %v3155, 7
        %v3157 = vsub.s32 %v3154, %v3156
        %v3158 = vrot.slane %v3142, %v3157
        %v3160 = vunpack.c.l.s4 1966171168
        %v3161 = vunpack.c.0.s8 %v3160
        %v3162 = vlaneseq
        %v3163 = vshrl.u32 %v3162, 7
        %v3164 = vsub.s32 %v3161, %v3163
        %v3165 = vrot.slane %v3149, %v3164
        %v3167 = vunpack.c.l.s4 1966171168
        %v3168 = vunpack.c.0.s8 %v3167
        %v3169 = vlaneseq
        %v3170 = vshrl.u32 %v3169, 7
        %v3171 = vsub.s32 %v3168, %v3170
        %v3172 = vrot.slane %v3150, %v3171
        %v3174 = vunpack.c.l.s4 1966171168
        %v3175 = vunpack.c.0.s8 %v3174
        %v3176 = vlaneseq
        %v3177 = vshrl.u32 %v3176, 7
        %v3178 = vsub.s32 %v3175, %v3177
        %v3179 = vrot.slane %v3151, %v3178
        %v3180 = vcombine.high %v3158, %v3158
        %v3181 = vcombine.high %v3165, %v3165
        %v3182 = vcombine.high %v3172, %v3172
        %v3183 = vcombine.high %v3179, %v3179
        %v3184 = vlaneseq
        %v3185 = vshrl.u32 %v3184, 7
        %v3186 = vsub.s32 0, %v3185
        %v3187 = vrot.slane %v3158, %v3186
        %v3188 = vlaneseq
        %v3189 = vshrl.u32 %v3188, 7
        %v3190 = vsub.s32 0, %v3189
        %v3191 = vrot.slane %v3172, %v3190
        %v3192 = vlaneseq
        %v3193 = vshrl.u32 %v3192, 7
        %v3194 = vsub.s32 0, %v3193
        %v3195 = vrot.slane %v3180, %v3194
        %v3196 = vlaneseq
        %v3197 = vshrl.u32 %v3196, 7
        %v3198 = vsub.s32 0, %v3197
        %v3199 = vrot.slane %v3182, %v3198
        %v3200 = vlaneseq
        %v3201 = vshrl.u32 %v3200, 7
        %v3202 = vsub.s32 0, %v3201
        %v3203 = vrot.slane %v3165, %v3202
        %v3204 = vlaneseq
        %v3205 = vshrl.u32 %v3204, 7
        %v3206 = vsub.s32 0, %v3205
        %v3207 = vrot.slane %v3179, %v3206
        %v3208 = vlaneseq
        %v3209 = vshrl.u32 %v3208, 7
        %v3210 = vsub.s32 0, %v3209
        %v3211 = vrot.slane %v3181, %v3210
        %v3212 = vlaneseq
        %v3213 = vshrl.u32 %v3212, 7
        %v3214 = vsub.s32 0, %v3213
        %v3215 = vrot.slane %v3183, %v3214
        %v3224 = vmul.f32 %v3051, %v3187
        %v3225 = vmul.f32 %v3055, %v3187
        %v3226 = vmul.f32 %v3062, %v3191
        %v3227 = vmul.f32 %v3066, %v3191
        %v3228 = vmul.f32 %v3073, %v3195
        %v3229 = vmul.f32 %v3077, %v3195
        %v3230 = vmul.f32 %v3084, %v3199
        %v3231 = vmul.f32 %v3088, %v3199
        %v3232 = vmul.f32 %v3095, %v3203
        %v3233 = vmul.f32 %v3099, %v3203
        %v3234 = vmul.f32 %v3106, %v3207
        %v3235 = vmul.f32 %v3110, %v3207
        %v3236 = vmul.f32 %v3117, %v3211
        %v3237 = vmul.f32 %v3121, %v3211
        %v3238 = vmul.f32 %v3128, %v3215
        %v3239 = vmul.f32 %v3132, %v3215
        %3240 = vst.msk [vmem:[#allocation3] sm:$0xff] %vm1297, %v3224
        %3241 = vst.msk [vmem:[#allocation3 + $0x8] sm:$0xff] %vm1297, %v3225
        %3242 = vst.msk [vmem:[#allocation3 + $0x10] sm:$0xff] %vm1297, %v3226
        %3243 = vst.msk [vmem:[#allocation3 + $0x18] sm:$0xff] %vm1297, %v3227
        %3244 = vst.msk [vmem:[#allocation3 + $0x20] sm:$0xff] %vm1297, %v3228
        %3245 = vst.msk [vmem:[#allocation3 + $0x28] sm:$0xff] %vm1297, %v3229
        %3246 = vst.msk [vmem:[#allocation3 + $0x30] sm:$0xff] %vm1297, %v3230
        %3247 = vst.msk [vmem:[#allocation3 + $0x38] sm:$0xff] %vm1297, %v3231
        %3248 = vst.msk [vmem:[#allocation3 + $0x40] sm:$0xff] %vm1297, %v3232
        %3249 = vst.msk [vmem:[#allocation3 + $0x48] sm:$0xff] %vm1297, %v3233
        %3250 = vst.msk [vmem:[#allocation3 + $0x50] sm:$0xff] %vm1297, %v3234
        %3251 = vst.msk [vmem:[#allocation3 + $0x58] sm:$0xff] %vm1297, %v3235
        %3252 = vst.msk [vmem:[#allocation3 + $0x60] sm:$0xff] %vm1297, %v3236
        %3253 = vst.msk [vmem:[#allocation3 + $0x68] sm:$0xff] %vm1297, %v3237
        %3254 = vst.msk [vmem:[#allocation3 + $0x70] sm:$0xff] %vm1297, %v3238
        %3255 = vst.msk [vmem:[#allocation3 + $0x78] sm:$0xff] %vm1297, %v3239
        %v3256 = vld [vmem:[#allocation2] sm:$0xff]
        %v3257 = vld [vmem:[#allocation2 + $0x8] sm:$0xff]
        %v3258 = vmul.f32 %v3256, 0.0
        %v3259 = vmul.f32 %v3257, 0.0
        %v3260 = vld [vmem:[#allocation3] sm:$0xff]
        %v3261 = vld [vmem:[#allocation3 + $0x8] sm:$0xff]
        %v3262 = vadd.f32 %v3258, %v3260
        %v3263 = vadd.f32 %v3259, %v3261
        %3264 = vst.msk [vmem:[#allocation4] sm:$0xff] %vm1297, %v3262
        %3265 = vst.msk [vmem:[#allocation4 + $0x8] sm:$0xff] %vm1297, %v3263
        %v3266 = vld [vmem:[%s1932] sm:$0xff]
        %v3267 = vld [vmem:[%s1932 + $0x8] sm:$0xff]
        %v3268 = vmul.f32 %v3266, %v3262
        %v3269 = vmul.f32 %v3267, %v3263
        %v3270 = vld [vmem:[%s1937] sm:$0xff]
        %v3271 = vld [vmem:[%s1937 + $0x8] sm:$0xff]
        %v3272 = vadd.f32 %v3268, %v3270
        %v3273 = vadd.f32 %v3269, %v3271
        %3274 = vst.msk [vmem:[%s1942] sm:$0xff] %vm1297, %v3272
        %3275 = vst.msk [vmem:[%s1942 + $0x8] sm:$0xff] %vm1297, %v3273
        %v3276 = vld [vmem:[%s1945] sm:$0xff]
        %v3277 = vld [vmem:[%s1945 + $0x8] sm:$0xff]
        %v3278 = vmul.f32 %v3276, %v3272
        %v3279 = vmul.f32 %v3277, %v3273
        %v3280 = vld [vmem:[%s1950] sm:$0xff]
        %v3281 = vld [vmem:[%s1950 + $0x8] sm:$0xff]
        %v3282 = vadd.f32 %v3278, %v3280
        %v3283 = vadd.f32 %v3279, %v3281
        %3284 = vst.msk [vmem:[%s1955] sm:$0xff] %vm1297, %v3282
        %3285 = vst.msk [vmem:[%s1955 + $0x8] sm:$0xff] %vm1297, %v3283
        %v3286 = vld [vmem:[%s1958] sm:$0xff]
        %v3287 = vld [vmem:[%s1958 + $0x8] sm:$0xff]
        %v3288 = vmul.f32 %v3286, %v3282
        %v3289 = vmul.f32 %v3287, %v3283
        %v3290 = vld [vmem:[%s1963] sm:$0xff]
        %v3291 = vld [vmem:[%s1963 + $0x8] sm:$0xff]
        %v3292 = vadd.f32 %v3288, %v3290
        %v3293 = vadd.f32 %v3289, %v3291
        %3294 = vst.msk [vmem:[%s1968] sm:$0xff] %vm1297, %v3292
        %3295 = vst.msk [vmem:[%s1968 + $0x8] sm:$0xff] %vm1297, %v3293
        %v3296 = vld [vmem:[%s1971] sm:$0xff]
        %v3297 = vld [vmem:[%s1971 + $0x8] sm:$0xff]
        %v3298 = vmul.f32 %v3296, %v3292
        %v3299 = vmul.f32 %v3297, %v3293
        %v3300 = vld [vmem:[%s1976] sm:$0xff]
        %v3301 = vld [vmem:[%s1976 + $0x8] sm:$0xff]
        %v3302 = vadd.f32 %v3298, %v3300
        %v3303 = vadd.f32 %v3299, %v3301
        %3304 = vst.msk [vmem:[%s1981] sm:$0xff] %vm1297, %v3302
        %3305 = vst.msk [vmem:[%s1981 + $0x8] sm:$0xff] %vm1297, %v3303
        %v3306 = vld [vmem:[%s1984] sm:$0xff]
        %v3307 = vld [vmem:[%s1984 + $0x8] sm:$0xff]
        %v3308 = vmul.f32 %v3306, %v3302
        %v3309 = vmul.f32 %v3307, %v3303
        %v3310 = vld [vmem:[%s1989] sm:$0xff]
        %v3311 = vld [vmem:[%s1989 + $0x8] sm:$0xff]
        %v3312 = vadd.f32 %v3308, %v3310
        %v3313 = vadd.f32 %v3309, %v3311
        %3314 = vst.msk [vmem:[%s1994] sm:$0xff] %vm1297, %v3312
        %3315 = vst.msk [vmem:[%s1994 + $0x8] sm:$0xff] %vm1297, %v3313
        %v3316 = vld [vmem:[%s1997] sm:$0xff]
        %v3317 = vld [vmem:[%s1997 + $0x8] sm:$0xff]
        %v3318 = vmul.f32 %v3316, %v3312
        %v3319 = vmul.f32 %v3317, %v3313
        %v3320 = vld [vmem:[%s2002] sm:$0xff]
        %v3321 = vld [vmem:[%s2002 + $0x8] sm:$0xff]
        %v3322 = vadd.f32 %v3318, %v3320
        %v3323 = vadd.f32 %v3319, %v3321
        %3324 = vst.msk [vmem:[%s2007] sm:$0xff] %vm1297, %v3322
        %3325 = vst.msk [vmem:[%s2007 + $0x8] sm:$0xff] %vm1297, %v3323
        %v3326 = vld [vmem:[%s2010] sm:$0xff]
        %v3327 = vld [vmem:[%s2010 + $0x8] sm:$0xff]
        %v3328 = vmul.f32 %v3326, %v3322
        %v3329 = vmul.f32 %v3327, %v3323
        %v3330 = vld [vmem:[%s2015] sm:$0xff]
        %v3331 = vld [vmem:[%s2015 + $0x8] sm:$0xff]
        %v3332 = vadd.f32 %v3328, %v3330
        %v3333 = vadd.f32 %v3329, %v3331
        %3334 = vst.msk [vmem:[%s2020] sm:$0xff] %vm1297, %v3332
        %3335 = vst.msk [vmem:[%s2020 + $0x8] sm:$0xff] %vm1297, %v3333
        %v3336 = vlaneseq
        %v3337 = vshrl.u32 %v3336, 7
        %v3338 = vsub.s32 0, %v3337
        %v3339 = vrot.slane %v2777, %v3338
        %3341 = vbcast.lane.b32.xlu0 %v3339, 256
        %v3342 = vpop.permute.xlu0 %3341
        %s3344 = sor.u32 256, 8
        %3345 = vbcast.lane.b32.xlu0 %v3339, %s3344
        %v3346 = vpop.permute.xlu0 %3345
        %v3347 = vlaneseq
        %v3348 = vshrl.u32 %v3347, 7
        %v3349 = vsub.s32 1, %v3348
        %v3350 = vrot.slane %v2777, %v3349
        %3352 = vbcast.lane.b32.xlu0 %v3350, 256
        %v3353 = vpop.permute.xlu0 %3352
        %s3355 = sor.u32 256, 8
        %3356 = vbcast.lane.b32.xlu0 %v3350, %s3355
        %v3357 = vpop.permute.xlu0 %3356
        %v3358 = vlaneseq
        %v3359 = vshrl.u32 %v3358, 7
        %v3360 = vsub.s32 2, %v3359
        %v3361 = vrot.slane %v2777, %v3360
        %3363 = vbcast.lane.b32.xlu0 %v3361, 256
        %v3364 = vpop.permute.xlu0 %3363
        %s3366 = sor.u32 256, 8
        %3367 = vbcast.lane.b32.xlu0 %v3361, %s3366
        %v3368 = vpop.permute.xlu0 %3367
        %v3369 = vlaneseq
        %v3370 = vshrl.u32 %v3369, 7
        %v3371 = vsub.s32 3, %v3370
        %v3372 = vrot.slane %v2777, %v3371
        %3374 = vbcast.lane.b32.xlu0 %v3372, 256
        %v3375 = vpop.permute.xlu0 %3374
        %s3377 = sor.u32 256, 8
        %3378 = vbcast.lane.b32.xlu0 %v3372, %s3377
        %v3379 = vpop.permute.xlu0 %3378
        %v3380 = vlaneseq
        %v3381 = vshrl.u32 %v3380, 7
        %v3382 = vsub.s32 4, %v3381
        %v3383 = vrot.slane %v2777, %v3382
        %3385 = vbcast.lane.b32.xlu0 %v3383, 256
        %v3386 = vpop.permute.xlu0 %3385
        %s3388 = sor.u32 256, 8
        %3389 = vbcast.lane.b32.xlu0 %v3383, %s3388
        %v3390 = vpop.permute.xlu0 %3389
        %v3391 = vlaneseq
        %v3392 = vshrl.u32 %v3391, 7
        %v3393 = vsub.s32 5, %v3392
        %v3394 = vrot.slane %v2777, %v3393
        %3396 = vbcast.lane.b32.xlu0 %v3394, 256
        %v3397 = vpop.permute.xlu0 %3396
        %s3399 = sor.u32 256, 8
        %3400 = vbcast.lane.b32.xlu0 %v3394, %s3399
        %v3401 = vpop.permute.xlu0 %3400
        %v3402 = vlaneseq
        %v3403 = vshrl.u32 %v3402, 7
        %v3404 = vsub.s32 6, %v3403
        %v3405 = vrot.slane %v2777, %v3404
        %3407 = vbcast.lane.b32.xlu0 %v3405, 256
        %v3408 = vpop.permute.xlu0 %3407
        %s3410 = sor.u32 256, 8
        %3411 = vbcast.lane.b32.xlu0 %v3405, %s3410
        %v3412 = vpop.permute.xlu0 %3411
        %v3413 = vlaneseq
        %v3414 = vshrl.u32 %v3413, 7
        %v3415 = vsub.s32 7, %v3414
        %v3416 = vrot.slane %v2777, %v3415
        %3418 = vbcast.lane.b32.xlu0 %v3416, 256
        %v3419 = vpop.permute.xlu0 %3418
        %s3421 = sor.u32 256, 8
        %3422 = vbcast.lane.b32.xlu0 %v3416, %s3421
        %v3423 = vpop.permute.xlu0 %3422
        %v3424 = vld [vmem:[#allocation4] sm:$0xff]
        %v3425 = vld [vmem:[#allocation4 + $0x8] sm:$0xff]
        %v3426 = vld [vmem:[#allocation4 + $0x10] sm:$0xff]
        %v3427 = vld [vmem:[#allocation4 + $0x18] sm:$0xff]
        %v3428 = vld [vmem:[#allocation4 + $0x20] sm:$0xff]
        %v3429 = vld [vmem:[#allocation4 + $0x28] sm:$0xff]
        %v3430 = vld [vmem:[#allocation4 + $0x30] sm:$0xff]
        %v3431 = vld [vmem:[#allocation4 + $0x38] sm:$0xff]
        %v3432 = vld [vmem:[#allocation4 + $0x40] sm:$0xff]
        %v3433 = vld [vmem:[#allocation4 + $0x48] sm:$0xff]
        %v3434 = vld [vmem:[#allocation4 + $0x50] sm:$0xff]
        %v3435 = vld [vmem:[#allocation4 + $0x58] sm:$0xff]
        %v3436 = vld [vmem:[#allocation4 + $0x60] sm:$0xff]
        %v3437 = vld [vmem:[#allocation4 + $0x68] sm:$0xff]
        %v3438 = vld [vmem:[#allocation4 + $0x70] sm:$0xff]
        %v3439 = vld [vmem:[#allocation4 + $0x78] sm:$0xff]
        %v3440 = vmul.f32 %v3342, %v3424
        %v3441 = vmul.f32 %v3346, %v3425
        %v3442 = vmul.f32 %v3353, %v3426
        %v3443 = vmul.f32 %v3357, %v3427
        %v3444 = vmul.f32 %v3364, %v3428
        %v3445 = vmul.f32 %v3368, %v3429
        %v3446 = vmul.f32 %v3375, %v3430
        %v3447 = vmul.f32 %v3379, %v3431
        %v3448 = vmul.f32 %v3386, %v3432
        %v3449 = vmul.f32 %v3390, %v3433
        %v3450 = vmul.f32 %v3397, %v3434
        %v3451 = vmul.f32 %v3401, %v3435
        %v3452 = vmul.f32 %v3408, %v3436
        %v3453 = vmul.f32 %v3412, %v3437
        %v3454 = vmul.f32 %v3419, %v3438
        %v3455 = vmul.f32 %v3423, %v3439
        %v3456 = vsel %vm1297, %v3440, 0.0
        %v3457 = vsel %vm1297, %v3441, 0.0
        %v3458 = vadd.f32 %v3456, %v3457
        %v3459 = vrot.slane %v3458, 4
        %v3460 = vadd.f32 %v3458, %v3459
        %v3461 = vrot.slane %v3460, 2
        %v3462 = vadd.f32 %v3460, %v3461
        %v3463 = vrot.slane %v3462, 1
        %v3464 = vadd.f32 %v3462, %v3463
        %v3465 = vsel %vm1297, %v3442, 0.0
        %v3466 = vsel %vm1297, %v3443, 0.0
        %v3467 = vadd.f32 %v3465, %v3466
        %v3468 = vrot.slane %v3467, 4
        %v3469 = vadd.f32 %v3467, %v3468
        %v3470 = vrot.slane %v3469, 2
        %v3471 = vadd.f32 %v3469, %v3470
        %v3472 = vrot.slane %v3471, 1
        %v3473 = vadd.f32 %v3471, %v3472
        %v3474 = vsel %vm1297, %v3444, 0.0
        %v3475 = vsel %vm1297, %v3445, 0.0
        %v3476 = vadd.f32 %v3474, %v3475
        %v3477 = vrot.slane %v3476, 4
        %v3478 = vadd.f32 %v3476, %v3477
        %v3479 = vrot.slane %v3478, 2
        %v3480 = vadd.f32 %v3478, %v3479
        %v3481 = vrot.slane %v3480, 1
        %v3482 = vadd.f32 %v3480, %v3481
        %v3483 = vsel %vm1297, %v3446, 0.0
        %v3484 = vsel %vm1297, %v3447, 0.0
        %v3485 = vadd.f32 %v3483, %v3484
        %v3486 = vrot.slane %v3485, 4
        %v3487 = vadd.f32 %v3485, %v3486
        %v3488 = vrot.slane %v3487, 2
        %v3489 = vadd.f32 %v3487, %v3488
        %v3490 = vrot.slane %v3489, 1
        %v3491 = vadd.f32 %v3489, %v3490
        %v3492 = vsel %vm1297, %v3448, 0.0
        %v3493 = vsel %vm1297, %v3449, 0.0
        %v3494 = vadd.f32 %v3492, %v3493
        %v3495 = vrot.slane %v3494, 4
        %v3496 = vadd.f32 %v3494, %v3495
        %v3497 = vrot.slane %v3496, 2
        %v3498 = vadd.f32 %v3496, %v3497
        %v3499 = vrot.slane %v3498, 1
        %v3500 = vadd.f32 %v3498, %v3499
        %v3501 = vsel %vm1297, %v3450, 0.0
        %v3502 = vsel %vm1297, %v3451, 0.0
        %v3503 = vadd.f32 %v3501, %v3502
        %v3504 = vrot.slane %v3503, 4
        %v3505 = vadd.f32 %v3503, %v3504
        %v3506 = vrot.slane %v3505, 2
        %v3507 = vadd.f32 %v3505, %v3506
        %v3508 = vrot.slane %v3507, 1
        %v3509 = vadd.f32 %v3507, %v3508
        %v3510 = vsel %vm1297, %v3452, 0.0
        %v3511 = vsel %vm1297, %v3453, 0.0
        %v3512 = vadd.f32 %v3510, %v3511
        %v3513 = vrot.slane %v3512, 4
        %v3514 = vadd.f32 %v3512, %v3513
        %v3515 = vrot.slane %v3514, 2
        %v3516 = vadd.f32 %v3514, %v3515
        %v3517 = vrot.slane %v3516, 1
        %v3518 = vadd.f32 %v3516, %v3517
        %v3519 = vsel %vm1297, %v3454, 0.0
        %v3520 = vsel %vm1297, %v3455, 0.0
        %v3521 = vadd.f32 %v3519, %v3520
        %v3522 = vrot.slane %v3521, 4
        %v3523 = vadd.f32 %v3521, %v3522
        %v3524 = vrot.slane %v3523, 2
        %v3525 = vadd.f32 %v3523, %v3524
        %v3526 = vrot.slane %v3525, 1
        %v3527 = vadd.f32 %v3525, %v3526
        %s3528 = scalar_lea.vmem %s14, 1
        %v3529 = vld [vmem:[%s3528] sm:$0x1]
        %v3531 = vlaneseq
        %v3532 = vshrl.u32 %v3531, 7
        %v3533 = vsub.s32 0, %v3532
        %v3534 = vrot.slane %v3529, %v3533
        %v3536 = vmul.f32 %v2618, %v3534
        %v3538 = vrot.slane %v3536, 1
        %v3539 = vrot.slane %v3536, 2
        %v3540 = vrot.slane %v3536, 3
        %v3541 = vrot.slane %v3536, 4
        %v3542 = vrot.slane %v3536, 5
        %v3543 = vrot.slane %v3536, 6
        %v3544 = vrot.slane %v3536, 7
        %v3553 = vadd.f32 %v3464, %v3536
        %v3554 = vadd.f32 %v3473, %v3538
        %v3555 = vadd.f32 %v3482, %v3539
        %v3556 = vadd.f32 %v3491, %v3540
        %v3557 = vadd.f32 %v3500, %v3541
        %v3558 = vadd.f32 %v3509, %v3542
        %v3559 = vadd.f32 %v3518, %v3543
        %v3560 = vadd.f32 %v3527, %v3544
        %v3561 = vxor.u32 %v2569, 2147483648
        %v3562 = vmul.f32 %v3561, 1.442695
        %v3563 = vpow.pop %v3562
        %v3564 = vadd.f32 %v3563, 1.0
        %v3565 = vrcp.pop %v3564
        %v3566 = vmul.f32 1.0, %v3565
        %v3567 = vmul.f32 %v2569, %v3566
        %v3569 = vrot.slane %v3567, 1
        %v3570 = vrot.slane %v3567, 2
        %v3571 = vrot.slane %v3567, 3
        %v3572 = vrot.slane %v3567, 4
        %v3573 = vrot.slane %v3567, 5
        %v3574 = vrot.slane %v3567, 6
        %v3575 = vrot.slane %v3567, 7
        %v3584 = vmul.f32 %v3553, %v3567
        %v3585 = vmul.f32 %v3554, %v3569
        %v3586 = vmul.f32 %v3555, %v3570
        %v3587 = vmul.f32 %v3556, %v3571
        %v3588 = vmul.f32 %v3557, %v3572
        %v3589 = vmul.f32 %v3558, %v3573
        %v3590 = vmul.f32 %v3559, %v3574
        %v3591 = vmul.f32 %v3560, %v3575
        %s3592 = scalar_lea.vmem %s15, 64
        %v3593 = vld [vmem:[%s3592] sm:$0xff]
        %v3594 = vld [vmem:[%s3592 + $0x8] sm:$0xff]
        %v3595 = vld [vmem:[%s3592 + $0x10] sm:$0xff]
        %v3596 = vld [vmem:[%s3592 + $0x18] sm:$0xff]
        %v3597 = vld [vmem:[%s3592 + $0x20] sm:$0xff]
        %v3598 = vld [vmem:[%s3592 + $0x28] sm:$0xff]
        %v3599 = vld [vmem:[%s3592 + $0x30] sm:$0xff]
        %v3600 = vld [vmem:[%s3592 + $0x38] sm:$0xff]
        %v3609 = vrot.slane %v3585, 7
        %v3610 = vsel %vm2295, %v3609, %v3584
        %v3611 = vrot.slane %v3586, 6
        %v3612 = vsel %vm2298, %v3611, %v3610
        %v3613 = vrot.slane %v3587, 5
        %v3614 = vsel %vm2301, %v3613, %v3612
        %v3615 = vrot.slane %v3588, 4
        %v3616 = vsel %vm2304, %v3615, %v3614
        %v3617 = vrot.slane %v3589, 3
        %v3618 = vsel %vm2307, %v3617, %v3616
        %v3619 = vrot.slane %v3590, 2
        %v3620 = vsel %vm2310, %v3619, %v3618
        %v3621 = vrot.slane %v3591, 1
        %v3622 = vsel %vm2313, %v3621, %v3620
        %v3623 = vsel %vm1297, %v3622, 0
        %3625 = vmatprep.subr.mxu0 0.0
        %3626 = vmatpush1.msra.mxu0 %v3593
        %3627 = vmatprep.subr.mxu0 0.0
        %3628 = vmatpush1.msra.mxu0 %v3594
        %3629 = vmatprep.subr.mxu0 0.0
        %3630 = vmatpush1.msra.mxu0 %v3595
        %3631 = vmatprep.subr.mxu0 0.0
        %3632 = vmatpush1.msra.mxu0 %v3596
        %3633 = vmatprep.subr.mxu0 0.0
        %3634 = vmatpush1.msra.mxu0 %v3597
        %3635 = vmatprep.subr.mxu0 0.0
        %3636 = vmatpush1.msra.mxu0 %v3598
        %3637 = vmatprep.subr.mxu0 0.0
        %3638 = vmatpush1.msra.mxu0 %v3599
        %3639 = vmatprep.subr.mxu0 0.0
        %3640 = vmatpush1.msra.mxu0 %v3600
        %3641 = vmatprep.subr.mxu0 0.0
        %3642 = vmatpush1.msra.mxu0 0.0
        %3643 = vmatprep.subr.mxu0 0.0
        %3644 = vmatpush1.msra.mxu0 0.0
        %3645 = vmatprep.subr.mxu0 0.0
        %3646 = vmatpush1.msra.mxu0 0.0
        %3647 = vmatprep.subr.mxu0 0.0
        %3648 = vmatpush1.msra.mxu0 0.0
        %3649 = vmatprep.subr.mxu0 0.0
        %3650 = vmatpush1.msra.mxu0 0.0
        %3651 = vmatprep.subr.mxu0 0.0
        %3652 = vmatpush1.msra.mxu0 0.0
        %3653 = vmatprep.subr.mxu0 0.0
        %3654 = vmatpush1.msra.mxu0 0.0
        %3655 = vmatprep.subr.mxu0 0.0
        %3656 = vmatpush1.msra.mxu0 0.0
        %3657 = vmatprep.subr.mxu0 0.0
        %3658 = vmatpush1.msra.mxu0 0.0
        %3659 = vmatprep.subr.mxu0 0.0
        %3660 = vmatpush1.msra.mxu0 0.0
        %3661 = vmatprep.subr.mxu0 0.0
        %3662 = vmatpush1.msra.mxu0 0.0
        %3663 = vmatprep.subr.mxu0 0.0
        %3664 = vmatpush1.msra.mxu0 0.0
        %3665 = vmatprep.subr.mxu0 0.0
        %3666 = vmatpush1.msra.mxu0 0.0
        %3667 = vmatprep.subr.mxu0 0.0
        %3668 = vmatpush1.msra.mxu0 0.0
        %3669 = vmatprep.subr.mxu0 0.0
        %3670 = vmatpush1.msra.mxu0 0.0
        %3671 = vmatprep.subr.mxu0 0.0
        %3672 = vmatpush1.msra.mxu0 0.0
        %3673 = vmatprep.subr.mxu0 0.0
        %3674 = vmatpush1.msra.mxu0 0.0
        %3675 = vmatprep.subr.mxu0 0.0
        %3676 = vmatpush1.msra.mxu0 0.0
        %3677 = vmatprep.subr.mxu0 0.0
        %3678 = vmatpush1.msra.mxu0 0.0
        %3679 = vmatprep.subr.mxu0 0.0
        %3680 = vmatpush1.msra.mxu0 0.0
        %3681 = vmatprep.subr.mxu0 0.0
        %3682 = vmatpush1.msra.mxu0 0.0
        %3683 = vmatprep.subr.mxu0 0.0
        %3684 = vmatpush1.msra.mxu0 0.0
        %3685 = vmatprep.subr.mxu0 0.0
        %3686 = vmatpush1.msra.mxu0 0.0
        %3687 = vmatprep.subr.mxu0 0.0
        %3688 = vmatpush1.msra.mxu0 0.0
        %3689 = vmatprep.mubr.f32.mxu0 0.0
        %3690 = vmatmul.mubr.f32.gmra.mrb[0].mxu0 %v3623
        %v3691 = vpop.f32.mrb[0].mxu0
        %v3692 = vadd.f32 0.0, %v3691
        %v3693 = vpop.f32.mrb[0].mxu0
        %3694 = vdwg.mxu0
        %v3695 = vadd.f32 %v2387, %v3692
        %v3696 = vld [vmem:[%s16] sm:$0x1]
        %v3697 = vld [vmem:[%s17] sm:$0x1]
        %vm3698 = vcmask 261127
        %v3699 = vsel %vm3698, %v3695, 0.0
        %3700 = vadd.xlane.f32.xlu0 %v3699
        %v3701 = vpop.xlane.xlu0 %3700
        %v3702 = vmul.f32 %v3701, %v1059
        %v3703 = vsub.f32 %v3695, %v3702
        %v3704 = vmul.f32 %v3703, %v3703
        %v3705 = vsel %vm3698, %v3704, 0.0
        %3706 = vadd.xlane.f32.xlu0 %v3705
        %v3707 = vpop.xlane.xlu0 %3706
        %v3708 = vmul.f32 %v3707, %v1059
        %v3709 = vadd.f32 %v3708, 1e-05
        %v3710 = vrsqrt.pop %v3709
        %v3711 = vmul.f32 %v3703, %v3710
        %v3713 = vlaneseq
        %v3714 = vshrl.u32 %v3713, 7
        %v3715 = vsub.s32 0, %v3714
        %v3716 = vrot.slane %v3696, %v3715
        %v3718 = vmul.f32 %v3711, %v3716
        %v3720 = vlaneseq
        %v3721 = vshrl.u32 %v3720, 7
        %v3722 = vsub.s32 0, %v3721
        %v3723 = vrot.slane %v3697, %v3722
        %v3725 = vadd.f32 %v3718, %v3723
        %v3726 = vld [vmem:[%s18] sm:$0xff]
        %v3727 = vld [vmem:[%s18 + $0x8] sm:$0xff]
        %v3728 = vld [vmem:[%s18 + $0x10] sm:$0xff]
        %v3729 = vld [vmem:[%s18 + $0x18] sm:$0xff]
        %v3730 = vld [vmem:[%s19] sm:$0x1]
        %v3732 = vrot.slane %v3725, 7
        %v3733 = vsel %vm1055, %v3732, 0
        %3735 = vmatprep.subr.mxu0 0.0
        %3736 = vmatpush1.msra.mxu0 %v3726
        %3737 = vmatprep.subr.mxu0 0.0
        %3738 = vmatpush1.msra.mxu0 %v3727
        %3739 = vmatprep.subr.mxu0 0.0
        %3740 = vmatpush1.msra.mxu0 %v3728
        %3741 = vmatprep.subr.mxu0 0.0
        %3742 = vmatpush1.msra.mxu0 %v3729
        %3743 = vmatprep.subr.mxu0 0.0
        %3744 = vmatpush1.msra.mxu0 0.0
        %3745 = vmatprep.subr.mxu0 0.0
        %3746 = vmatpush1.msra.mxu0 0.0
        %3747 = vmatprep.subr.mxu0 0.0
        %3748 = vmatpush1.msra.mxu0 0.0
        %3749 = vmatprep.subr.mxu0 0.0
        %3750 = vmatpush1.msra.mxu0 0.0
        %3751 = vmatprep.subr.mxu0 0.0
        %3752 = vmatpush1.msra.mxu0 0.0
        %3753 = vmatprep.subr.mxu0 0.0
        %3754 = vmatpush1.msra.mxu0 0.0
        %3755 = vmatprep.subr.mxu0 0.0
        %3756 = vmatpush1.msra.mxu0 0.0
        %3757 = vmatprep.subr.mxu0 0.0
        %3758 = vmatpush1.msra.mxu0 0.0
        %3759 = vmatprep.subr.mxu0 0.0
        %3760 = vmatpush1.msra.mxu0 0.0
        %3761 = vmatprep.subr.mxu0 0.0
        %3762 = vmatpush1.msra.mxu0 0.0
        %3763 = vmatprep.subr.mxu0 0.0
        %3764 = vmatpush1.msra.mxu0 0.0
        %3765 = vmatprep.subr.mxu0 0.0
        %3766 = vmatpush1.msra.mxu0 0.0
        %3767 = vmatprep.subr.mxu0 0.0
        %3768 = vmatpush1.msra.mxu0 0.0
        %3769 = vmatprep.subr.mxu0 0.0
        %3770 = vmatpush1.msra.mxu0 0.0
        %3771 = vmatprep.subr.mxu0 0.0
        %3772 = vmatpush1.msra.mxu0 0.0
        %3773 = vmatprep.subr.mxu0 0.0
        %3774 = vmatpush1.msra.mxu0 0.0
        %3775 = vmatprep.subr.mxu0 0.0
        %3776 = vmatpush1.msra.mxu0 0.0
        %3777 = vmatprep.subr.mxu0 0.0
        %3778 = vmatpush1.msra.mxu0 0.0
        %3779 = vmatprep.subr.mxu0 0.0
        %3780 = vmatpush1.msra.mxu0 0.0
        %3781 = vmatprep.subr.mxu0 0.0
        %3782 = vmatpush1.msra.mxu0 0.0
        %3783 = vmatprep.subr.mxu0 0.0
        %3784 = vmatpush1.msra.mxu0 0.0
        %3785 = vmatprep.subr.mxu0 0.0
        %3786 = vmatpush1.msra.mxu0 0.0
        %3787 = vmatprep.subr.mxu0 0.0
        %3788 = vmatpush1.msra.mxu0 0.0
        %3789 = vmatprep.subr.mxu0 0.0
        %3790 = vmatpush1.msra.mxu0 0.0
        %3791 = vmatprep.subr.mxu0 0.0
        %3792 = vmatpush1.msra.mxu0 0.0
        %3793 = vmatprep.subr.mxu0 0.0
        %3794 = vmatpush1.msra.mxu0 0.0
        %3795 = vmatprep.subr.mxu0 0.0
        %3796 = vmatpush1.msra.mxu0 0.0
        %3797 = vmatprep.subr.mxu0 0.0
        %3798 = vmatpush1.msra.mxu0 0.0
        %3799 = vmatprep.mubr.f32.mxu0 0.0
        %3800 = vmatmul.mubr.f32.gmra.mrb[0].mxu0 %v3733
        %v3801 = vpop.f32.mrb[0].mxu0
        %v3802 = vadd.f32 %v3730, %v3801
        %v3803 = vpop.f32.mrb[0].mxu0
        %3804 = vdwg.mxu0
        %vm3805 = vcmask 8192
        %3806 = vst.msk [vmem:[%s621] sm:$0x1] %vm3805, %v3802
        %s3807 = sand.u32 %s467, 1
        %s3808 = scalar_lea.sflag [#allocation6], %s3807
        %s3809 = sand.u32 %s467, 1
        %s3810 = scalar_lea.vmem [#allocation5], %s3809
        // Predicated region
        $region101: #{vision_mamba3d_forward.1} parent=99 // pred_check
          %p3811 = pneg %p477
        $region102: #{vision_mamba3d_forward.1} parent=99 // pred_check_branch
          %3813 = sbr.rel (%p3811) target = $region104
        $region103: #{vision_mamba3d_forward.1} parent=99 // pred_region
          %s3815 = ssub.s32 16, 16
          %3816 = vsyncadd %s3808, %s3815
          %s3817 = smul.addr %s34, 16
          %s3818 = scalar_lea.hbm %s20, %s3817
          %s3820 = sshll.u32 %s3810, 4
          %s3821 = int_to_ptr.vmem [resolvable:$true] %s3820
          %3823 = dma.vmem_to_hbm [thread:$0]  %s3821, 16, %s3818, %s3808
        $region104: #{vision_mamba3d_forward.1} parent=99 // pred_fallthru
          _
      $region100: #{vision_mamba3d_forward.1} parent=5 // pred_fallthru
        _
      %p3824 = scmp.le.s32.totalorder 2, %s29
      // Predicated region
      $region105: #{vision_mamba3d_forward.1} parent=5 // pred_check
        %p3825 = pneg %p3824
      $region106: #{vision_mamba3d_forward.1} parent=5 // pred_check_branch
        %3827 = sbr.rel (%p3825) target = $region108
      $region107: #{vision_mamba3d_forward.1} parent=5 // pred_region
        %s3828 = ssub.s32 %s29, 2
        // Predicated region
        $region109: #{vision_mamba3d_forward.1} parent=107 // pred_check
          %p3829 = pneg %p483
        $region110: #{vision_mamba3d_forward.1} parent=107 // pred_check_branch
          %3831 = sbr.rel (%p3829) target = $region112
        $region111: #{vision_mamba3d_forward.1} parent=107 // pred_region
          %s3832 = sand.u32 %s468, 1
          %s3833 = scalar_lea.sflag [#allocation6], %s3832
          %s3834 = sand.u32 %s468, 1
          %s3835 = scalar_lea.vmem [#allocation5], %s3834
          %3836 = dma.done %s3833, 16
        $region112: #{vision_mamba3d_forward.1} parent=107 // pred_fallthru
          _
      $region108: #{vision_mamba3d_forward.1} parent=5 // pred_fallthru
        _
    $region6: #{vision_mamba3d_forward.1} parent=1 // loop_footer
      %s33 = sadd.s32 1, %s29
    $region7: #{vision_mamba3d_forward.1} parent=1 // loop_footer_branch
      %28 = sbr.rel target = $region3
    $region8: #{vision_mamba3d_forward.1} parent=1 // loop_exit
      _
    %3837 = vsyncpa [#allocation6], 1
    %s3838 = scalar_lea.sflag [#allocation6], 1
    %3839 = vsyncpa %s3838, 1

</llo_original>
